<compile_context>
chip_gen: v6e
topology: v6e:2x2x1
jax: 0.10.0
libtpu: 0.0.40
codegen_flags: <defaults>
</compile_context>

<pallas_src>
import functools

import jax
import jax.numpy as jnp
from jax import lax
from jax.experimental import pallas as pl
from jax.experimental.pallas import tpu as pltpu


def _silu(v):
    return v * jax.nn.sigmoid(v)


def _dw_conv5x5_flat(v, wt, h_of, w_of, H, W):
    """5x5 'same' (pad=2) depthwise conv on a lane-flattened (C, H*W) value.

    v    : (C, P) activations, channels on sublanes, flattened H*W on lanes.
    wt   : (C, 25) per-channel taps, tap index t = (di+2)*5 + (dj+2).
    h_of : (1, P) int32 lane -> h coordinate; w_of: (1, P) lane -> w coordinate.

    Each spatial tap is a lane roll by di*W + dj plus an edge mask (this IS the
    zero padding).  Liveness is bounded to {v, acc, one rolled copy}.
    """
    P = v.shape[-1]
    acc = jnp.zeros_like(v)
    for dj in range(-2, 3):
        w_ok = (w_of + dj >= 0) & (w_of + dj < W)
        for di in range(-2, 3):
            t = (di + 2) * 5 + (dj + 2)
            off = di * W + dj
            if off == 0:
                acc = acc + v * wt[:, t:t + 1]
            else:
                ok = w_ok & (h_of + di >= 0) & (h_of + di < H)
                rolled = pltpu.roll(v, shift=(-off) % P, axis=1)
                acc = acc + jnp.where(ok, rolled, 0.0) * wt[:, t:t + 1]
    return acc


def _ghost_bottleneck_kernel(x_ref, coord_ref, p1_ref, p2_ref, out_ref, *, W):
    C1, P = x_ref.shape[1], x_ref.shape[2]
    H = P // W
    c_g1 = p1_ref.shape[0]          # widened GhostConv #1 width (= 2 * ch1)
    ch1 = c_g1 // 2

    x = x_ref[0].astype(jnp.float32)                     # (C1, P), lane-dense

    h_of = coord_ref[0:1, :]                             # (1, P) int32
    w_of = coord_ref[1:2, :]                             # (1, P) int32

    # ---------------- GhostConv #1 : [primary | silu(dw5(primary))] ----------
    w1 = p1_ref[:, 0:C1]                                 # (c_g1, C1)  [w; w]
    b1 = p1_ref[:, C1:C1 + 1]                            # (c_g1, 1)   2-D bias
    bd1 = p1_ref[:, C1 + 1:C1 + 2]                       # (c_g1, 1)
    wd1 = p1_ref[:, C1 + 2:C1 + 27]                      # (c_g1, 25)  [delta; dw]

    u = _silu(jnp.dot(w1, x, preferred_element_type=jnp.float32) + b1)
    z = _dw_conv5x5_flat(u, wd1, h_of, w_of, H, W) + bd1
    row = lax.broadcasted_iota(jnp.int32, (c_g1, 1), 0)
    y1 = jnp.where(row >= ch1, _silu(z), z)              # SiLU only on ghost half

    # ---------------- GhostConv #2 (act=False) --------------------------------
    w2 = p2_ref[:, 0:c_g1]                               # (C2, c_g1)  [w; w]
    b2 = p2_ref[:, c_g1:c_g1 + 1]                        # (C2, 1)
    bd2 = p2_ref[:, c_g1 + 1:c_g1 + 2]                   # (C2, 1)
    wd2 = p2_ref[:, c_g1 + 2:c_g1 + 27]                  # (C2, 25)

    g2 = jnp.dot(w2, y1, preferred_element_type=jnp.float32) + b2
    conv = _dw_conv5x5_flat(g2, wd2, h_of, w_of, H, W) + bd2

    # Residual (Identity shortcut); single lane-dense full-block store.
    out_ref[0] = (conv + x).astype(out_ref.dtype)


def ghost_bottleneck_pallas(x_nchw, params):
    N, C1, H, W = x_nchw.shape
    P = H * W
    f32 = jnp.float32

    w1, b1 = params["w1"].astype(f32), params["b1"].astype(f32)      # (ch1, C1), (ch1,)
    wd1, bd1 = params["wd1"].astype(f32), params["bd1"].astype(f32)  # (ch1, 5, 5)
    w2, b2 = params["w2"].astype(f32), params["b2"].astype(f32)      # (c_, 2*ch1)
    wd2, bd2 = params["wd2"].astype(f32), params["bd2"].astype(f32)  # (c_, 5, 5)

    ch1 = w1.shape[0]
    c_half = w2.shape[0]
    c_g1 = 2 * ch1
    C2 = 2 * c_half
    assert C1 == C2, "GhostBottleneck(s=1) residual requires c1 == c2"

    # --- host-side ghost widening + per-stage parameter packing --------------
    # Duplicate 1x1 output rows ([w; w]) and splice an identity (delta) 5x5
    # kernel in front of the depthwise weights: the primary half passes
    # through, the ghost half becomes the 5x5 conv -> GhostConv concat with no
    # in-kernel channel concat/slice.  Pack 1x1 weight, both biases and the 25
    # flattened taps into one buffer per GhostConv (fewer tiny DMAs).
    delta = jnp.zeros((5, 5), f32).at[2, 2].set(1.0)

    def pack(w, b, wd, bd, ch):
        ww = jnp.concatenate([w, w], axis=0)                          # (2ch, Cin)
        bw = jnp.concatenate([b, b], axis=0)[:, None]                 # (2ch, 1)
        wdw = jnp.concatenate(
            [jnp.broadcast_to(delta, (ch, 5, 5)), wd], axis=0)        # (2ch, 5, 5)
        bdw = jnp.concatenate([jnp.zeros((ch,), f32), bd], axis=0)[:, None]
        return jnp.concatenate([ww, bw, bdw, wdw.reshape(2 * ch, 25)], axis=1)

    p1 = pack(w1, b1, wd1, bd1, ch1)       # (c_g1, C1 + 27)
    p2 = pack(w2, b2, wd2, bd2, c_half)    # (C2,  c_g1 + 27)

    # Lane -> (h, w) coordinate table for the depthwise edge masks.
    hw = jnp.arange(P, dtype=jnp.int32)
    coords = jnp.stack([hw // W, hw % W], axis=0)                     # (2, P)

    # Pure reshape (no transpose): channels -> sublanes, H*W -> lanes.
    x_p = x_nchw.reshape(N, C1, P).astype(f32)

    out = pl.pallas_call(
        functools.partial(_ghost_bottleneck_kernel, W=W),
        out_shape=jax.ShapeDtypeStruct((N, C2, P), f32),
        grid_spec=pltpu.PrefetchScalarGridSpec(
            num_scalar_prefetch=0,
            grid=(N,),
            in_specs=[
                pl.BlockSpec((1, C1, P), lambda n: (n, 0, 0)),
                pl.BlockSpec((2, P), lambda n: (0, 0)),
                pl.BlockSpec((c_g1, C1 + 27), lambda n: (0, 0)),
                pl.BlockSpec((C2, c_g1 + 27), lambda n: (0, 0)),
            ],
            out_specs=pl.BlockSpec((1, C2, P), lambda n: (n, 0, 0)),
        ),
        compiler_params=pltpu.CompilerParams(
            dimension_semantics=("parallel",),        # shard batch over TCs (v7x)
            vmem_limit_bytes=32 * 1024 * 1024,        # explicit budget (v5e default 16 MiB)
        ),
    )(x_p, coords, p1, p2)
    return out.reshape(N, C2, H, W)


# --------------------------- parameter construction ---------------------------
def _fold_bn(w, gamma, beta, mean, var, eps=1e-5):
    """Fold eval-mode BatchNorm2d into a bias-free conv. w: (Cout, Cin, KH, KW)."""
    scale = gamma / jnp.sqrt(var + eps)
    return w * scale[:, None, None, None], beta - mean * scale


def make_params(key, c1, c2, dtype=jnp.float32):
    assert c1 == c2, "GhostBottleneck(s=1) residual requires c1 == c2"
    c_half = c2 // 2
    ch1 = c_half // 2
    keys = jax.random.split(key, 8)

    def bn(kk, c):
        g = jax.random.uniform(kk[0], (c,), minval=0.5, maxval=1.5)
        b = jax.random.normal(kk[1], (c,)) * 0.1
        m = jax.random.normal(kk[2], (c,)) * 0.1
        v = jax.random.uniform(kk[3], (c,), minval=0.5, maxval=1.5)
        return g, b, m, v

    # GhostConv #1 cv1 : 1x1 conv, c1 -> ch1 (+BN+SiLU)
    w = jax.random.normal(keys[0], (ch1, c1, 1, 1)) * 0.2
    w_f, b1 = _fold_bn(w, *bn(jax.random.split(keys[1], 4), ch1))
    w1 = w_f[:, :, 0, 0]                                   # (ch1, c1)  (co, ci)

    # GhostConv #1 cv2 : 5x5 depthwise conv, ch1 -> ch1 (+BN+SiLU)
    w = jax.random.normal(keys[2], (ch1, 1, 5, 5)) * 0.1
    w_f, bd1 = _fold_bn(w, *bn(jax.random.split(keys[3], 4), ch1))
    wd1 = w_f[:, 0, :, :]                                  # (ch1, 5, 5)

    # GhostConv #2 cv1 : 1x1 conv, 2*ch1 -> c_half (+BN, no act)
    w = jax.random.normal(keys[4], (c_half, 2 * ch1, 1, 1)) * 0.2
    w_f, b2 = _fold_bn(w, *bn(jax.random.split(keys[5], 4), c_half))
    w2 = w_f[:, :, 0, 0]                                   # (c_half, 2*ch1)

    # GhostConv #2 cv2 : 5x5 depthwise conv, c_half -> c_half (+BN, no act)
    w = jax.random.normal(keys[6], (c_half, 1, 5, 5)) * 0.1
    w_f, bd2 = _fold_bn(w, *bn(jax.random.split(keys[7], 4), c_half))
    wd2 = w_f[:, 0, :, :]                                  # (c_half, 5, 5)

    p = dict(w1=w1, b1=b1, wd1=wd1, bd1=bd1, w2=w2, b2=b2, wd2=wd2, bd2=bd2)
    return {k: v.astype(dtype) for k, v in p.items()}


# ------------------------------- pure-JAX reference ---------------------------
def ghost_bottleneck_ref(x, p):
    """NCHW reference (BN already folded into weights/biases)."""
    def conv1x1(v, w, b):
        return jnp.einsum("nchw,dc->ndhw", v, w) + b[None, :, None, None]

    def dw5(v, w, b):
        out = lax.conv_general_dilated(
            v, w[:, None, :, :], (1, 1), [(2, 2), (2, 2)],
            dimension_numbers=("NCHW", "OIHW", "NCHW"),
            feature_group_count=v.shape[1])
        return out + b[None, :, None, None]

    g1a = _silu(conv1x1(x, p["w1"], p["b1"]))
    g1b = _silu(dw5(g1a, p["wd1"], p["bd1"]))
    y1 = jnp.concatenate([g1a, g1b], axis=1)
    g2a = conv1x1(y1, p["w2"], p["b2"])
    g2b = dw5(g2a, p["wd2"], p["bd2"])
    y2 = jnp.concatenate([g2a, g2b], axis=1)
    return y2 + x


if __name__ == "__main__":
    key = jax.random.PRNGKey(0)
    kx, kp = jax.random.split(key)

    # c1 == c2 == 16, k=3 (unused on s=1 path), s=1; H*W = 256 (lane-dense)
    N, C, H, W = 2, 16, 16, 16
    x = jax.random.normal(kx, (N, C, H, W), dtype=jnp.float32)   # NCHW like PyTorch
    params = make_params(kp, C, C)

    out = jax.block_until_ready(ghost_bottleneck_pallas(x, params))
    ref = jax.block_until_ready(ghost_bottleneck_ref(x, params))

    assert out.shape == (N, C, H, W), out.shape
    err = float(jnp.max(jnp.abs(out - ref)))
    assert jnp.allclose(out, ref, rtol=1e-4, atol=1e-4), f"max abs err = {err}"
    print("KERNEL_OK")
</pallas_src>

<mosaic_0001>
module attributes {stable_mosaic.version = 11 : i64} {
  func.func @_ghost_bottleneck_kernel(%arg0: i32, %arg1: memref<1x16x256xf32, #tpu.memory_space<vmem>>, %arg2: memref<2x256xi32, #tpu.memory_space<vmem>>, %arg3: memref<8x43xf32, #tpu.memory_space<vmem>>, %arg4: memref<16x35xf32, #tpu.memory_space<vmem>>, %arg5: memref<1x16x256xf32, #tpu.memory_space<vmem>>) attributes {dimension_semantics = [#tpu.dimension_semantics<parallel>], iteration_bounds = array<i64: 2>, scalar_prefetch = 0 : i64, scratch_operands = 0 : i64, tpu.core_type = #tpu.core_type<tc>, window_params = [{transform_indices = @transform_0, window_bounds = array<i64: 1, 16, 256>}, {pipeline_mode = #tpu.pipeline_mode<synchronous>, transform_indices = @transform_1, window_bounds = array<i64: 2, 256>}, {pipeline_mode = #tpu.pipeline_mode<synchronous>, transform_indices = @transform_2, window_bounds = array<i64: 8, 43>}, {pipeline_mode = #tpu.pipeline_mode<synchronous>, transform_indices = @transform_3, window_bounds = array<i64: 16, 35>}, {transform_indices = @transform_4, window_bounds = array<i64: 1, 16, 256>}]} {
    %c0 = arith.constant 0 : index
    %c0_0 = arith.constant 0 : index
    %c0_1 = arith.constant 0 : index
    %0 = vector.load %arg1[%c0, %c0_0, %c0_1] : memref<1x16x256xf32, #tpu.memory_space<vmem>>, vector<1x16x256xf32>
    %1 = vector.shape_cast %0 : vector<1x16x256xf32> to vector<16x256xf32>
    %c0_2 = arith.constant 0 : index
    %c0_3 = arith.constant 0 : index
    %2 = vector.load %arg2[%c0_2, %c0_3] : memref<2x256xi32, #tpu.memory_space<vmem>>, vector<1x256xi32>
    %c1 = arith.constant 1 : index
    %c0_4 = arith.constant 0 : index
    %3 = vector.load %arg2[%c1, %c0_4] : memref<2x256xi32, #tpu.memory_space<vmem>>, vector<1x256xi32>
    %c0_5 = arith.constant 0 : index
    %c0_6 = arith.constant 0 : index
    %4 = vector.load %arg3[%c0_5, %c0_6] : memref<8x43xf32, #tpu.memory_space<vmem>>, vector<8x16xf32>
    %c0_7 = arith.constant 0 : index
    %c16 = arith.constant 16 : index
    %5 = vector.load %arg3[%c0_7, %c16] : memref<8x43xf32, #tpu.memory_space<vmem>>, vector<8x1xf32>
    %c0_8 = arith.constant 0 : index
    %c17 = arith.constant 17 : index
    %6 = vector.load %arg3[%c0_8, %c17] : memref<8x43xf32, #tpu.memory_space<vmem>>, vector<8x1xf32>
    %c0_9 = arith.constant 0 : index
    %c18 = arith.constant 18 : index
    %7 = vector.load %arg3[%c0_9, %c18] : memref<8x43xf32, #tpu.memory_space<vmem>>, vector<8x25xf32>
    %cst = arith.constant dense<0.000000e+00> : vector<8x256xf32>
    %8 = tpu.matmul %4, %1, %cst {dimension_numbers = #tpu.dot_dimension_numbers<[1], [0], [0], [1], [0, 0, 1, 1], [], []>} : vector<8x16xf32>, vector<16x256xf32>, vector<8x256xf32> -> vector<8x256xf32>
    %9 = vector.broadcast %5 : vector<8x1xf32> to vector<8x256xf32>
    %10 = arith.addf %8, %9 : vector<8x256xf32>
    %11 = arith.negf %10 : vector<8x256xf32>
    %12 = math.exp %11 : vector<8x256xf32>
    %cst_10 = arith.constant 1.000000e+00 : f32
    %13 = vector.broadcast %cst_10 : f32 to vector<8x256xf32>
    %14 = arith.addf %13, %12 : vector<8x256xf32>
    %15 = arith.divf %13, %14 : vector<8x256xf32>
    %16 = arith.mulf %10, %15 : vector<8x256xf32>
    %cst_11 = arith.constant 0.000000e+00 : f32
    %17 = vector.broadcast %cst_11 : f32 to vector<8x256xf32>
    %c-2_i32 = arith.constant -2 : i32
    %18 = vector.broadcast %c-2_i32 : i32 to vector<1x256xi32>
    %19 = arith.addi %3, %18 : vector<1x256xi32>
    %c0_i32 = arith.constant 0 : i32
    %20 = vector.broadcast %c0_i32 : i32 to vector<1x256xi32>
    %21 = arith.cmpi sge, %19, %20 : vector<1x256xi32>
    %c-2_i32_12 = arith.constant -2 : i32
    %22 = vector.broadcast %c-2_i32_12 : i32 to vector<1x256xi32>
    %23 = arith.addi %3, %22 : vector<1x256xi32>
    %c16_i32 = arith.constant 16 : i32
    %24 = vector.broadcast %c16_i32 : i32 to vector<1x256xi32>
    %25 = arith.cmpi slt, %23, %24 : vector<1x256xi32>
    %26 = arith.andi %21, %25 : vector<1x256xi1>
    %c-2_i32_13 = arith.constant -2 : i32
    %27 = vector.broadcast %c-2_i32_13 : i32 to vector<1x256xi32>
    %28 = arith.addi %2, %27 : vector<1x256xi32>
    %c0_i32_14 = arith.constant 0 : i32
    %29 = vector.broadcast %c0_i32_14 : i32 to vector<1x256xi32>
    %30 = arith.cmpi sge, %28, %29 : vector<1x256xi32>
    %31 = arith.andi %26, %30 : vector<1x256xi1>
    %c-2_i32_15 = arith.constant -2 : i32
    %32 = vector.broadcast %c-2_i32_15 : i32 to vector<1x256xi32>
    %33 = arith.addi %2, %32 : vector<1x256xi32>
    %c16_i32_16 = arith.constant 16 : i32
    %34 = vector.broadcast %c16_i32_16 : i32 to vector<1x256xi32>
    %35 = arith.cmpi slt, %33, %34 : vector<1x256xi32>
    %36 = arith.andi %31, %35 : vector<1x256xi1>
    %c34_i32 = arith.constant 34 : i32
    %37 = tpu.dynamic_rotate %16 by %c34_i32 dim 1 : vector<8x256xf32>, i32 -> vector<8x256xf32>
    %cst_17 = arith.constant 0.000000e+00 : f32
    %38 = vector.shape_cast %36 : vector<1x256xi1> to vector<1x256xi1>
    %39 = vector.broadcast %38 : vector<1x256xi1> to vector<8x256xi1>
    %40 = vector.broadcast %cst_17 : f32 to vector<8x256xf32>
    %41 = arith.select %39, %37, %40 : vector<8x256xi1>, vector<8x256xf32>
    %42 = vector.extract_strided_slice %7 {offsets = [0, 0], sizes = [8, 1], strides = [1, 1]} : vector<8x25xf32> to vector<8x1xf32>
    %43 = vector.broadcast %42 : vector<8x1xf32> to vector<8x256xf32>
    %44 = arith.mulf %41, %43 : vector<8x256xf32>
    %45 = arith.addf %17, %44 : vector<8x256xf32>
    %c-1_i32 = arith.constant -1 : i32
    %46 = vector.broadcast %c-1_i32 : i32 to vector<1x256xi32>
    %47 = arith.addi %2, %46 : vector<1x256xi32>
    %c0_i32_18 = arith.constant 0 : i32
    %48 = vector.broadcast %c0_i32_18 : i32 to vector<1x256xi32>
    %49 = arith.cmpi sge, %47, %48 : vector<1x256xi32>
    %50 = arith.andi %26, %49 : vector<1x256xi1>
    %c-1_i32_19 = arith.constant -1 : i32
    %51 = vector.broadcast %c-1_i32_19 : i32 to vector<1x256xi32>
    %52 = arith.addi %2, %51 : vector<1x256xi32>
    %c16_i32_20 = arith.constant 16 : i32
    %53 = vector.broadcast %c16_i32_20 : i32 to vector<1x256xi32>
    %54 = arith.cmpi slt, %52, %53 : vector<1x256xi32>
    %55 = arith.andi %50, %54 : vector<1x256xi1>
    %c18_i32 = arith.constant 18 : i32
    %56 = tpu.dynamic_rotate %16 by %c18_i32 dim 1 : vector<8x256xf32>, i32 -> vector<8x256xf32>
    %cst_21 = arith.constant 0.000000e+00 : f32
    %57 = vector.shape_cast %55 : vector<1x256xi1> to vector<1x256xi1>
    %58 = vector.broadcast %57 : vector<1x256xi1> to vector<8x256xi1>
    %59 = vector.broadcast %cst_21 : f32 to vector<8x256xf32>
    %60 = arith.select %58, %56, %59 : vector<8x256xi1>, vector<8x256xf32>
    %61 = vector.extract_strided_slice %7 {offsets = [0, 5], sizes = [8, 1], strides = [1, 1]} : vector<8x25xf32> to vector<8x1xf32>
    %62 = vector.broadcast %61 : vector<8x1xf32> to vector<8x256xf32>
    %63 = arith.mulf %60, %62 : vector<8x256xf32>
    %64 = arith.addf %45, %63 : vector<8x256xf32>
    %c0_i32_22 = arith.constant 0 : i32
    %65 = vector.broadcast %c0_i32_22 : i32 to vector<1x256xi32>
    %66 = arith.addi %2, %65 : vector<1x256xi32>
    %c0_i32_23 = arith.constant 0 : i32
    %67 = vector.broadcast %c0_i32_23 : i32 to vector<1x256xi32>
    %68 = arith.cmpi sge, %66, %67 : vector<1x256xi32>
    %69 = arith.andi %26, %68 : vector<1x256xi1>
    %c0_i32_24 = arith.constant 0 : i32
    %70 = vector.broadcast %c0_i32_24 : i32 to vector<1x256xi32>
    %71 = arith.addi %2, %70 : vector<1x256xi32>
    %c16_i32_25 = arith.constant 16 : i32
    %72 = vector.broadcast %c16_i32_25 : i32 to vector<1x256xi32>
    %73 = arith.cmpi slt, %71, %72 : vector<1x256xi32>
    %74 = arith.andi %69, %73 : vector<1x256xi1>
    %c2_i32 = arith.constant 2 : i32
    %75 = tpu.dynamic_rotate %16 by %c2_i32 dim 1 : vector<8x256xf32>, i32 -> vector<8x256xf32>
    %cst_26 = arith.constant 0.000000e+00 : f32
    %76 = vector.shape_cast %74 : vector<1x256xi1> to vector<1x256xi1>
    %77 = vector.broadcast %76 : vector<1x256xi1> to vector<8x256xi1>
    %78 = vector.broadcast %cst_26 : f32 to vector<8x256xf32>
    %79 = arith.select %77, %75, %78 : vector<8x256xi1>, vector<8x256xf32>
    %80 = vector.extract_strided_slice %7 {offsets = [0, 10], sizes = [8, 1], strides = [1, 1]} : vector<8x25xf32> to vector<8x1xf32>
    %81 = vector.broadcast %80 : vector<8x1xf32> to vector<8x256xf32>
    %82 = arith.mulf %79, %81 : vector<8x256xf32>
    %83 = arith.addf %64, %82 : vector<8x256xf32>
    %c1_i32 = arith.constant 1 : i32
    %84 = vector.broadcast %c1_i32 : i32 to vector<1x256xi32>
    %85 = arith.addi %2, %84 : vector<1x256xi32>
    %c0_i32_27 = arith.constant 0 : i32
    %86 = vector.broadcast %c0_i32_27 : i32 to vector<1x256xi32>
    %87 = arith.cmpi sge, %85, %86 : vector<1x256xi32>
    %88 = arith.andi %26, %87 : vector<1x256xi1>
    %c1_i32_28 = arith.constant 1 : i32
    %89 = vector.broadcast %c1_i32_28 : i32 to vector<1x256xi32>
    %90 = arith.addi %2, %89 : vector<1x256xi32>
    %c16_i32_29 = arith.constant 16 : i32
    %91 = vector.broadcast %c16_i32_29 : i32 to vector<1x256xi32>
    %92 = arith.cmpi slt, %90, %91 : vector<1x256xi32>
    %93 = arith.andi %88, %92 : vector<1x256xi1>
    %c242_i32 = arith.constant 242 : i32
    %94 = tpu.dynamic_rotate %16 by %c242_i32 dim 1 : vector<8x256xf32>, i32 -> vector<8x256xf32>
    %cst_30 = arith.constant 0.000000e+00 : f32
    %95 = vector.shape_cast %93 : vector<1x256xi1> to vector<1x256xi1>
    %96 = vector.broadcast %95 : vector<1x256xi1> to vector<8x256xi1>
    %97 = vector.broadcast %cst_30 : f32 to vector<8x256xf32>
    %98 = arith.select %96, %94, %97 : vector<8x256xi1>, vector<8x256xf32>
    %99 = vector.extract_strided_slice %7 {offsets = [0, 15], sizes = [8, 1], strides = [1, 1]} : vector<8x25xf32> to vector<8x1xf32>
    %100 = vector.broadcast %99 : vector<8x1xf32> to vector<8x256xf32>
    %101 = arith.mulf %98, %100 : vector<8x256xf32>
    %102 = arith.addf %83, %101 : vector<8x256xf32>
    %c2_i32_31 = arith.constant 2 : i32
    %103 = vector.broadcast %c2_i32_31 : i32 to vector<1x256xi32>
    %104 = arith.addi %2, %103 : vector<1x256xi32>
    %c0_i32_32 = arith.constant 0 : i32
    %105 = vector.broadcast %c0_i32_32 : i32 to vector<1x256xi32>
    %106 = arith.cmpi sge, %104, %105 : vector<1x256xi32>
    %107 = arith.andi %26, %106 : vector<1x256xi1>
    %c2_i32_33 = arith.constant 2 : i32
    %108 = vector.broadcast %c2_i32_33 : i32 to vector<1x256xi32>
    %109 = arith.addi %2, %108 : vector<1x256xi32>
    %c16_i32_34 = arith.constant 16 : i32
    %110 = vector.broadcast %c16_i32_34 : i32 to vector<1x256xi32>
    %111 = arith.cmpi slt, %109, %110 : vector<1x256xi32>
    %112 = arith.andi %107, %111 : vector<1x256xi1>
    %c226_i32 = arith.constant 226 : i32
    %113 = tpu.dynamic_rotate %16 by %c226_i32 dim 1 : vector<8x256xf32>, i32 -> vector<8x256xf32>
    %cst_35 = arith.constant 0.000000e+00 : f32
    %114 = vector.shape_cast %112 : vector<1x256xi1> to vector<1x256xi1>
    %115 = vector.broadcast %114 : vector<1x256xi1> to vector<8x256xi1>
    %116 = vector.broadcast %cst_35 : f32 to vector<8x256xf32>
    %117 = arith.select %115, %113, %116 : vector<8x256xi1>, vector<8x256xf32>
    %118 = vector.extract_strided_slice %7 {offsets = [0, 20], sizes = [8, 1], strides = [1, 1]} : vector<8x25xf32> to vector<8x1xf32>
    %119 = vector.broadcast %118 : vector<8x1xf32> to vector<8x256xf32>
    %120 = arith.mulf %117, %119 : vector<8x256xf32>
    %121 = arith.addf %102, %120 : vector<8x256xf32>
    %c-1_i32_36 = arith.constant -1 : i32
    %122 = vector.broadcast %c-1_i32_36 : i32 to vector<1x256xi32>
    %123 = arith.addi %3, %122 : vector<1x256xi32>
    %c0_i32_37 = arith.constant 0 : i32
    %124 = vector.broadcast %c0_i32_37 : i32 to vector<1x256xi32>
    %125 = arith.cmpi sge, %123, %124 : vector<1x256xi32>
    %c-1_i32_38 = arith.constant -1 : i32
    %126 = vector.broadcast %c-1_i32_38 : i32 to vector<1x256xi32>
    %127 = arith.addi %3, %126 : vector<1x256xi32>
    %c16_i32_39 = arith.constant 16 : i32
    %128 = vector.broadcast %c16_i32_39 : i32 to vector<1x256xi32>
    %129 = arith.cmpi slt, %127, %128 : vector<1x256xi32>
    %130 = arith.andi %125, %129 : vector<1x256xi1>
    %c-2_i32_40 = arith.constant -2 : i32
    %131 = vector.broadcast %c-2_i32_40 : i32 to vector<1x256xi32>
    %132 = arith.addi %2, %131 : vector<1x256xi32>
    %c0_i32_41 = arith.constant 0 : i32
    %133 = vector.broadcast %c0_i32_41 : i32 to vector<1x256xi32>
    %134 = arith.cmpi sge, %132, %133 : vector<1x256xi32>
    %135 = arith.andi %130, %134 : vector<1x256xi1>
    %c-2_i32_42 = arith.constant -2 : i32
    %136 = vector.broadcast %c-2_i32_42 : i32 to vector<1x256xi32>
    %137 = arith.addi %2, %136 : vector<1x256xi32>
    %c16_i32_43 = arith.constant 16 : i32
    %138 = vector.broadcast %c16_i32_43 : i32 to vector<1x256xi32>
    %139 = arith.cmpi slt, %137, %138 : vector<1x256xi32>
    %140 = arith.andi %135, %139 : vector<1x256xi1>
    %c33_i32 = arith.constant 33 : i32
    %141 = tpu.dynamic_rotate %16 by %c33_i32 dim 1 : vector<8x256xf32>, i32 -> vector<8x256xf32>
    %cst_44 = arith.constant 0.000000e+00 : f32
    %142 = vector.shape_cast %140 : vector<1x256xi1> to vector<1x256xi1>
    %143 = vector.broadcast %142 : vector<1x256xi1> to vector<8x256xi1>
    %144 = vector.broadcast %cst_44 : f32 to vector<8x256xf32>
    %145 = arith.select %143, %141, %144 : vector<8x256xi1>, vector<8x256xf32>
    %146 = vector.extract_strided_slice %7 {offsets = [0, 1], sizes = [8, 1], strides = [1, 1]} : vector<8x25xf32> to vector<8x1xf32>
    %147 = vector.broadcast %146 : vector<8x1xf32> to vector<8x256xf32>
    %148 = arith.mulf %145, %147 : vector<8x256xf32>
    %149 = arith.addf %121, %148 : vector<8x256xf32>
    %c-1_i32_45 = arith.constant -1 : i32
    %150 = vector.broadcast %c-1_i32_45 : i32 to vector<1x256xi32>
    %151 = arith.addi %2, %150 : vector<1x256xi32>
    %c0_i32_46 = arith.constant 0 : i32
    %152 = vector.broadcast %c0_i32_46 : i32 to vector<1x256xi32>
    %153 = arith.cmpi sge, %151, %152 : vector<1x256xi32>
    %154 = arith.andi %130, %153 : vector<1x256xi1>
    %c-1_i32_47 = arith.constant -1 : i32
    %155 = vector.broadcast %c-1_i32_47 : i32 to vector<1x256xi32>
    %156 = arith.addi %2, %155 : vector<1x256xi32>
    %c16_i32_48 = arith.constant 16 : i32
    %157 = vector.broadcast %c16_i32_48 : i32 to vector<1x256xi32>
    %158 = arith.cmpi slt, %156, %157 : vector<1x256xi32>
    %159 = arith.andi %154, %158 : vector<1x256xi1>
    %c17_i32 = arith.constant 17 : i32
    %160 = tpu.dynamic_rotate %16 by %c17_i32 dim 1 : vector<8x256xf32>, i32 -> vector<8x256xf32>
    %cst_49 = arith.constant 0.000000e+00 : f32
    %161 = vector.shape_cast %159 : vector<1x256xi1> to vector<1x256xi1>
    %162 = vector.broadcast %161 : vector<1x256xi1> to vector<8x256xi1>
    %163 = vector.broadcast %cst_49 : f32 to vector<8x256xf32>
    %164 = arith.select %162, %160, %163 : vector<8x256xi1>, vector<8x256xf32>
    %165 = vector.extract_strided_slice %7 {offsets = [0, 6], sizes = [8, 1], strides = [1, 1]} : vector<8x25xf32> to vector<8x1xf32>
    %166 = vector.broadcast %165 : vector<8x1xf32> to vector<8x256xf32>
    %167 = arith.mulf %164, %166 : vector<8x256xf32>
    %168 = arith.addf %149, %167 : vector<8x256xf32>
    %c0_i32_50 = arith.constant 0 : i32
    %169 = vector.broadcast %c0_i32_50 : i32 to vector<1x256xi32>
    %170 = arith.addi %2, %169 : vector<1x256xi32>
    %c0_i32_51 = arith.constant 0 : i32
    %171 = vector.broadcast %c0_i32_51 : i32 to vector<1x256xi32>
    %172 = arith.cmpi sge, %170, %171 : vector<1x256xi32>
    %173 = arith.andi %130, %172 : vector<1x256xi1>
    %c0_i32_52 = arith.constant 0 : i32
    %174 = vector.broadcast %c0_i32_52 : i32 to vector<1x256xi32>
    %175 = arith.addi %2, %174 : vector<1x256xi32>
    %c16_i32_53 = arith.constant 16 : i32
    %176 = vector.broadcast %c16_i32_53 : i32 to vector<1x256xi32>
    %177 = arith.cmpi slt, %175, %176 : vector<1x256xi32>
    %178 = arith.andi %173, %177 : vector<1x256xi1>
    %c1_i32_54 = arith.constant 1 : i32
    %179 = tpu.dynamic_rotate %16 by %c1_i32_54 dim 1 : vector<8x256xf32>, i32 -> vector<8x256xf32>
    %cst_55 = arith.constant 0.000000e+00 : f32
    %180 = vector.shape_cast %178 : vector<1x256xi1> to vector<1x256xi1>
    %181 = vector.broadcast %180 : vector<1x256xi1> to vector<8x256xi1>
    %182 = vector.broadcast %cst_55 : f32 to vector<8x256xf32>
    %183 = arith.select %181, %179, %182 : vector<8x256xi1>, vector<8x256xf32>
    %184 = vector.extract_strided_slice %7 {offsets = [0, 11], sizes = [8, 1], strides = [1, 1]} : vector<8x25xf32> to vector<8x1xf32>
    %185 = vector.broadcast %184 : vector<8x1xf32> to vector<8x256xf32>
    %186 = arith.mulf %183, %185 : vector<8x256xf32>
    %187 = arith.addf %168, %186 : vector<8x256xf32>
    %c1_i32_56 = arith.constant 1 : i32
    %188 = vector.broadcast %c1_i32_56 : i32 to vector<1x256xi32>
    %189 = arith.addi %2, %188 : vector<1x256xi32>
    %c0_i32_57 = arith.constant 0 : i32
    %190 = vector.broadcast %c0_i32_57 : i32 to vector<1x256xi32>
    %191 = arith.cmpi sge, %189, %190 : vector<1x256xi32>
    %192 = arith.andi %130, %191 : vector<1x256xi1>
    %c1_i32_58 = arith.constant 1 : i32
    %193 = vector.broadcast %c1_i32_58 : i32 to vector<1x256xi32>
    %194 = arith.addi %2, %193 : vector<1x256xi32>
    %c16_i32_59 = arith.constant 16 : i32
    %195 = vector.broadcast %c16_i32_59 : i32 to vector<1x256xi32>
    %196 = arith.cmpi slt, %194, %195 : vector<1x256xi32>
    %197 = arith.andi %192, %196 : vector<1x256xi1>
    %c241_i32 = arith.constant 241 : i32
    %198 = tpu.dynamic_rotate %16 by %c241_i32 dim 1 : vector<8x256xf32>, i32 -> vector<8x256xf32>
    %cst_60 = arith.constant 0.000000e+00 : f32
    %199 = vector.shape_cast %197 : vector<1x256xi1> to vector<1x256xi1>
    %200 = vector.broadcast %199 : vector<1x256xi1> to vector<8x256xi1>
    %201 = vector.broadcast %cst_60 : f32 to vector<8x256xf32>
    %202 = arith.select %200, %198, %201 : vector<8x256xi1>, vector<8x256xf32>
    %203 = vector.extract_strided_slice %7 {offsets = [0, 16], sizes = [8, 1], strides = [1, 1]} : vector<8x25xf32> to vector<8x1xf32>
    %204 = vector.broadcast %203 : vector<8x1xf32> to vector<8x256xf32>
    %205 = arith.mulf %202, %204 : vector<8x256xf32>
    %206 = arith.addf %187, %205 : vector<8x256xf32>
    %c2_i32_61 = arith.constant 2 : i32
    %207 = vector.broadcast %c2_i32_61 : i32 to vector<1x256xi32>
    %208 = arith.addi %2, %207 : vector<1x256xi32>
    %c0_i32_62 = arith.constant 0 : i32
    %209 = vector.broadcast %c0_i32_62 : i32 to vector<1x256xi32>
    %210 = arith.cmpi sge, %208, %209 : vector<1x256xi32>
    %211 = arith.andi %130, %210 : vector<1x256xi1>
    %c2_i32_63 = arith.constant 2 : i32
    %212 = vector.broadcast %c2_i32_63 : i32 to vector<1x256xi32>
    %213 = arith.addi %2, %212 : vector<1x256xi32>
    %c16_i32_64 = arith.constant 16 : i32
    %214 = vector.broadcast %c16_i32_64 : i32 to vector<1x256xi32>
    %215 = arith.cmpi slt, %213, %214 : vector<1x256xi32>
    %216 = arith.andi %211, %215 : vector<1x256xi1>
    %c225_i32 = arith.constant 225 : i32
    %217 = tpu.dynamic_rotate %16 by %c225_i32 dim 1 : vector<8x256xf32>, i32 -> vector<8x256xf32>
    %cst_65 = arith.constant 0.000000e+00 : f32
    %218 = vector.shape_cast %216 : vector<1x256xi1> to vector<1x256xi1>
    %219 = vector.broadcast %218 : vector<1x256xi1> to vector<8x256xi1>
    %220 = vector.broadcast %cst_65 : f32 to vector<8x256xf32>
    %221 = arith.select %219, %217, %220 : vector<8x256xi1>, vector<8x256xf32>
    %222 = vector.extract_strided_slice %7 {offsets = [0, 21], sizes = [8, 1], strides = [1, 1]} : vector<8x25xf32> to vector<8x1xf32>
    %223 = vector.broadcast %222 : vector<8x1xf32> to vector<8x256xf32>
    %224 = arith.mulf %221, %223 : vector<8x256xf32>
    %225 = arith.addf %206, %224 : vector<8x256xf32>
    %c0_i32_66 = arith.constant 0 : i32
    %226 = vector.broadcast %c0_i32_66 : i32 to vector<1x256xi32>
    %227 = arith.addi %3, %226 : vector<1x256xi32>
    %c0_i32_67 = arith.constant 0 : i32
    %228 = vector.broadcast %c0_i32_67 : i32 to vector<1x256xi32>
    %229 = arith.cmpi sge, %227, %228 : vector<1x256xi32>
    %c0_i32_68 = arith.constant 0 : i32
    %230 = vector.broadcast %c0_i32_68 : i32 to vector<1x256xi32>
    %231 = arith.addi %3, %230 : vector<1x256xi32>
    %c16_i32_69 = arith.constant 16 : i32
    %232 = vector.broadcast %c16_i32_69 : i32 to vector<1x256xi32>
    %233 = arith.cmpi slt, %231, %232 : vector<1x256xi32>
    %234 = arith.andi %229, %233 : vector<1x256xi1>
    %c-2_i32_70 = arith.constant -2 : i32
    %235 = vector.broadcast %c-2_i32_70 : i32 to vector<1x256xi32>
    %236 = arith.addi %2, %235 : vector<1x256xi32>
    %c0_i32_71 = arith.constant 0 : i32
    %237 = vector.broadcast %c0_i32_71 : i32 to vector<1x256xi32>
    %238 = arith.cmpi sge, %236, %237 : vector<1x256xi32>
    %239 = arith.andi %234, %238 : vector<1x256xi1>
    %c-2_i32_72 = arith.constant -2 : i32
    %240 = vector.broadcast %c-2_i32_72 : i32 to vector<1x256xi32>
    %241 = arith.addi %2, %240 : vector<1x256xi32>
    %c16_i32_73 = arith.constant 16 : i32
    %242 = vector.broadcast %c16_i32_73 : i32 to vector<1x256xi32>
    %243 = arith.cmpi slt, %241, %242 : vector<1x256xi32>
    %244 = arith.andi %239, %243 : vector<1x256xi1>
    %c32_i32 = arith.constant 32 : i32
    %245 = tpu.dynamic_rotate %16 by %c32_i32 dim 1 : vector<8x256xf32>, i32 -> vector<8x256xf32>
    %cst_74 = arith.constant 0.000000e+00 : f32
    %246 = vector.shape_cast %244 : vector<1x256xi1> to vector<1x256xi1>
    %247 = vector.broadcast %246 : vector<1x256xi1> to vector<8x256xi1>
    %248 = vector.broadcast %cst_74 : f32 to vector<8x256xf32>
    %249 = arith.select %247, %245, %248 : vector<8x256xi1>, vector<8x256xf32>
    %250 = vector.extract_strided_slice %7 {offsets = [0, 2], sizes = [8, 1], strides = [1, 1]} : vector<8x25xf32> to vector<8x1xf32>
    %251 = vector.broadcast %250 : vector<8x1xf32> to vector<8x256xf32>
    %252 = arith.mulf %249, %251 : vector<8x256xf32>
    %253 = arith.addf %225, %252 : vector<8x256xf32>
    %c-1_i32_75 = arith.constant -1 : i32
    %254 = vector.broadcast %c-1_i32_75 : i32 to vector<1x256xi32>
    %255 = arith.addi %2, %254 : vector<1x256xi32>
    %c0_i32_76 = arith.constant 0 : i32
    %256 = vector.broadcast %c0_i32_76 : i32 to vector<1x256xi32>
    %257 = arith.cmpi sge, %255, %256 : vector<1x256xi32>
    %258 = arith.andi %234, %257 : vector<1x256xi1>
    %c-1_i32_77 = arith.constant -1 : i32
    %259 = vector.broadcast %c-1_i32_77 : i32 to vector<1x256xi32>
    %260 = arith.addi %2, %259 : vector<1x256xi32>
    %c16_i32_78 = arith.constant 16 : i32
    %261 = vector.broadcast %c16_i32_78 : i32 to vector<1x256xi32>
    %262 = arith.cmpi slt, %260, %261 : vector<1x256xi32>
    %263 = arith.andi %258, %262 : vector<1x256xi1>
    %c16_i32_79 = arith.constant 16 : i32
    %264 = tpu.dynamic_rotate %16 by %c16_i32_79 dim 1 : vector<8x256xf32>, i32 -> vector<8x256xf32>
    %cst_80 = arith.constant 0.000000e+00 : f32
    %265 = vector.shape_cast %263 : vector<1x256xi1> to vector<1x256xi1>
    %266 = vector.broadcast %265 : vector<1x256xi1> to vector<8x256xi1>
    %267 = vector.broadcast %cst_80 : f32 to vector<8x256xf32>
    %268 = arith.select %266, %264, %267 : vector<8x256xi1>, vector<8x256xf32>
    %269 = vector.extract_strided_slice %7 {offsets = [0, 7], sizes = [8, 1], strides = [1, 1]} : vector<8x25xf32> to vector<8x1xf32>
    %270 = vector.broadcast %269 : vector<8x1xf32> to vector<8x256xf32>
    %271 = arith.mulf %268, %270 : vector<8x256xf32>
    %272 = arith.addf %253, %271 : vector<8x256xf32>
    %273 = vector.extract_strided_slice %7 {offsets = [0, 12], sizes = [8, 1], strides = [1, 1]} : vector<8x25xf32> to vector<8x1xf32>
    %274 = vector.broadcast %273 : vector<8x1xf32> to vector<8x256xf32>
    %275 = arith.mulf %16, %274 : vector<8x256xf32>
    %276 = arith.addf %272, %275 : vector<8x256xf32>
    %c1_i32_81 = arith.constant 1 : i32
    %277 = vector.broadcast %c1_i32_81 : i32 to vector<1x256xi32>
    %278 = arith.addi %2, %277 : vector<1x256xi32>
    %c0_i32_82 = arith.constant 0 : i32
    %279 = vector.broadcast %c0_i32_82 : i32 to vector<1x256xi32>
    %280 = arith.cmpi sge, %278, %279 : vector<1x256xi32>
    %281 = arith.andi %234, %280 : vector<1x256xi1>
    %c1_i32_83 = arith.constant 1 : i32
    %282 = vector.broadcast %c1_i32_83 : i32 to vector<1x256xi32>
    %283 = arith.addi %2, %282 : vector<1x256xi32>
    %c16_i32_84 = arith.constant 16 : i32
    %284 = vector.broadcast %c16_i32_84 : i32 to vector<1x256xi32>
    %285 = arith.cmpi slt, %283, %284 : vector<1x256xi32>
    %286 = arith.andi %281, %285 : vector<1x256xi1>
    %c240_i32 = arith.constant 240 : i32
    %287 = tpu.dynamic_rotate %16 by %c240_i32 dim 1 : vector<8x256xf32>, i32 -> vector<8x256xf32>
    %cst_85 = arith.constant 0.000000e+00 : f32
    %288 = vector.shape_cast %286 : vector<1x256xi1> to vector<1x256xi1>
    %289 = vector.broadcast %288 : vector<1x256xi1> to vector<8x256xi1>
    %290 = vector.broadcast %cst_85 : f32 to vector<8x256xf32>
    %291 = arith.select %289, %287, %290 : vector<8x256xi1>, vector<8x256xf32>
    %292 = vector.extract_strided_slice %7 {offsets = [0, 17], sizes = [8, 1], strides = [1, 1]} : vector<8x25xf32> to vector<8x1xf32>
    %293 = vector.broadcast %292 : vector<8x1xf32> to vector<8x256xf32>
    %294 = arith.mulf %291, %293 : vector<8x256xf32>
    %295 = arith.addf %276, %294 : vector<8x256xf32>
    %c2_i32_86 = arith.constant 2 : i32
    %296 = vector.broadcast %c2_i32_86 : i32 to vector<1x256xi32>
    %297 = arith.addi %2, %296 : vector<1x256xi32>
    %c0_i32_87 = arith.constant 0 : i32
    %298 = vector.broadcast %c0_i32_87 : i32 to vector<1x256xi32>
    %299 = arith.cmpi sge, %297, %298 : vector<1x256xi32>
    %300 = arith.andi %234, %299 : vector<1x256xi1>
    %c2_i32_88 = arith.constant 2 : i32
    %301 = vector.broadcast %c2_i32_88 : i32 to vector<1x256xi32>
    %302 = arith.addi %2, %301 : vector<1x256xi32>
    %c16_i32_89 = arith.constant 16 : i32
    %303 = vector.broadcast %c16_i32_89 : i32 to vector<1x256xi32>
    %304 = arith.cmpi slt, %302, %303 : vector<1x256xi32>
    %305 = arith.andi %300, %304 : vector<1x256xi1>
    %c224_i32 = arith.constant 224 : i32
    %306 = tpu.dynamic_rotate %16 by %c224_i32 dim 1 : vector<8x256xf32>, i32 -> vector<8x256xf32>
    %cst_90 = arith.constant 0.000000e+00 : f32
    %307 = vector.shape_cast %305 : vector<1x256xi1> to vector<1x256xi1>
    %308 = vector.broadcast %307 : vector<1x256xi1> to vector<8x256xi1>
    %309 = vector.broadcast %cst_90 : f32 to vector<8x256xf32>
    %310 = arith.select %308, %306, %309 : vector<8x256xi1>, vector<8x256xf32>
    %311 = vector.extract_strided_slice %7 {offsets = [0, 22], sizes = [8, 1], strides = [1, 1]} : vector<8x25xf32> to vector<8x1xf32>
    %312 = vector.broadcast %311 : vector<8x1xf32> to vector<8x256xf32>
    %313 = arith.mulf %310, %312 : vector<8x256xf32>
    %314 = arith.addf %295, %313 : vector<8x256xf32>
    %c1_i32_91 = arith.constant 1 : i32
    %315 = vector.broadcast %c1_i32_91 : i32 to vector<1x256xi32>
    %316 = arith.addi %3, %315 : vector<1x256xi32>
    %c0_i32_92 = arith.constant 0 : i32
    %317 = vector.broadcast %c0_i32_92 : i32 to vector<1x256xi32>
    %318 = arith.cmpi sge, %316, %317 : vector<1x256xi32>
    %c1_i32_93 = arith.constant 1 : i32
    %319 = vector.broadcast %c1_i32_93 : i32 to vector<1x256xi32>
    %320 = arith.addi %3, %319 : vector<1x256xi32>
    %c16_i32_94 = arith.constant 16 : i32
    %321 = vector.broadcast %c16_i32_94 : i32 to vector<1x256xi32>
    %322 = arith.cmpi slt, %320, %321 : vector<1x256xi32>
    %323 = arith.andi %318, %322 : vector<1x256xi1>
    %c-2_i32_95 = arith.constant -2 : i32
    %324 = vector.broadcast %c-2_i32_95 : i32 to vector<1x256xi32>
    %325 = arith.addi %2, %324 : vector<1x256xi32>
    %c0_i32_96 = arith.constant 0 : i32
    %326 = vector.broadcast %c0_i32_96 : i32 to vector<1x256xi32>
    %327 = arith.cmpi sge, %325, %326 : vector<1x256xi32>
    %328 = arith.andi %323, %327 : vector<1x256xi1>
    %c-2_i32_97 = arith.constant -2 : i32
    %329 = vector.broadcast %c-2_i32_97 : i32 to vector<1x256xi32>
    %330 = arith.addi %2, %329 : vector<1x256xi32>
    %c16_i32_98 = arith.constant 16 : i32
    %331 = vector.broadcast %c16_i32_98 : i32 to vector<1x256xi32>
    %332 = arith.cmpi slt, %330, %331 : vector<1x256xi32>
    %333 = arith.andi %328, %332 : vector<1x256xi1>
    %c31_i32 = arith.constant 31 : i32
    %334 = tpu.dynamic_rotate %16 by %c31_i32 dim 1 : vector<8x256xf32>, i32 -> vector<8x256xf32>
    %cst_99 = arith.constant 0.000000e+00 : f32
    %335 = vector.shape_cast %333 : vector<1x256xi1> to vector<1x256xi1>
    %336 = vector.broadcast %335 : vector<1x256xi1> to vector<8x256xi1>
    %337 = vector.broadcast %cst_99 : f32 to vector<8x256xf32>
    %338 = arith.select %336, %334, %337 : vector<8x256xi1>, vector<8x256xf32>
    %339 = vector.extract_strided_slice %7 {offsets = [0, 3], sizes = [8, 1], strides = [1, 1]} : vector<8x25xf32> to vector<8x1xf32>
    %340 = vector.broadcast %339 : vector<8x1xf32> to vector<8x256xf32>
    %341 = arith.mulf %338, %340 : vector<8x256xf32>
    %342 = arith.addf %314, %341 : vector<8x256xf32>
    %c-1_i32_100 = arith.constant -1 : i32
    %343 = vector.broadcast %c-1_i32_100 : i32 to vector<1x256xi32>
    %344 = arith.addi %2, %343 : vector<1x256xi32>
    %c0_i32_101 = arith.constant 0 : i32
    %345 = vector.broadcast %c0_i32_101 : i32 to vector<1x256xi32>
    %346 = arith.cmpi sge, %344, %345 : vector<1x256xi32>
    %347 = arith.andi %323, %346 : vector<1x256xi1>
    %c-1_i32_102 = arith.constant -1 : i32
    %348 = vector.broadcast %c-1_i32_102 : i32 to vector<1x256xi32>
    %349 = arith.addi %2, %348 : vector<1x256xi32>
    %c16_i32_103 = arith.constant 16 : i32
    %350 = vector.broadcast %c16_i32_103 : i32 to vector<1x256xi32>
    %351 = arith.cmpi slt, %349, %350 : vector<1x256xi32>
    %352 = arith.andi %347, %351 : vector<1x256xi1>
    %c15_i32 = arith.constant 15 : i32
    %353 = tpu.dynamic_rotate %16 by %c15_i32 dim 1 : vector<8x256xf32>, i32 -> vector<8x256xf32>
    %cst_104 = arith.constant 0.000000e+00 : f32
    %354 = vector.shape_cast %352 : vector<1x256xi1> to vector<1x256xi1>
    %355 = vector.broadcast %354 : vector<1x256xi1> to vector<8x256xi1>
    %356 = vector.broadcast %cst_104 : f32 to vector<8x256xf32>
    %357 = arith.select %355, %353, %356 : vector<8x256xi1>, vector<8x256xf32>
    %358 = vector.extract_strided_slice %7 {offsets = [0, 8], sizes = [8, 1], strides = [1, 1]} : vector<8x25xf32> to vector<8x1xf32>
    %359 = vector.broadcast %358 : vector<8x1xf32> to vector<8x256xf32>
    %360 = arith.mulf %357, %359 : vector<8x256xf32>
    %361 = arith.addf %342, %360 : vector<8x256xf32>
    %c0_i32_105 = arith.constant 0 : i32
    %362 = vector.broadcast %c0_i32_105 : i32 to vector<1x256xi32>
    %363 = arith.addi %2, %362 : vector<1x256xi32>
    %c0_i32_106 = arith.constant 0 : i32
    %364 = vector.broadcast %c0_i32_106 : i32 to vector<1x256xi32>
    %365 = arith.cmpi sge, %363, %364 : vector<1x256xi32>
    %366 = arith.andi %323, %365 : vector<1x256xi1>
    %c0_i32_107 = arith.constant 0 : i32
    %367 = vector.broadcast %c0_i32_107 : i32 to vector<1x256xi32>
    %368 = arith.addi %2, %367 : vector<1x256xi32>
    %c16_i32_108 = arith.constant 16 : i32
    %369 = vector.broadcast %c16_i32_108 : i32 to vector<1x256xi32>
    %370 = arith.cmpi slt, %368, %369 : vector<1x256xi32>
    %371 = arith.andi %366, %370 : vector<1x256xi1>
    %c255_i32 = arith.constant 255 : i32
    %372 = tpu.dynamic_rotate %16 by %c255_i32 dim 1 : vector<8x256xf32>, i32 -> vector<8x256xf32>
    %cst_109 = arith.constant 0.000000e+00 : f32
    %373 = vector.shape_cast %371 : vector<1x256xi1> to vector<1x256xi1>
    %374 = vector.broadcast %373 : vector<1x256xi1> to vector<8x256xi1>
    %375 = vector.broadcast %cst_109 : f32 to vector<8x256xf32>
    %376 = arith.select %374, %372, %375 : vector<8x256xi1>, vector<8x256xf32>
    %377 = vector.extract_strided_slice %7 {offsets = [0, 13], sizes = [8, 1], strides = [1, 1]} : vector<8x25xf32> to vector<8x1xf32>
    %378 = vector.broadcast %377 : vector<8x1xf32> to vector<8x256xf32>
    %379 = arith.mulf %376, %378 : vector<8x256xf32>
    %380 = arith.addf %361, %379 : vector<8x256xf32>
    %c1_i32_110 = arith.constant 1 : i32
    %381 = vector.broadcast %c1_i32_110 : i32 to vector<1x256xi32>
    %382 = arith.addi %2, %381 : vector<1x256xi32>
    %c0_i32_111 = arith.constant 0 : i32
    %383 = vector.broadcast %c0_i32_111 : i32 to vector<1x256xi32>
    %384 = arith.cmpi sge, %382, %383 : vector<1x256xi32>
    %385 = arith.andi %323, %384 : vector<1x256xi1>
    %c1_i32_112 = arith.constant 1 : i32
    %386 = vector.broadcast %c1_i32_112 : i32 to vector<1x256xi32>
    %387 = arith.addi %2, %386 : vector<1x256xi32>
    %c16_i32_113 = arith.constant 16 : i32
    %388 = vector.broadcast %c16_i32_113 : i32 to vector<1x256xi32>
    %389 = arith.cmpi slt, %387, %388 : vector<1x256xi32>
    %390 = arith.andi %385, %389 : vector<1x256xi1>
    %c239_i32 = arith.constant 239 : i32
    %391 = tpu.dynamic_rotate %16 by %c239_i32 dim 1 : vector<8x256xf32>, i32 -> vector<8x256xf32>
    %cst_114 = arith.constant 0.000000e+00 : f32
    %392 = vector.shape_cast %390 : vector<1x256xi1> to vector<1x256xi1>
    %393 = vector.broadcast %392 : vector<1x256xi1> to vector<8x256xi1>
    %394 = vector.broadcast %cst_114 : f32 to vector<8x256xf32>
    %395 = arith.select %393, %391, %394 : vector<8x256xi1>, vector<8x256xf32>
    %396 = vector.extract_strided_slice %7 {offsets = [0, 18], sizes = [8, 1], strides = [1, 1]} : vector<8x25xf32> to vector<8x1xf32>
    %397 = vector.broadcast %396 : vector<8x1xf32> to vector<8x256xf32>
    %398 = arith.mulf %395, %397 : vector<8x256xf32>
    %399 = arith.addf %380, %398 : vector<8x256xf32>
    %c2_i32_115 = arith.constant 2 : i32
    %400 = vector.broadcast %c2_i32_115 : i32 to vector<1x256xi32>
    %401 = arith.addi %2, %400 : vector<1x256xi32>
    %c0_i32_116 = arith.constant 0 : i32
    %402 = vector.broadcast %c0_i32_116 : i32 to vector<1x256xi32>
    %403 = arith.cmpi sge, %401, %402 : vector<1x256xi32>
    %404 = arith.andi %323, %403 : vector<1x256xi1>
    %c2_i32_117 = arith.constant 2 : i32
    %405 = vector.broadcast %c2_i32_117 : i32 to vector<1x256xi32>
    %406 = arith.addi %2, %405 : vector<1x256xi32>
    %c16_i32_118 = arith.constant 16 : i32
    %407 = vector.broadcast %c16_i32_118 : i32 to vector<1x256xi32>
    %408 = arith.cmpi slt, %406, %407 : vector<1x256xi32>
    %409 = arith.andi %404, %408 : vector<1x256xi1>
    %c223_i32 = arith.constant 223 : i32
    %410 = tpu.dynamic_rotate %16 by %c223_i32 dim 1 : vector<8x256xf32>, i32 -> vector<8x256xf32>
    %cst_119 = arith.constant 0.000000e+00 : f32
    %411 = vector.shape_cast %409 : vector<1x256xi1> to vector<1x256xi1>
    %412 = vector.broadcast %411 : vector<1x256xi1> to vector<8x256xi1>
    %413 = vector.broadcast %cst_119 : f32 to vector<8x256xf32>
    %414 = arith.select %412, %410, %413 : vector<8x256xi1>, vector<8x256xf32>
    %415 = vector.extract_strided_slice %7 {offsets = [0, 23], sizes = [8, 1], strides = [1, 1]} : vector<8x25xf32> to vector<8x1xf32>
    %416 = vector.broadcast %415 : vector<8x1xf32> to vector<8x256xf32>
    %417 = arith.mulf %414, %416 : vector<8x256xf32>
    %418 = arith.addf %399, %417 : vector<8x256xf32>
    %c2_i32_120 = arith.constant 2 : i32
    %419 = vector.broadcast %c2_i32_120 : i32 to vector<1x256xi32>
    %420 = arith.addi %3, %419 : vector<1x256xi32>
    %c0_i32_121 = arith.constant 0 : i32
    %421 = vector.broadcast %c0_i32_121 : i32 to vector<1x256xi32>
    %422 = arith.cmpi sge, %420, %421 : vector<1x256xi32>
    %c2_i32_122 = arith.constant 2 : i32
    %423 = vector.broadcast %c2_i32_122 : i32 to vector<1x256xi32>
    %424 = arith.addi %3, %423 : vector<1x256xi32>
    %c16_i32_123 = arith.constant 16 : i32
    %425 = vector.broadcast %c16_i32_123 : i32 to vector<1x256xi32>
    %426 = arith.cmpi slt, %424, %425 : vector<1x256xi32>
    %427 = arith.andi %422, %426 : vector<1x256xi1>
    %c-2_i32_124 = arith.constant -2 : i32
    %428 = vector.broadcast %c-2_i32_124 : i32 to vector<1x256xi32>
    %429 = arith.addi %2, %428 : vector<1x256xi32>
    %c0_i32_125 = arith.constant 0 : i32
    %430 = vector.broadcast %c0_i32_125 : i32 to vector<1x256xi32>
    %431 = arith.cmpi sge, %429, %430 : vector<1x256xi32>
    %432 = arith.andi %427, %431 : vector<1x256xi1>
    %c-2_i32_126 = arith.constant -2 : i32
    %433 = vector.broadcast %c-2_i32_126 : i32 to vector<1x256xi32>
    %434 = arith.addi %2, %433 : vector<1x256xi32>
    %c16_i32_127 = arith.constant 16 : i32
    %435 = vector.broadcast %c16_i32_127 : i32 to vector<1x256xi32>
    %436 = arith.cmpi slt, %434, %435 : vector<1x256xi32>
    %437 = arith.andi %432, %436 : vector<1x256xi1>
    %c30_i32 = arith.constant 30 : i32
    %438 = tpu.dynamic_rotate %16 by %c30_i32 dim 1 : vector<8x256xf32>, i32 -> vector<8x256xf32>
    %cst_128 = arith.constant 0.000000e+00 : f32
    %439 = vector.shape_cast %437 : vector<1x256xi1> to vector<1x256xi1>
    %440 = vector.broadcast %439 : vector<1x256xi1> to vector<8x256xi1>
    %441 = vector.broadcast %cst_128 : f32 to vector<8x256xf32>
    %442 = arith.select %440, %438, %441 : vector<8x256xi1>, vector<8x256xf32>
    %443 = vector.extract_strided_slice %7 {offsets = [0, 4], sizes = [8, 1], strides = [1, 1]} : vector<8x25xf32> to vector<8x1xf32>
    %444 = vector.broadcast %443 : vector<8x1xf32> to vector<8x256xf32>
    %445 = arith.mulf %442, %444 : vector<8x256xf32>
    %446 = arith.addf %418, %445 : vector<8x256xf32>
    %c-1_i32_129 = arith.constant -1 : i32
    %447 = vector.broadcast %c-1_i32_129 : i32 to vector<1x256xi32>
    %448 = arith.addi %2, %447 : vector<1x256xi32>
    %c0_i32_130 = arith.constant 0 : i32
    %449 = vector.broadcast %c0_i32_130 : i32 to vector<1x256xi32>
    %450 = arith.cmpi sge, %448, %449 : vector<1x256xi32>
    %451 = arith.andi %427, %450 : vector<1x256xi1>
    %c-1_i32_131 = arith.constant -1 : i32
    %452 = vector.broadcast %c-1_i32_131 : i32 to vector<1x256xi32>
    %453 = arith.addi %2, %452 : vector<1x256xi32>
    %c16_i32_132 = arith.constant 16 : i32
    %454 = vector.broadcast %c16_i32_132 : i32 to vector<1x256xi32>
    %455 = arith.cmpi slt, %453, %454 : vector<1x256xi32>
    %456 = arith.andi %451, %455 : vector<1x256xi1>
    %c14_i32 = arith.constant 14 : i32
    %457 = tpu.dynamic_rotate %16 by %c14_i32 dim 1 : vector<8x256xf32>, i32 -> vector<8x256xf32>
    %cst_133 = arith.constant 0.000000e+00 : f32
    %458 = vector.shape_cast %456 : vector<1x256xi1> to vector<1x256xi1>
    %459 = vector.broadcast %458 : vector<1x256xi1> to vector<8x256xi1>
    %460 = vector.broadcast %cst_133 : f32 to vector<8x256xf32>
    %461 = arith.select %459, %457, %460 : vector<8x256xi1>, vector<8x256xf32>
    %462 = vector.extract_strided_slice %7 {offsets = [0, 9], sizes = [8, 1], strides = [1, 1]} : vector<8x25xf32> to vector<8x1xf32>
    %463 = vector.broadcast %462 : vector<8x1xf32> to vector<8x256xf32>
    %464 = arith.mulf %461, %463 : vector<8x256xf32>
    %465 = arith.addf %446, %464 : vector<8x256xf32>
    %c0_i32_134 = arith.constant 0 : i32
    %466 = vector.broadcast %c0_i32_134 : i32 to vector<1x256xi32>
    %467 = arith.addi %2, %466 : vector<1x256xi32>
    %c0_i32_135 = arith.constant 0 : i32
    %468 = vector.broadcast %c0_i32_135 : i32 to vector<1x256xi32>
    %469 = arith.cmpi sge, %467, %468 : vector<1x256xi32>
    %470 = arith.andi %427, %469 : vector<1x256xi1>
    %c0_i32_136 = arith.constant 0 : i32
    %471 = vector.broadcast %c0_i32_136 : i32 to vector<1x256xi32>
    %472 = arith.addi %2, %471 : vector<1x256xi32>
    %c16_i32_137 = arith.constant 16 : i32
    %473 = vector.broadcast %c16_i32_137 : i32 to vector<1x256xi32>
    %474 = arith.cmpi slt, %472, %473 : vector<1x256xi32>
    %475 = arith.andi %470, %474 : vector<1x256xi1>
    %c254_i32 = arith.constant 254 : i32
    %476 = tpu.dynamic_rotate %16 by %c254_i32 dim 1 : vector<8x256xf32>, i32 -> vector<8x256xf32>
    %cst_138 = arith.constant 0.000000e+00 : f32
    %477 = vector.shape_cast %475 : vector<1x256xi1> to vector<1x256xi1>
    %478 = vector.broadcast %477 : vector<1x256xi1> to vector<8x256xi1>
    %479 = vector.broadcast %cst_138 : f32 to vector<8x256xf32>
    %480 = arith.select %478, %476, %479 : vector<8x256xi1>, vector<8x256xf32>
    %481 = vector.extract_strided_slice %7 {offsets = [0, 14], sizes = [8, 1], strides = [1, 1]} : vector<8x25xf32> to vector<8x1xf32>
    %482 = vector.broadcast %481 : vector<8x1xf32> to vector<8x256xf32>
    %483 = arith.mulf %480, %482 : vector<8x256xf32>
    %484 = arith.addf %465, %483 : vector<8x256xf32>
    %c1_i32_139 = arith.constant 1 : i32
    %485 = vector.broadcast %c1_i32_139 : i32 to vector<1x256xi32>
    %486 = arith.addi %2, %485 : vector<1x256xi32>
    %c0_i32_140 = arith.constant 0 : i32
    %487 = vector.broadcast %c0_i32_140 : i32 to vector<1x256xi32>
    %488 = arith.cmpi sge, %486, %487 : vector<1x256xi32>
    %489 = arith.andi %427, %488 : vector<1x256xi1>
    %c1_i32_141 = arith.constant 1 : i32
    %490 = vector.broadcast %c1_i32_141 : i32 to vector<1x256xi32>
    %491 = arith.addi %2, %490 : vector<1x256xi32>
    %c16_i32_142 = arith.constant 16 : i32
    %492 = vector.broadcast %c16_i32_142 : i32 to vector<1x256xi32>
    %493 = arith.cmpi slt, %491, %492 : vector<1x256xi32>
    %494 = arith.andi %489, %493 : vector<1x256xi1>
    %c238_i32 = arith.constant 238 : i32
    %495 = tpu.dynamic_rotate %16 by %c238_i32 dim 1 : vector<8x256xf32>, i32 -> vector<8x256xf32>
    %cst_143 = arith.constant 0.000000e+00 : f32
    %496 = vector.shape_cast %494 : vector<1x256xi1> to vector<1x256xi1>
    %497 = vector.broadcast %496 : vector<1x256xi1> to vector<8x256xi1>
    %498 = vector.broadcast %cst_143 : f32 to vector<8x256xf32>
    %499 = arith.select %497, %495, %498 : vector<8x256xi1>, vector<8x256xf32>
    %500 = vector.extract_strided_slice %7 {offsets = [0, 19], sizes = [8, 1], strides = [1, 1]} : vector<8x25xf32> to vector<8x1xf32>
    %501 = vector.broadcast %500 : vector<8x1xf32> to vector<8x256xf32>
    %502 = arith.mulf %499, %501 : vector<8x256xf32>
    %503 = arith.addf %484, %502 : vector<8x256xf32>
    %c2_i32_144 = arith.constant 2 : i32
    %504 = vector.broadcast %c2_i32_144 : i32 to vector<1x256xi32>
    %505 = arith.addi %2, %504 : vector<1x256xi32>
    %c0_i32_145 = arith.constant 0 : i32
    %506 = vector.broadcast %c0_i32_145 : i32 to vector<1x256xi32>
    %507 = arith.cmpi sge, %505, %506 : vector<1x256xi32>
    %508 = arith.andi %427, %507 : vector<1x256xi1>
    %c2_i32_146 = arith.constant 2 : i32
    %509 = vector.broadcast %c2_i32_146 : i32 to vector<1x256xi32>
    %510 = arith.addi %2, %509 : vector<1x256xi32>
    %c16_i32_147 = arith.constant 16 : i32
    %511 = vector.broadcast %c16_i32_147 : i32 to vector<1x256xi32>
    %512 = arith.cmpi slt, %510, %511 : vector<1x256xi32>
    %513 = arith.andi %508, %512 : vector<1x256xi1>
    %c222_i32 = arith.constant 222 : i32
    %514 = tpu.dynamic_rotate %16 by %c222_i32 dim 1 : vector<8x256xf32>, i32 -> vector<8x256xf32>
    %cst_148 = arith.constant 0.000000e+00 : f32
    %515 = vector.shape_cast %513 : vector<1x256xi1> to vector<1x256xi1>
    %516 = vector.broadcast %515 : vector<1x256xi1> to vector<8x256xi1>
    %517 = vector.broadcast %cst_148 : f32 to vector<8x256xf32>
    %518 = arith.select %516, %514, %517 : vector<8x256xi1>, vector<8x256xf32>
    %519 = vector.extract_strided_slice %7 {offsets = [0, 24], sizes = [8, 1], strides = [1, 1]} : vector<8x25xf32> to vector<8x1xf32>
    %520 = vector.broadcast %519 : vector<8x1xf32> to vector<8x256xf32>
    %521 = arith.mulf %518, %520 : vector<8x256xf32>
    %522 = arith.addf %503, %521 : vector<8x256xf32>
    %523 = vector.broadcast %6 : vector<8x1xf32> to vector<8x256xf32>
    %524 = arith.addf %522, %523 : vector<8x256xf32>
    %525 = tpu.iota {dimensions = array<i32: 0>} : vector<8x1xi32>
    %c4_i32 = arith.constant 4 : i32
    %526 = vector.broadcast %c4_i32 : i32 to vector<8x1xi32>
    %527 = arith.cmpi sge, %525, %526 : vector<8x1xi32>
    %528 = arith.negf %524 : vector<8x256xf32>
    %529 = math.exp %528 : vector<8x256xf32>
    %cst_149 = arith.constant 1.000000e+00 : f32
    %530 = vector.broadcast %cst_149 : f32 to vector<8x256xf32>
    %531 = arith.addf %530, %529 : vector<8x256xf32>
    %532 = arith.divf %530, %531 : vector<8x256xf32>
    %533 = arith.mulf %524, %532 : vector<8x256xf32>
    %534 = vector.shape_cast %527 : vector<8x1xi1> to vector<8x1xi1>
    %535 = vector.broadcast %534 : vector<8x1xi1> to vector<8x256xi1>
    %536 = arith.select %535, %533, %524 : vector<8x256xi1>, vector<8x256xf32>
    %c0_150 = arith.constant 0 : index
    %c0_151 = arith.constant 0 : index
    %537 = vector.load %arg4[%c0_150, %c0_151] : memref<16x35xf32, #tpu.memory_space<vmem>>, vector<16x8xf32>
    %c0_152 = arith.constant 0 : index
    %c8 = arith.constant 8 : index
    %538 = vector.load %arg4[%c0_152, %c8] : memref<16x35xf32, #tpu.memory_space<vmem>>, vector<16x1xf32>
    %c0_153 = arith.constant 0 : index
    %c9 = arith.constant 9 : index
    %539 = vector.load %arg4[%c0_153, %c9] : memref<16x35xf32, #tpu.memory_space<vmem>>, vector<16x1xf32>
    %c0_154 = arith.constant 0 : index
    %c10 = arith.constant 10 : index
    %540 = vector.load %arg4[%c0_154, %c10] : memref<16x35xf32, #tpu.memory_space<vmem>>, vector<16x25xf32>
    %cst_155 = arith.constant dense<0.000000e+00> : vector<16x256xf32>
    %541 = tpu.matmul %537, %536, %cst_155 {dimension_numbers = #tpu.dot_dimension_numbers<[1], [0], [0], [1], [0, 0, 1, 1], [], []>} : vector<16x8xf32>, vector<8x256xf32>, vector<16x256xf32> -> vector<16x256xf32>
    %542 = vector.broadcast %538 : vector<16x1xf32> to vector<16x256xf32>
    %543 = arith.addf %541, %542 : vector<16x256xf32>
    %cst_156 = arith.constant 0.000000e+00 : f32
    %544 = vector.broadcast %cst_156 : f32 to vector<16x256xf32>
    %c-2_i32_157 = arith.constant -2 : i32
    %545 = vector.broadcast %c-2_i32_157 : i32 to vector<1x256xi32>
    %546 = arith.addi %3, %545 : vector<1x256xi32>
    %c0_i32_158 = arith.constant 0 : i32
    %547 = vector.broadcast %c0_i32_158 : i32 to vector<1x256xi32>
    %548 = arith.cmpi sge, %546, %547 : vector<1x256xi32>
    %c-2_i32_159 = arith.constant -2 : i32
    %549 = vector.broadcast %c-2_i32_159 : i32 to vector<1x256xi32>
    %550 = arith.addi %3, %549 : vector<1x256xi32>
    %c16_i32_160 = arith.constant 16 : i32
    %551 = vector.broadcast %c16_i32_160 : i32 to vector<1x256xi32>
    %552 = arith.cmpi slt, %550, %551 : vector<1x256xi32>
    %553 = arith.andi %548, %552 : vector<1x256xi1>
    %c-2_i32_161 = arith.constant -2 : i32
    %554 = vector.broadcast %c-2_i32_161 : i32 to vector<1x256xi32>
    %555 = arith.addi %2, %554 : vector<1x256xi32>
    %c0_i32_162 = arith.constant 0 : i32
    %556 = vector.broadcast %c0_i32_162 : i32 to vector<1x256xi32>
    %557 = arith.cmpi sge, %555, %556 : vector<1x256xi32>
    %558 = arith.andi %553, %557 : vector<1x256xi1>
    %c-2_i32_163 = arith.constant -2 : i32
    %559 = vector.broadcast %c-2_i32_163 : i32 to vector<1x256xi32>
    %560 = arith.addi %2, %559 : vector<1x256xi32>
    %c16_i32_164 = arith.constant 16 : i32
    %561 = vector.broadcast %c16_i32_164 : i32 to vector<1x256xi32>
    %562 = arith.cmpi slt, %560, %561 : vector<1x256xi32>
    %563 = arith.andi %558, %562 : vector<1x256xi1>
    %c34_i32_165 = arith.constant 34 : i32
    %564 = tpu.dynamic_rotate %543 by %c34_i32_165 dim 1 : vector<16x256xf32>, i32 -> vector<16x256xf32>
    %cst_166 = arith.constant 0.000000e+00 : f32
    %565 = vector.shape_cast %563 : vector<1x256xi1> to vector<1x256xi1>
    %566 = vector.broadcast %565 : vector<1x256xi1> to vector<16x256xi1>
    %567 = vector.broadcast %cst_166 : f32 to vector<16x256xf32>
    %568 = arith.select %566, %564, %567 : vector<16x256xi1>, vector<16x256xf32>
    %569 = vector.extract_strided_slice %540 {offsets = [0, 0], sizes = [16, 1], strides = [1, 1]} : vector<16x25xf32> to vector<16x1xf32>
    %570 = vector.broadcast %569 : vector<16x1xf32> to vector<16x256xf32>
    %571 = arith.mulf %568, %570 : vector<16x256xf32>
    %572 = arith.addf %544, %571 : vector<16x256xf32>
    %c-1_i32_167 = arith.constant -1 : i32
    %573 = vector.broadcast %c-1_i32_167 : i32 to vector<1x256xi32>
    %574 = arith.addi %2, %573 : vector<1x256xi32>
    %c0_i32_168 = arith.constant 0 : i32
    %575 = vector.broadcast %c0_i32_168 : i32 to vector<1x256xi32>
    %576 = arith.cmpi sge, %574, %575 : vector<1x256xi32>
    %577 = arith.andi %553, %576 : vector<1x256xi1>
    %c-1_i32_169 = arith.constant -1 : i32
    %578 = vector.broadcast %c-1_i32_169 : i32 to vector<1x256xi32>
    %579 = arith.addi %2, %578 : vector<1x256xi32>
    %c16_i32_170 = arith.constant 16 : i32
    %580 = vector.broadcast %c16_i32_170 : i32 to vector<1x256xi32>
    %581 = arith.cmpi slt, %579, %580 : vector<1x256xi32>
    %582 = arith.andi %577, %581 : vector<1x256xi1>
    %c18_i32_171 = arith.constant 18 : i32
    %583 = tpu.dynamic_rotate %543 by %c18_i32_171 dim 1 : vector<16x256xf32>, i32 -> vector<16x256xf32>
    %cst_172 = arith.constant 0.000000e+00 : f32
    %584 = vector.shape_cast %582 : vector<1x256xi1> to vector<1x256xi1>
    %585 = vector.broadcast %584 : vector<1x256xi1> to vector<16x256xi1>
    %586 = vector.broadcast %cst_172 : f32 to vector<16x256xf32>
    %587 = arith.select %585, %583, %586 : vector<16x256xi1>, vector<16x256xf32>
    %588 = vector.extract_strided_slice %540 {offsets = [0, 5], sizes = [16, 1], strides = [1, 1]} : vector<16x25xf32> to vector<16x1xf32>
    %589 = vector.broadcast %588 : vector<16x1xf32> to vector<16x256xf32>
    %590 = arith.mulf %587, %589 : vector<16x256xf32>
    %591 = arith.addf %572, %590 : vector<16x256xf32>
    %c0_i32_173 = arith.constant 0 : i32
    %592 = vector.broadcast %c0_i32_173 : i32 to vector<1x256xi32>
    %593 = arith.addi %2, %592 : vector<1x256xi32>
    %c0_i32_174 = arith.constant 0 : i32
    %594 = vector.broadcast %c0_i32_174 : i32 to vector<1x256xi32>
    %595 = arith.cmpi sge, %593, %594 : vector<1x256xi32>
    %596 = arith.andi %553, %595 : vector<1x256xi1>
    %c0_i32_175 = arith.constant 0 : i32
    %597 = vector.broadcast %c0_i32_175 : i32 to vector<1x256xi32>
    %598 = arith.addi %2, %597 : vector<1x256xi32>
    %c16_i32_176 = arith.constant 16 : i32
    %599 = vector.broadcast %c16_i32_176 : i32 to vector<1x256xi32>
    %600 = arith.cmpi slt, %598, %599 : vector<1x256xi32>
    %601 = arith.andi %596, %600 : vector<1x256xi1>
    %c2_i32_177 = arith.constant 2 : i32
    %602 = tpu.dynamic_rotate %543 by %c2_i32_177 dim 1 : vector<16x256xf32>, i32 -> vector<16x256xf32>
    %cst_178 = arith.constant 0.000000e+00 : f32
    %603 = vector.shape_cast %601 : vector<1x256xi1> to vector<1x256xi1>
    %604 = vector.broadcast %603 : vector<1x256xi1> to vector<16x256xi1>
    %605 = vector.broadcast %cst_178 : f32 to vector<16x256xf32>
    %606 = arith.select %604, %602, %605 : vector<16x256xi1>, vector<16x256xf32>
    %607 = vector.extract_strided_slice %540 {offsets = [0, 10], sizes = [16, 1], strides = [1, 1]} : vector<16x25xf32> to vector<16x1xf32>
    %608 = vector.broadcast %607 : vector<16x1xf32> to vector<16x256xf32>
    %609 = arith.mulf %606, %608 : vector<16x256xf32>
    %610 = arith.addf %591, %609 : vector<16x256xf32>
    %c1_i32_179 = arith.constant 1 : i32
    %611 = vector.broadcast %c1_i32_179 : i32 to vector<1x256xi32>
    %612 = arith.addi %2, %611 : vector<1x256xi32>
    %c0_i32_180 = arith.constant 0 : i32
    %613 = vector.broadcast %c0_i32_180 : i32 to vector<1x256xi32>
    %614 = arith.cmpi sge, %612, %613 : vector<1x256xi32>
    %615 = arith.andi %553, %614 : vector<1x256xi1>
    %c1_i32_181 = arith.constant 1 : i32
    %616 = vector.broadcast %c1_i32_181 : i32 to vector<1x256xi32>
    %617 = arith.addi %2, %616 : vector<1x256xi32>
    %c16_i32_182 = arith.constant 16 : i32
    %618 = vector.broadcast %c16_i32_182 : i32 to vector<1x256xi32>
    %619 = arith.cmpi slt, %617, %618 : vector<1x256xi32>
    %620 = arith.andi %615, %619 : vector<1x256xi1>
    %c242_i32_183 = arith.constant 242 : i32
    %621 = tpu.dynamic_rotate %543 by %c242_i32_183 dim 1 : vector<16x256xf32>, i32 -> vector<16x256xf32>
    %cst_184 = arith.constant 0.000000e+00 : f32
    %622 = vector.shape_cast %620 : vector<1x256xi1> to vector<1x256xi1>
    %623 = vector.broadcast %622 : vector<1x256xi1> to vector<16x256xi1>
    %624 = vector.broadcast %cst_184 : f32 to vector<16x256xf32>
    %625 = arith.select %623, %621, %624 : vector<16x256xi1>, vector<16x256xf32>
    %626 = vector.extract_strided_slice %540 {offsets = [0, 15], sizes = [16, 1], strides = [1, 1]} : vector<16x25xf32> to vector<16x1xf32>
    %627 = vector.broadcast %626 : vector<16x1xf32> to vector<16x256xf32>
    %628 = arith.mulf %625, %627 : vector<16x256xf32>
    %629 = arith.addf %610, %628 : vector<16x256xf32>
    %c2_i32_185 = arith.constant 2 : i32
    %630 = vector.broadcast %c2_i32_185 : i32 to vector<1x256xi32>
    %631 = arith.addi %2, %630 : vector<1x256xi32>
    %c0_i32_186 = arith.constant 0 : i32
    %632 = vector.broadcast %c0_i32_186 : i32 to vector<1x256xi32>
    %633 = arith.cmpi sge, %631, %632 : vector<1x256xi32>
    %634 = arith.andi %553, %633 : vector<1x256xi1>
    %c2_i32_187 = arith.constant 2 : i32
    %635 = vector.broadcast %c2_i32_187 : i32 to vector<1x256xi32>
    %636 = arith.addi %2, %635 : vector<1x256xi32>
    %c16_i32_188 = arith.constant 16 : i32
    %637 = vector.broadcast %c16_i32_188 : i32 to vector<1x256xi32>
    %638 = arith.cmpi slt, %636, %637 : vector<1x256xi32>
    %639 = arith.andi %634, %638 : vector<1x256xi1>
    %c226_i32_189 = arith.constant 226 : i32
    %640 = tpu.dynamic_rotate %543 by %c226_i32_189 dim 1 : vector<16x256xf32>, i32 -> vector<16x256xf32>
    %cst_190 = arith.constant 0.000000e+00 : f32
    %641 = vector.shape_cast %639 : vector<1x256xi1> to vector<1x256xi1>
    %642 = vector.broadcast %641 : vector<1x256xi1> to vector<16x256xi1>
    %643 = vector.broadcast %cst_190 : f32 to vector<16x256xf32>
    %644 = arith.select %642, %640, %643 : vector<16x256xi1>, vector<16x256xf32>
    %645 = vector.extract_strided_slice %540 {offsets = [0, 20], sizes = [16, 1], strides = [1, 1]} : vector<16x25xf32> to vector<16x1xf32>
    %646 = vector.broadcast %645 : vector<16x1xf32> to vector<16x256xf32>
    %647 = arith.mulf %644, %646 : vector<16x256xf32>
    %648 = arith.addf %629, %647 : vector<16x256xf32>
    %c-1_i32_191 = arith.constant -1 : i32
    %649 = vector.broadcast %c-1_i32_191 : i32 to vector<1x256xi32>
    %650 = arith.addi %3, %649 : vector<1x256xi32>
    %c0_i32_192 = arith.constant 0 : i32
    %651 = vector.broadcast %c0_i32_192 : i32 to vector<1x256xi32>
    %652 = arith.cmpi sge, %650, %651 : vector<1x256xi32>
    %c-1_i32_193 = arith.constant -1 : i32
    %653 = vector.broadcast %c-1_i32_193 : i32 to vector<1x256xi32>
    %654 = arith.addi %3, %653 : vector<1x256xi32>
    %c16_i32_194 = arith.constant 16 : i32
    %655 = vector.broadcast %c16_i32_194 : i32 to vector<1x256xi32>
    %656 = arith.cmpi slt, %654, %655 : vector<1x256xi32>
    %657 = arith.andi %652, %656 : vector<1x256xi1>
    %c-2_i32_195 = arith.constant -2 : i32
    %658 = vector.broadcast %c-2_i32_195 : i32 to vector<1x256xi32>
    %659 = arith.addi %2, %658 : vector<1x256xi32>
    %c0_i32_196 = arith.constant 0 : i32
    %660 = vector.broadcast %c0_i32_196 : i32 to vector<1x256xi32>
    %661 = arith.cmpi sge, %659, %660 : vector<1x256xi32>
    %662 = arith.andi %657, %661 : vector<1x256xi1>
    %c-2_i32_197 = arith.constant -2 : i32
    %663 = vector.broadcast %c-2_i32_197 : i32 to vector<1x256xi32>
    %664 = arith.addi %2, %663 : vector<1x256xi32>
    %c16_i32_198 = arith.constant 16 : i32
    %665 = vector.broadcast %c16_i32_198 : i32 to vector<1x256xi32>
    %666 = arith.cmpi slt, %664, %665 : vector<1x256xi32>
    %667 = arith.andi %662, %666 : vector<1x256xi1>
    %c33_i32_199 = arith.constant 33 : i32
    %668 = tpu.dynamic_rotate %543 by %c33_i32_199 dim 1 : vector<16x256xf32>, i32 -> vector<16x256xf32>
    %cst_200 = arith.constant 0.000000e+00 : f32
    %669 = vector.shape_cast %667 : vector<1x256xi1> to vector<1x256xi1>
    %670 = vector.broadcast %669 : vector<1x256xi1> to vector<16x256xi1>
    %671 = vector.broadcast %cst_200 : f32 to vector<16x256xf32>
    %672 = arith.select %670, %668, %671 : vector<16x256xi1>, vector<16x256xf32>
    %673 = vector.extract_strided_slice %540 {offsets = [0, 1], sizes = [16, 1], strides = [1, 1]} : vector<16x25xf32> to vector<16x1xf32>
    %674 = vector.broadcast %673 : vector<16x1xf32> to vector<16x256xf32>
    %675 = arith.mulf %672, %674 : vector<16x256xf32>
    %676 = arith.addf %648, %675 : vector<16x256xf32>
    %c-1_i32_201 = arith.constant -1 : i32
    %677 = vector.broadcast %c-1_i32_201 : i32 to vector<1x256xi32>
    %678 = arith.addi %2, %677 : vector<1x256xi32>
    %c0_i32_202 = arith.constant 0 : i32
    %679 = vector.broadcast %c0_i32_202 : i32 to vector<1x256xi32>
    %680 = arith.cmpi sge, %678, %679 : vector<1x256xi32>
    %681 = arith.andi %657, %680 : vector<1x256xi1>
    %c-1_i32_203 = arith.constant -1 : i32
    %682 = vector.broadcast %c-1_i32_203 : i32 to vector<1x256xi32>
    %683 = arith.addi %2, %682 : vector<1x256xi32>
    %c16_i32_204 = arith.constant 16 : i32
    %684 = vector.broadcast %c16_i32_204 : i32 to vector<1x256xi32>
    %685 = arith.cmpi slt, %683, %684 : vector<1x256xi32>
    %686 = arith.andi %681, %685 : vector<1x256xi1>
    %c17_i32_205 = arith.constant 17 : i32
    %687 = tpu.dynamic_rotate %543 by %c17_i32_205 dim 1 : vector<16x256xf32>, i32 -> vector<16x256xf32>
    %cst_206 = arith.constant 0.000000e+00 : f32
    %688 = vector.shape_cast %686 : vector<1x256xi1> to vector<1x256xi1>
    %689 = vector.broadcast %688 : vector<1x256xi1> to vector<16x256xi1>
    %690 = vector.broadcast %cst_206 : f32 to vector<16x256xf32>
    %691 = arith.select %689, %687, %690 : vector<16x256xi1>, vector<16x256xf32>
    %692 = vector.extract_strided_slice %540 {offsets = [0, 6], sizes = [16, 1], strides = [1, 1]} : vector<16x25xf32> to vector<16x1xf32>
    %693 = vector.broadcast %692 : vector<16x1xf32> to vector<16x256xf32>
    %694 = arith.mulf %691, %693 : vector<16x256xf32>
    %695 = arith.addf %676, %694 : vector<16x256xf32>
    %c0_i32_207 = arith.constant 0 : i32
    %696 = vector.broadcast %c0_i32_207 : i32 to vector<1x256xi32>
    %697 = arith.addi %2, %696 : vector<1x256xi32>
    %c0_i32_208 = arith.constant 0 : i32
    %698 = vector.broadcast %c0_i32_208 : i32 to vector<1x256xi32>
    %699 = arith.cmpi sge, %697, %698 : vector<1x256xi32>
    %700 = arith.andi %657, %699 : vector<1x256xi1>
    %c0_i32_209 = arith.constant 0 : i32
    %701 = vector.broadcast %c0_i32_209 : i32 to vector<1x256xi32>
    %702 = arith.addi %2, %701 : vector<1x256xi32>
    %c16_i32_210 = arith.constant 16 : i32
    %703 = vector.broadcast %c16_i32_210 : i32 to vector<1x256xi32>
    %704 = arith.cmpi slt, %702, %703 : vector<1x256xi32>
    %705 = arith.andi %700, %704 : vector<1x256xi1>
    %c1_i32_211 = arith.constant 1 : i32
    %706 = tpu.dynamic_rotate %543 by %c1_i32_211 dim 1 : vector<16x256xf32>, i32 -> vector<16x256xf32>
    %cst_212 = arith.constant 0.000000e+00 : f32
    %707 = vector.shape_cast %705 : vector<1x256xi1> to vector<1x256xi1>
    %708 = vector.broadcast %707 : vector<1x256xi1> to vector<16x256xi1>
    %709 = vector.broadcast %cst_212 : f32 to vector<16x256xf32>
    %710 = arith.select %708, %706, %709 : vector<16x256xi1>, vector<16x256xf32>
    %711 = vector.extract_strided_slice %540 {offsets = [0, 11], sizes = [16, 1], strides = [1, 1]} : vector<16x25xf32> to vector<16x1xf32>
    %712 = vector.broadcast %711 : vector<16x1xf32> to vector<16x256xf32>
    %713 = arith.mulf %710, %712 : vector<16x256xf32>
    %714 = arith.addf %695, %713 : vector<16x256xf32>
    %c1_i32_213 = arith.constant 1 : i32
    %715 = vector.broadcast %c1_i32_213 : i32 to vector<1x256xi32>
    %716 = arith.addi %2, %715 : vector<1x256xi32>
    %c0_i32_214 = arith.constant 0 : i32
    %717 = vector.broadcast %c0_i32_214 : i32 to vector<1x256xi32>
    %718 = arith.cmpi sge, %716, %717 : vector<1x256xi32>
    %719 = arith.andi %657, %718 : vector<1x256xi1>
    %c1_i32_215 = arith.constant 1 : i32
    %720 = vector.broadcast %c1_i32_215 : i32 to vector<1x256xi32>
    %721 = arith.addi %2, %720 : vector<1x256xi32>
    %c16_i32_216 = arith.constant 16 : i32
    %722 = vector.broadcast %c16_i32_216 : i32 to vector<1x256xi32>
    %723 = arith.cmpi slt, %721, %722 : vector<1x256xi32>
    %724 = arith.andi %719, %723 : vector<1x256xi1>
    %c241_i32_217 = arith.constant 241 : i32
    %725 = tpu.dynamic_rotate %543 by %c241_i32_217 dim 1 : vector<16x256xf32>, i32 -> vector<16x256xf32>
    %cst_218 = arith.constant 0.000000e+00 : f32
    %726 = vector.shape_cast %724 : vector<1x256xi1> to vector<1x256xi1>
    %727 = vector.broadcast %726 : vector<1x256xi1> to vector<16x256xi1>
    %728 = vector.broadcast %cst_218 : f32 to vector<16x256xf32>
    %729 = arith.select %727, %725, %728 : vector<16x256xi1>, vector<16x256xf32>
    %730 = vector.extract_strided_slice %540 {offsets = [0, 16], sizes = [16, 1], strides = [1, 1]} : vector<16x25xf32> to vector<16x1xf32>
    %731 = vector.broadcast %730 : vector<16x1xf32> to vector<16x256xf32>
    %732 = arith.mulf %729, %731 : vector<16x256xf32>
    %733 = arith.addf %714, %732 : vector<16x256xf32>
    %c2_i32_219 = arith.constant 2 : i32
    %734 = vector.broadcast %c2_i32_219 : i32 to vector<1x256xi32>
    %735 = arith.addi %2, %734 : vector<1x256xi32>
    %c0_i32_220 = arith.constant 0 : i32
    %736 = vector.broadcast %c0_i32_220 : i32 to vector<1x256xi32>
    %737 = arith.cmpi sge, %735, %736 : vector<1x256xi32>
    %738 = arith.andi %657, %737 : vector<1x256xi1>
    %c2_i32_221 = arith.constant 2 : i32
    %739 = vector.broadcast %c2_i32_221 : i32 to vector<1x256xi32>
    %740 = arith.addi %2, %739 : vector<1x256xi32>
    %c16_i32_222 = arith.constant 16 : i32
    %741 = vector.broadcast %c16_i32_222 : i32 to vector<1x256xi32>
    %742 = arith.cmpi slt, %740, %741 : vector<1x256xi32>
    %743 = arith.andi %738, %742 : vector<1x256xi1>
    %c225_i32_223 = arith.constant 225 : i32
    %744 = tpu.dynamic_rotate %543 by %c225_i32_223 dim 1 : vector<16x256xf32>, i32 -> vector<16x256xf32>
    %cst_224 = arith.constant 0.000000e+00 : f32
    %745 = vector.shape_cast %743 : vector<1x256xi1> to vector<1x256xi1>
    %746 = vector.broadcast %745 : vector<1x256xi1> to vector<16x256xi1>
    %747 = vector.broadcast %cst_224 : f32 to vector<16x256xf32>
    %748 = arith.select %746, %744, %747 : vector<16x256xi1>, vector<16x256xf32>
    %749 = vector.extract_strided_slice %540 {offsets = [0, 21], sizes = [16, 1], strides = [1, 1]} : vector<16x25xf32> to vector<16x1xf32>
    %750 = vector.broadcast %749 : vector<16x1xf32> to vector<16x256xf32>
    %751 = arith.mulf %748, %750 : vector<16x256xf32>
    %752 = arith.addf %733, %751 : vector<16x256xf32>
    %c0_i32_225 = arith.constant 0 : i32
    %753 = vector.broadcast %c0_i32_225 : i32 to vector<1x256xi32>
    %754 = arith.addi %3, %753 : vector<1x256xi32>
    %c0_i32_226 = arith.constant 0 : i32
    %755 = vector.broadcast %c0_i32_226 : i32 to vector<1x256xi32>
    %756 = arith.cmpi sge, %754, %755 : vector<1x256xi32>
    %c0_i32_227 = arith.constant 0 : i32
    %757 = vector.broadcast %c0_i32_227 : i32 to vector<1x256xi32>
    %758 = arith.addi %3, %757 : vector<1x256xi32>
    %c16_i32_228 = arith.constant 16 : i32
    %759 = vector.broadcast %c16_i32_228 : i32 to vector<1x256xi32>
    %760 = arith.cmpi slt, %758, %759 : vector<1x256xi32>
    %761 = arith.andi %756, %760 : vector<1x256xi1>
    %c-2_i32_229 = arith.constant -2 : i32
    %762 = vector.broadcast %c-2_i32_229 : i32 to vector<1x256xi32>
    %763 = arith.addi %2, %762 : vector<1x256xi32>
    %c0_i32_230 = arith.constant 0 : i32
    %764 = vector.broadcast %c0_i32_230 : i32 to vector<1x256xi32>
    %765 = arith.cmpi sge, %763, %764 : vector<1x256xi32>
    %766 = arith.andi %761, %765 : vector<1x256xi1>
    %c-2_i32_231 = arith.constant -2 : i32
    %767 = vector.broadcast %c-2_i32_231 : i32 to vector<1x256xi32>
    %768 = arith.addi %2, %767 : vector<1x256xi32>
    %c16_i32_232 = arith.constant 16 : i32
    %769 = vector.broadcast %c16_i32_232 : i32 to vector<1x256xi32>
    %770 = arith.cmpi slt, %768, %769 : vector<1x256xi32>
    %771 = arith.andi %766, %770 : vector<1x256xi1>
    %c32_i32_233 = arith.constant 32 : i32
    %772 = tpu.dynamic_rotate %543 by %c32_i32_233 dim 1 : vector<16x256xf32>, i32 -> vector<16x256xf32>
    %cst_234 = arith.constant 0.000000e+00 : f32
    %773 = vector.shape_cast %771 : vector<1x256xi1> to vector<1x256xi1>
    %774 = vector.broadcast %773 : vector<1x256xi1> to vector<16x256xi1>
    %775 = vector.broadcast %cst_234 : f32 to vector<16x256xf32>
    %776 = arith.select %774, %772, %775 : vector<16x256xi1>, vector<16x256xf32>
    %777 = vector.extract_strided_slice %540 {offsets = [0, 2], sizes = [16, 1], strides = [1, 1]} : vector<16x25xf32> to vector<16x1xf32>
    %778 = vector.broadcast %777 : vector<16x1xf32> to vector<16x256xf32>
    %779 = arith.mulf %776, %778 : vector<16x256xf32>
    %780 = arith.addf %752, %779 : vector<16x256xf32>
    %c-1_i32_235 = arith.constant -1 : i32
    %781 = vector.broadcast %c-1_i32_235 : i32 to vector<1x256xi32>
    %782 = arith.addi %2, %781 : vector<1x256xi32>
    %c0_i32_236 = arith.constant 0 : i32
    %783 = vector.broadcast %c0_i32_236 : i32 to vector<1x256xi32>
    %784 = arith.cmpi sge, %782, %783 : vector<1x256xi32>
    %785 = arith.andi %761, %784 : vector<1x256xi1>
    %c-1_i32_237 = arith.constant -1 : i32
    %786 = vector.broadcast %c-1_i32_237 : i32 to vector<1x256xi32>
    %787 = arith.addi %2, %786 : vector<1x256xi32>
    %c16_i32_238 = arith.constant 16 : i32
    %788 = vector.broadcast %c16_i32_238 : i32 to vector<1x256xi32>
    %789 = arith.cmpi slt, %787, %788 : vector<1x256xi32>
    %790 = arith.andi %785, %789 : vector<1x256xi1>
    %c16_i32_239 = arith.constant 16 : i32
    %791 = tpu.dynamic_rotate %543 by %c16_i32_239 dim 1 : vector<16x256xf32>, i32 -> vector<16x256xf32>
    %cst_240 = arith.constant 0.000000e+00 : f32
    %792 = vector.shape_cast %790 : vector<1x256xi1> to vector<1x256xi1>
    %793 = vector.broadcast %792 : vector<1x256xi1> to vector<16x256xi1>
    %794 = vector.broadcast %cst_240 : f32 to vector<16x256xf32>
    %795 = arith.select %793, %791, %794 : vector<16x256xi1>, vector<16x256xf32>
    %796 = vector.extract_strided_slice %540 {offsets = [0, 7], sizes = [16, 1], strides = [1, 1]} : vector<16x25xf32> to vector<16x1xf32>
    %797 = vector.broadcast %796 : vector<16x1xf32> to vector<16x256xf32>
    %798 = arith.mulf %795, %797 : vector<16x256xf32>
    %799 = arith.addf %780, %798 : vector<16x256xf32>
    %800 = vector.extract_strided_slice %540 {offsets = [0, 12], sizes = [16, 1], strides = [1, 1]} : vector<16x25xf32> to vector<16x1xf32>
    %801 = vector.broadcast %800 : vector<16x1xf32> to vector<16x256xf32>
    %802 = arith.mulf %543, %801 : vector<16x256xf32>
    %803 = arith.addf %799, %802 : vector<16x256xf32>
    %c1_i32_241 = arith.constant 1 : i32
    %804 = vector.broadcast %c1_i32_241 : i32 to vector<1x256xi32>
    %805 = arith.addi %2, %804 : vector<1x256xi32>
    %c0_i32_242 = arith.constant 0 : i32
    %806 = vector.broadcast %c0_i32_242 : i32 to vector<1x256xi32>
    %807 = arith.cmpi sge, %805, %806 : vector<1x256xi32>
    %808 = arith.andi %761, %807 : vector<1x256xi1>
    %c1_i32_243 = arith.constant 1 : i32
    %809 = vector.broadcast %c1_i32_243 : i32 to vector<1x256xi32>
    %810 = arith.addi %2, %809 : vector<1x256xi32>
    %c16_i32_244 = arith.constant 16 : i32
    %811 = vector.broadcast %c16_i32_244 : i32 to vector<1x256xi32>
    %812 = arith.cmpi slt, %810, %811 : vector<1x256xi32>
    %813 = arith.andi %808, %812 : vector<1x256xi1>
    %c240_i32_245 = arith.constant 240 : i32
    %814 = tpu.dynamic_rotate %543 by %c240_i32_245 dim 1 : vector<16x256xf32>, i32 -> vector<16x256xf32>
    %cst_246 = arith.constant 0.000000e+00 : f32
    %815 = vector.shape_cast %813 : vector<1x256xi1> to vector<1x256xi1>
    %816 = vector.broadcast %815 : vector<1x256xi1> to vector<16x256xi1>
    %817 = vector.broadcast %cst_246 : f32 to vector<16x256xf32>
    %818 = arith.select %816, %814, %817 : vector<16x256xi1>, vector<16x256xf32>
    %819 = vector.extract_strided_slice %540 {offsets = [0, 17], sizes = [16, 1], strides = [1, 1]} : vector<16x25xf32> to vector<16x1xf32>
    %820 = vector.broadcast %819 : vector<16x1xf32> to vector<16x256xf32>
    %821 = arith.mulf %818, %820 : vector<16x256xf32>
    %822 = arith.addf %803, %821 : vector<16x256xf32>
    %c2_i32_247 = arith.constant 2 : i32
    %823 = vector.broadcast %c2_i32_247 : i32 to vector<1x256xi32>
    %824 = arith.addi %2, %823 : vector<1x256xi32>
    %c0_i32_248 = arith.constant 0 : i32
    %825 = vector.broadcast %c0_i32_248 : i32 to vector<1x256xi32>
    %826 = arith.cmpi sge, %824, %825 : vector<1x256xi32>
    %827 = arith.andi %761, %826 : vector<1x256xi1>
    %c2_i32_249 = arith.constant 2 : i32
    %828 = vector.broadcast %c2_i32_249 : i32 to vector<1x256xi32>
    %829 = arith.addi %2, %828 : vector<1x256xi32>
    %c16_i32_250 = arith.constant 16 : i32
    %830 = vector.broadcast %c16_i32_250 : i32 to vector<1x256xi32>
    %831 = arith.cmpi slt, %829, %830 : vector<1x256xi32>
    %832 = arith.andi %827, %831 : vector<1x256xi1>
    %c224_i32_251 = arith.constant 224 : i32
    %833 = tpu.dynamic_rotate %543 by %c224_i32_251 dim 1 : vector<16x256xf32>, i32 -> vector<16x256xf32>
    %cst_252 = arith.constant 0.000000e+00 : f32
    %834 = vector.shape_cast %832 : vector<1x256xi1> to vector<1x256xi1>
    %835 = vector.broadcast %834 : vector<1x256xi1> to vector<16x256xi1>
    %836 = vector.broadcast %cst_252 : f32 to vector<16x256xf32>
    %837 = arith.select %835, %833, %836 : vector<16x256xi1>, vector<16x256xf32>
    %838 = vector.extract_strided_slice %540 {offsets = [0, 22], sizes = [16, 1], strides = [1, 1]} : vector<16x25xf32> to vector<16x1xf32>
    %839 = vector.broadcast %838 : vector<16x1xf32> to vector<16x256xf32>
    %840 = arith.mulf %837, %839 : vector<16x256xf32>
    %841 = arith.addf %822, %840 : vector<16x256xf32>
    %c1_i32_253 = arith.constant 1 : i32
    %842 = vector.broadcast %c1_i32_253 : i32 to vector<1x256xi32>
    %843 = arith.addi %3, %842 : vector<1x256xi32>
    %c0_i32_254 = arith.constant 0 : i32
    %844 = vector.broadcast %c0_i32_254 : i32 to vector<1x256xi32>
    %845 = arith.cmpi sge, %843, %844 : vector<1x256xi32>
    %c1_i32_255 = arith.constant 1 : i32
    %846 = vector.broadcast %c1_i32_255 : i32 to vector<1x256xi32>
    %847 = arith.addi %3, %846 : vector<1x256xi32>
    %c16_i32_256 = arith.constant 16 : i32
    %848 = vector.broadcast %c16_i32_256 : i32 to vector<1x256xi32>
    %849 = arith.cmpi slt, %847, %848 : vector<1x256xi32>
    %850 = arith.andi %845, %849 : vector<1x256xi1>
    %c-2_i32_257 = arith.constant -2 : i32
    %851 = vector.broadcast %c-2_i32_257 : i32 to vector<1x256xi32>
    %852 = arith.addi %2, %851 : vector<1x256xi32>
    %c0_i32_258 = arith.constant 0 : i32
    %853 = vector.broadcast %c0_i32_258 : i32 to vector<1x256xi32>
    %854 = arith.cmpi sge, %852, %853 : vector<1x256xi32>
    %855 = arith.andi %850, %854 : vector<1x256xi1>
    %c-2_i32_259 = arith.constant -2 : i32
    %856 = vector.broadcast %c-2_i32_259 : i32 to vector<1x256xi32>
    %857 = arith.addi %2, %856 : vector<1x256xi32>
    %c16_i32_260 = arith.constant 16 : i32
    %858 = vector.broadcast %c16_i32_260 : i32 to vector<1x256xi32>
    %859 = arith.cmpi slt, %857, %858 : vector<1x256xi32>
    %860 = arith.andi %855, %859 : vector<1x256xi1>
    %c31_i32_261 = arith.constant 31 : i32
    %861 = tpu.dynamic_rotate %543 by %c31_i32_261 dim 1 : vector<16x256xf32>, i32 -> vector<16x256xf32>
    %cst_262 = arith.constant 0.000000e+00 : f32
    %862 = vector.shape_cast %860 : vector<1x256xi1> to vector<1x256xi1>
    %863 = vector.broadcast %862 : vector<1x256xi1> to vector<16x256xi1>
    %864 = vector.broadcast %cst_262 : f32 to vector<16x256xf32>
    %865 = arith.select %863, %861, %864 : vector<16x256xi1>, vector<16x256xf32>
    %866 = vector.extract_strided_slice %540 {offsets = [0, 3], sizes = [16, 1], strides = [1, 1]} : vector<16x25xf32> to vector<16x1xf32>
    %867 = vector.broadcast %866 : vector<16x1xf32> to vector<16x256xf32>
    %868 = arith.mulf %865, %867 : vector<16x256xf32>
    %869 = arith.addf %841, %868 : vector<16x256xf32>
    %c-1_i32_263 = arith.constant -1 : i32
    %870 = vector.broadcast %c-1_i32_263 : i32 to vector<1x256xi32>
    %871 = arith.addi %2, %870 : vector<1x256xi32>
    %c0_i32_264 = arith.constant 0 : i32
    %872 = vector.broadcast %c0_i32_264 : i32 to vector<1x256xi32>
    %873 = arith.cmpi sge, %871, %872 : vector<1x256xi32>
    %874 = arith.andi %850, %873 : vector<1x256xi1>
    %c-1_i32_265 = arith.constant -1 : i32
    %875 = vector.broadcast %c-1_i32_265 : i32 to vector<1x256xi32>
    %876 = arith.addi %2, %875 : vector<1x256xi32>
    %c16_i32_266 = arith.constant 16 : i32
    %877 = vector.broadcast %c16_i32_266 : i32 to vector<1x256xi32>
    %878 = arith.cmpi slt, %876, %877 : vector<1x256xi32>
    %879 = arith.andi %874, %878 : vector<1x256xi1>
    %c15_i32_267 = arith.constant 15 : i32
    %880 = tpu.dynamic_rotate %543 by %c15_i32_267 dim 1 : vector<16x256xf32>, i32 -> vector<16x256xf32>
    %cst_268 = arith.constant 0.000000e+00 : f32
    %881 = vector.shape_cast %879 : vector<1x256xi1> to vector<1x256xi1>
    %882 = vector.broadcast %881 : vector<1x256xi1> to vector<16x256xi1>
    %883 = vector.broadcast %cst_268 : f32 to vector<16x256xf32>
    %884 = arith.select %882, %880, %883 : vector<16x256xi1>, vector<16x256xf32>
    %885 = vector.extract_strided_slice %540 {offsets = [0, 8], sizes = [16, 1], strides = [1, 1]} : vector<16x25xf32> to vector<16x1xf32>
    %886 = vector.broadcast %885 : vector<16x1xf32> to vector<16x256xf32>
    %887 = arith.mulf %884, %886 : vector<16x256xf32>
    %888 = arith.addf %869, %887 : vector<16x256xf32>
    %c0_i32_269 = arith.constant 0 : i32
    %889 = vector.broadcast %c0_i32_269 : i32 to vector<1x256xi32>
    %890 = arith.addi %2, %889 : vector<1x256xi32>
    %c0_i32_270 = arith.constant 0 : i32
    %891 = vector.broadcast %c0_i32_270 : i32 to vector<1x256xi32>
    %892 = arith.cmpi sge, %890, %891 : vector<1x256xi32>
    %893 = arith.andi %850, %892 : vector<1x256xi1>
    %c0_i32_271 = arith.constant 0 : i32
    %894 = vector.broadcast %c0_i32_271 : i32 to vector<1x256xi32>
    %895 = arith.addi %2, %894 : vector<1x256xi32>
    %c16_i32_272 = arith.constant 16 : i32
    %896 = vector.broadcast %c16_i32_272 : i32 to vector<1x256xi32>
    %897 = arith.cmpi slt, %895, %896 : vector<1x256xi32>
    %898 = arith.andi %893, %897 : vector<1x256xi1>
    %c255_i32_273 = arith.constant 255 : i32
    %899 = tpu.dynamic_rotate %543 by %c255_i32_273 dim 1 : vector<16x256xf32>, i32 -> vector<16x256xf32>
    %cst_274 = arith.constant 0.000000e+00 : f32
    %900 = vector.shape_cast %898 : vector<1x256xi1> to vector<1x256xi1>
    %901 = vector.broadcast %900 : vector<1x256xi1> to vector<16x256xi1>
    %902 = vector.broadcast %cst_274 : f32 to vector<16x256xf32>
    %903 = arith.select %901, %899, %902 : vector<16x256xi1>, vector<16x256xf32>
    %904 = vector.extract_strided_slice %540 {offsets = [0, 13], sizes = [16, 1], strides = [1, 1]} : vector<16x25xf32> to vector<16x1xf32>
    %905 = vector.broadcast %904 : vector<16x1xf32> to vector<16x256xf32>
    %906 = arith.mulf %903, %905 : vector<16x256xf32>
    %907 = arith.addf %888, %906 : vector<16x256xf32>
    %c1_i32_275 = arith.constant 1 : i32
    %908 = vector.broadcast %c1_i32_275 : i32 to vector<1x256xi32>
    %909 = arith.addi %2, %908 : vector<1x256xi32>
    %c0_i32_276 = arith.constant 0 : i32
    %910 = vector.broadcast %c0_i32_276 : i32 to vector<1x256xi32>
    %911 = arith.cmpi sge, %909, %910 : vector<1x256xi32>
    %912 = arith.andi %850, %911 : vector<1x256xi1>
    %c1_i32_277 = arith.constant 1 : i32
    %913 = vector.broadcast %c1_i32_277 : i32 to vector<1x256xi32>
    %914 = arith.addi %2, %913 : vector<1x256xi32>
    %c16_i32_278 = arith.constant 16 : i32
    %915 = vector.broadcast %c16_i32_278 : i32 to vector<1x256xi32>
    %916 = arith.cmpi slt, %914, %915 : vector<1x256xi32>
    %917 = arith.andi %912, %916 : vector<1x256xi1>
    %c239_i32_279 = arith.constant 239 : i32
    %918 = tpu.dynamic_rotate %543 by %c239_i32_279 dim 1 : vector<16x256xf32>, i32 -> vector<16x256xf32>
    %cst_280 = arith.constant 0.000000e+00 : f32
    %919 = vector.shape_cast %917 : vector<1x256xi1> to vector<1x256xi1>
    %920 = vector.broadcast %919 : vector<1x256xi1> to vector<16x256xi1>
    %921 = vector.broadcast %cst_280 : f32 to vector<16x256xf32>
    %922 = arith.select %920, %918, %921 : vector<16x256xi1>, vector<16x256xf32>
    %923 = vector.extract_strided_slice %540 {offsets = [0, 18], sizes = [16, 1], strides = [1, 1]} : vector<16x25xf32> to vector<16x1xf32>
    %924 = vector.broadcast %923 : vector<16x1xf32> to vector<16x256xf32>
    %925 = arith.mulf %922, %924 : vector<16x256xf32>
    %926 = arith.addf %907, %925 : vector<16x256xf32>
    %c2_i32_281 = arith.constant 2 : i32
    %927 = vector.broadcast %c2_i32_281 : i32 to vector<1x256xi32>
    %928 = arith.addi %2, %927 : vector<1x256xi32>
    %c0_i32_282 = arith.constant 0 : i32
    %929 = vector.broadcast %c0_i32_282 : i32 to vector<1x256xi32>
    %930 = arith.cmpi sge, %928, %929 : vector<1x256xi32>
    %931 = arith.andi %850, %930 : vector<1x256xi1>
    %c2_i32_283 = arith.constant 2 : i32
    %932 = vector.broadcast %c2_i32_283 : i32 to vector<1x256xi32>
    %933 = arith.addi %2, %932 : vector<1x256xi32>
    %c16_i32_284 = arith.constant 16 : i32
    %934 = vector.broadcast %c16_i32_284 : i32 to vector<1x256xi32>
    %935 = arith.cmpi slt, %933, %934 : vector<1x256xi32>
    %936 = arith.andi %931, %935 : vector<1x256xi1>
    %c223_i32_285 = arith.constant 223 : i32
    %937 = tpu.dynamic_rotate %543 by %c223_i32_285 dim 1 : vector<16x256xf32>, i32 -> vector<16x256xf32>
    %cst_286 = arith.constant 0.000000e+00 : f32
    %938 = vector.shape_cast %936 : vector<1x256xi1> to vector<1x256xi1>
    %939 = vector.broadcast %938 : vector<1x256xi1> to vector<16x256xi1>
    %940 = vector.broadcast %cst_286 : f32 to vector<16x256xf32>
    %941 = arith.select %939, %937, %940 : vector<16x256xi1>, vector<16x256xf32>
    %942 = vector.extract_strided_slice %540 {offsets = [0, 23], sizes = [16, 1], strides = [1, 1]} : vector<16x25xf32> to vector<16x1xf32>
    %943 = vector.broadcast %942 : vector<16x1xf32> to vector<16x256xf32>
    %944 = arith.mulf %941, %943 : vector<16x256xf32>
    %945 = arith.addf %926, %944 : vector<16x256xf32>
    %c2_i32_287 = arith.constant 2 : i32
    %946 = vector.broadcast %c2_i32_287 : i32 to vector<1x256xi32>
    %947 = arith.addi %3, %946 : vector<1x256xi32>
    %c0_i32_288 = arith.constant 0 : i32
    %948 = vector.broadcast %c0_i32_288 : i32 to vector<1x256xi32>
    %949 = arith.cmpi sge, %947, %948 : vector<1x256xi32>
    %c2_i32_289 = arith.constant 2 : i32
    %950 = vector.broadcast %c2_i32_289 : i32 to vector<1x256xi32>
    %951 = arith.addi %3, %950 : vector<1x256xi32>
    %c16_i32_290 = arith.constant 16 : i32
    %952 = vector.broadcast %c16_i32_290 : i32 to vector<1x256xi32>
    %953 = arith.cmpi slt, %951, %952 : vector<1x256xi32>
    %954 = arith.andi %949, %953 : vector<1x256xi1>
    %c-2_i32_291 = arith.constant -2 : i32
    %955 = vector.broadcast %c-2_i32_291 : i32 to vector<1x256xi32>
    %956 = arith.addi %2, %955 : vector<1x256xi32>
    %c0_i32_292 = arith.constant 0 : i32
    %957 = vector.broadcast %c0_i32_292 : i32 to vector<1x256xi32>
    %958 = arith.cmpi sge, %956, %957 : vector<1x256xi32>
    %959 = arith.andi %954, %958 : vector<1x256xi1>
    %c-2_i32_293 = arith.constant -2 : i32
    %960 = vector.broadcast %c-2_i32_293 : i32 to vector<1x256xi32>
    %961 = arith.addi %2, %960 : vector<1x256xi32>
    %c16_i32_294 = arith.constant 16 : i32
    %962 = vector.broadcast %c16_i32_294 : i32 to vector<1x256xi32>
    %963 = arith.cmpi slt, %961, %962 : vector<1x256xi32>
    %964 = arith.andi %959, %963 : vector<1x256xi1>
    %c30_i32_295 = arith.constant 30 : i32
    %965 = tpu.dynamic_rotate %543 by %c30_i32_295 dim 1 : vector<16x256xf32>, i32 -> vector<16x256xf32>
    %cst_296 = arith.constant 0.000000e+00 : f32
    %966 = vector.shape_cast %964 : vector<1x256xi1> to vector<1x256xi1>
    %967 = vector.broadcast %966 : vector<1x256xi1> to vector<16x256xi1>
    %968 = vector.broadcast %cst_296 : f32 to vector<16x256xf32>
    %969 = arith.select %967, %965, %968 : vector<16x256xi1>, vector<16x256xf32>
    %970 = vector.extract_strided_slice %540 {offsets = [0, 4], sizes = [16, 1], strides = [1, 1]} : vector<16x25xf32> to vector<16x1xf32>
    %971 = vector.broadcast %970 : vector<16x1xf32> to vector<16x256xf32>
    %972 = arith.mulf %969, %971 : vector<16x256xf32>
    %973 = arith.addf %945, %972 : vector<16x256xf32>
    %c-1_i32_297 = arith.constant -1 : i32
    %974 = vector.broadcast %c-1_i32_297 : i32 to vector<1x256xi32>
    %975 = arith.addi %2, %974 : vector<1x256xi32>
    %c0_i32_298 = arith.constant 0 : i32
    %976 = vector.broadcast %c0_i32_298 : i32 to vector<1x256xi32>
    %977 = arith.cmpi sge, %975, %976 : vector<1x256xi32>
    %978 = arith.andi %954, %977 : vector<1x256xi1>
    %c-1_i32_299 = arith.constant -1 : i32
    %979 = vector.broadcast %c-1_i32_299 : i32 to vector<1x256xi32>
    %980 = arith.addi %2, %979 : vector<1x256xi32>
    %c16_i32_300 = arith.constant 16 : i32
    %981 = vector.broadcast %c16_i32_300 : i32 to vector<1x256xi32>
    %982 = arith.cmpi slt, %980, %981 : vector<1x256xi32>
    %983 = arith.andi %978, %982 : vector<1x256xi1>
    %c14_i32_301 = arith.constant 14 : i32
    %984 = tpu.dynamic_rotate %543 by %c14_i32_301 dim 1 : vector<16x256xf32>, i32 -> vector<16x256xf32>
    %cst_302 = arith.constant 0.000000e+00 : f32
    %985 = vector.shape_cast %983 : vector<1x256xi1> to vector<1x256xi1>
    %986 = vector.broadcast %985 : vector<1x256xi1> to vector<16x256xi1>
    %987 = vector.broadcast %cst_302 : f32 to vector<16x256xf32>
    %988 = arith.select %986, %984, %987 : vector<16x256xi1>, vector<16x256xf32>
    %989 = vector.extract_strided_slice %540 {offsets = [0, 9], sizes = [16, 1], strides = [1, 1]} : vector<16x25xf32> to vector<16x1xf32>
    %990 = vector.broadcast %989 : vector<16x1xf32> to vector<16x256xf32>
    %991 = arith.mulf %988, %990 : vector<16x256xf32>
    %992 = arith.addf %973, %991 : vector<16x256xf32>
    %c0_i32_303 = arith.constant 0 : i32
    %993 = vector.broadcast %c0_i32_303 : i32 to vector<1x256xi32>
    %994 = arith.addi %2, %993 : vector<1x256xi32>
    %c0_i32_304 = arith.constant 0 : i32
    %995 = vector.broadcast %c0_i32_304 : i32 to vector<1x256xi32>
    %996 = arith.cmpi sge, %994, %995 : vector<1x256xi32>
    %997 = arith.andi %954, %996 : vector<1x256xi1>
    %c0_i32_305 = arith.constant 0 : i32
    %998 = vector.broadcast %c0_i32_305 : i32 to vector<1x256xi32>
    %999 = arith.addi %2, %998 : vector<1x256xi32>
    %c16_i32_306 = arith.constant 16 : i32
    %1000 = vector.broadcast %c16_i32_306 : i32 to vector<1x256xi32>
    %1001 = arith.cmpi slt, %999, %1000 : vector<1x256xi32>
    %1002 = arith.andi %997, %1001 : vector<1x256xi1>
    %c254_i32_307 = arith.constant 254 : i32
    %1003 = tpu.dynamic_rotate %543 by %c254_i32_307 dim 1 : vector<16x256xf32>, i32 -> vector<16x256xf32>
    %cst_308 = arith.constant 0.000000e+00 : f32
    %1004 = vector.shape_cast %1002 : vector<1x256xi1> to vector<1x256xi1>
    %1005 = vector.broadcast %1004 : vector<1x256xi1> to vector<16x256xi1>
    %1006 = vector.broadcast %cst_308 : f32 to vector<16x256xf32>
    %1007 = arith.select %1005, %1003, %1006 : vector<16x256xi1>, vector<16x256xf32>
    %1008 = vector.extract_strided_slice %540 {offsets = [0, 14], sizes = [16, 1], strides = [1, 1]} : vector<16x25xf32> to vector<16x1xf32>
    %1009 = vector.broadcast %1008 : vector<16x1xf32> to vector<16x256xf32>
    %1010 = arith.mulf %1007, %1009 : vector<16x256xf32>
    %1011 = arith.addf %992, %1010 : vector<16x256xf32>
    %c1_i32_309 = arith.constant 1 : i32
    %1012 = vector.broadcast %c1_i32_309 : i32 to vector<1x256xi32>
    %1013 = arith.addi %2, %1012 : vector<1x256xi32>
    %c0_i32_310 = arith.constant 0 : i32
    %1014 = vector.broadcast %c0_i32_310 : i32 to vector<1x256xi32>
    %1015 = arith.cmpi sge, %1013, %1014 : vector<1x256xi32>
    %1016 = arith.andi %954, %1015 : vector<1x256xi1>
    %c1_i32_311 = arith.constant 1 : i32
    %1017 = vector.broadcast %c1_i32_311 : i32 to vector<1x256xi32>
    %1018 = arith.addi %2, %1017 : vector<1x256xi32>
    %c16_i32_312 = arith.constant 16 : i32
    %1019 = vector.broadcast %c16_i32_312 : i32 to vector<1x256xi32>
    %1020 = arith.cmpi slt, %1018, %1019 : vector<1x256xi32>
    %1021 = arith.andi %1016, %1020 : vector<1x256xi1>
    %c238_i32_313 = arith.constant 238 : i32
    %1022 = tpu.dynamic_rotate %543 by %c238_i32_313 dim 1 : vector<16x256xf32>, i32 -> vector<16x256xf32>
    %cst_314 = arith.constant 0.000000e+00 : f32
    %1023 = vector.shape_cast %1021 : vector<1x256xi1> to vector<1x256xi1>
    %1024 = vector.broadcast %1023 : vector<1x256xi1> to vector<16x256xi1>
    %1025 = vector.broadcast %cst_314 : f32 to vector<16x256xf32>
    %1026 = arith.select %1024, %1022, %1025 : vector<16x256xi1>, vector<16x256xf32>
    %1027 = vector.extract_strided_slice %540 {offsets = [0, 19], sizes = [16, 1], strides = [1, 1]} : vector<16x25xf32> to vector<16x1xf32>
    %1028 = vector.broadcast %1027 : vector<16x1xf32> to vector<16x256xf32>
    %1029 = arith.mulf %1026, %1028 : vector<16x256xf32>
    %1030 = arith.addf %1011, %1029 : vector<16x256xf32>
    %c2_i32_315 = arith.constant 2 : i32
    %1031 = vector.broadcast %c2_i32_315 : i32 to vector<1x256xi32>
    %1032 = arith.addi %2, %1031 : vector<1x256xi32>
    %c0_i32_316 = arith.constant 0 : i32
    %1033 = vector.broadcast %c0_i32_316 : i32 to vector<1x256xi32>
    %1034 = arith.cmpi sge, %1032, %1033 : vector<1x256xi32>
    %1035 = arith.andi %954, %1034 : vector<1x256xi1>
    %c2_i32_317 = arith.constant 2 : i32
    %1036 = vector.broadcast %c2_i32_317 : i32 to vector<1x256xi32>
    %1037 = arith.addi %2, %1036 : vector<1x256xi32>
    %c16_i32_318 = arith.constant 16 : i32
    %1038 = vector.broadcast %c16_i32_318 : i32 to vector<1x256xi32>
    %1039 = arith.cmpi slt, %1037, %1038 : vector<1x256xi32>
    %1040 = arith.andi %1035, %1039 : vector<1x256xi1>
    %c222_i32_319 = arith.constant 222 : i32
    %1041 = tpu.dynamic_rotate %543 by %c222_i32_319 dim 1 : vector<16x256xf32>, i32 -> vector<16x256xf32>
    %cst_320 = arith.constant 0.000000e+00 : f32
    %1042 = vector.shape_cast %1040 : vector<1x256xi1> to vector<1x256xi1>
    %1043 = vector.broadcast %1042 : vector<1x256xi1> to vector<16x256xi1>
    %1044 = vector.broadcast %cst_320 : f32 to vector<16x256xf32>
    %1045 = arith.select %1043, %1041, %1044 : vector<16x256xi1>, vector<16x256xf32>
    %1046 = vector.extract_strided_slice %540 {offsets = [0, 24], sizes = [16, 1], strides = [1, 1]} : vector<16x25xf32> to vector<16x1xf32>
    %1047 = vector.broadcast %1046 : vector<16x1xf32> to vector<16x256xf32>
    %1048 = arith.mulf %1045, %1047 : vector<16x256xf32>
    %1049 = arith.addf %1030, %1048 : vector<16x256xf32>
    %1050 = vector.broadcast %539 : vector<16x1xf32> to vector<16x256xf32>
    %1051 = arith.addf %1049, %1050 : vector<16x256xf32>
    %1052 = arith.addf %1051, %1 : vector<16x256xf32>
    %c0_321 = arith.constant 0 : index
    %c0_322 = arith.constant 0 : index
    %c0_323 = arith.constant 0 : index
    %1053 = vector.load %arg5[%c0_321, %c0_322, %c0_323] : memref<1x16x256xf32, #tpu.memory_space<vmem>>, vector<1x16x256xf32>
    %1054 = vector.shape_cast %1053 : vector<1x16x256xf32> to vector<16x256xf32>
    %1055 = vector.shape_cast %1052 : vector<16x256xf32> to vector<1x16x256xf32>
    tpu.vector_store %arg5[%c0_321, %c0_322, %c0_323], %1055 {strides = array<i32>} : memref<1x16x256xf32, #tpu.memory_space<vmem>>, vector<1x16x256xf32>,
    return
  }
  func.func @transform_0(%arg0: i32) -> (i32, i32, i32) {
    %c0_i32 = arith.constant 0 : i32
    %c0_i32_0 = arith.constant 0 : i32
    %c0_i32_1 = arith.constant 0 : i32
    return %arg0, %c0_i32, %c0_i32_0 : i32, i32, i32
  }
  func.func @transform_1(%arg0: i32) -> (i32, i32) {
    %c0_i32 = arith.constant 0 : i32
    %c0_i32_0 = arith.constant 0 : i32
    %c0_i32_1 = arith.constant 0 : i32
    return %c0_i32, %c0_i32_0 : i32, i32
  }
  func.func @transform_2(%arg0: i32) -> (i32, i32) {
    %c0_i32 = arith.constant 0 : i32
    %c0_i32_0 = arith.constant 0 : i32
    %c0_i32_1 = arith.constant 0 : i32
    return %c0_i32, %c0_i32_0 : i32, i32
  }
  func.func @transform_3(%arg0: i32) -> (i32, i32) {
    %c0_i32 = arith.constant 0 : i32
    %c0_i32_0 = arith.constant 0 : i32
    %c0_i32_1 = arith.constant 0 : i32
    return %c0_i32, %c0_i32_0 : i32, i32
  }
  func.func @transform_4(%arg0: i32) -> (i32, i32, i32) {
    %c0_i32 = arith.constant 0 : i32
    %c0_i32_0 = arith.constant 0 : i32
    %c0_i32_1 = arith.constant 0 : i32
    return %arg0, %c0_i32, %c0_i32_0 : i32, i32, i32
  }
}

</mosaic_0001>

<llo_original>
// kernel: tpu_custom_call.1
$region0: #{tpu_custom_call.1}
  #allocation0 [shape = 'u32[]', space=smem, size = 0x4, offset = 0x4, fixed_abs, tag = 'smem constant byte address 0x4 - core index']
  #allocation1 [shape = 'u32[144,128]{1,0:T(1,128)}', space=vmem, size = 0x12000, scoped, tag = 'internal scratch']
  %s0 = inlined_call_operand.hbm [shape: f32[2,16,256], index: 0, kind: input, shape index: {}]
  %s1 = inlined_call_operand.hbm [shape: s32[2,256], index: 1, kind: input, shape index: {}]
  %s2 = inlined_call_operand.hbm [shape: f32[8,43], index: 2, kind: input, shape index: {}]
  %s3 = inlined_call_operand.hbm [shape: f32[16,35], index: 3, kind: input, shape index: {}]
  %s4 = inlined_call_operand.hbm [shape: f32[2,16,256], index: 4, kind: output, shape index: {}]
  %s5 = sld [smem:[#allocation0]]
  $region65: #{tpu_custom_call.1} parent=0
    _
  %s7 = ssub.s32 1, %s5
  %s8 = scalar_select 0, %s7, %s5
  $region1: #{tpu_custom_call.1} parent=0
    #allocation2 [shape = 'u8[32768]{0}', space=vmem, size = 0x8000, scoped, tag = 'input window, operand 0']
    #allocation3 [shape = 's32[2]{0}', space=sflag, size = 0x8, scoped, tag = 'scoped memory for tpu_custom_call.1']
    #allocation4 [shape = 's32[2]{0}', space=sflag, size = 0x8, scoped, tag = 'scoped memory for tpu_custom_call.1']
    #allocation5 [shape = 'u8[2048]{0}', space=vmem, size = 0x800, scoped, tag = 'input window, operand 1, single buffered']
    #allocation6 [shape = 's32[1]{0}', space=sflag, size = 0x4, scoped, tag = 'scoped memory for tpu_custom_call.1']
    #allocation7 [shape = 'u8[4096]{0}', space=vmem, size = 0x1000, scoped, tag = 'input window, operand 2, single buffered']
    #allocation8 [shape = 'u8[8192]{0}', space=vmem, size = 0x2000, scoped, tag = 'input window, operand 3, single buffered']
    #allocation9 [shape = 's32[1]{0}', space=sflag, size = 0x4, scoped, tag = 'scoped memory for tpu_custom_call.1']
    #allocation10 [shape = 'u8[32768]{0}', space=vmem, size = 0x8000, scoped, tag = 'output window, operand 0']
    %9 = vsyncpa [#allocation3], 0
    %s10 = scalar_lea.sflag [#allocation3], 1
    %11 = vsyncpa %s10, 0
    %12 = vsyncpa [#allocation6], 0
    %13 = vsyncpa [#allocation9], 0
    %14 = vsyncpa [#allocation4], 0
    %s15 = scalar_lea.sflag [#allocation4], 1
    %16 = vsyncpa %s15, 0
    loop: start=0, step=1, limit=4
    $region2: #{tpu_custom_call.1} parent=1 // loop_pre_header
      _
    $region3: #{tpu_custom_call.1} parent=1 // loop_header
      %s18 = sphi 0, %s22
      %p19 = scmp.ge.s32.totalorder %s18, 4
      %s28 = sphi 0, %s30
      %s31 = sphi 0, %s28
      %s32 = sphi 0, %s31
      %s48 = sphi 0, %s32
      %s52 = sphi 0, %s52
      %s54 = sphi 0, %s52
      %s55 = sphi 0, %s54
      %s69 = sphi 0, %s55
      %s73 = sphi 0, %s73
      %s75 = sphi 0, %s73
      %s76 = sphi 0, %s75
      %s90 = sphi 0, %s76
      %s94 = sphi 0, %s94
      %s96 = sphi 0, %s94
      %s97 = sphi 0, %s96
      %s111 = sphi 0, %s97
      %s117 = sphi 0, %s119
      %s120 = sphi 0, %s117
      %s121 = sphi 0, %s120
      %s137 = sphi 0, %s121
    $region4: #{tpu_custom_call.1} parent=1 // loop_header_branch
      %21 = sbr.rel (%p19) target = $region8
    $region5: #{tpu_custom_call.1} parent=1 // loop_body
      %s23 = ssub.s32 %s18, 1
      %s24 = ssub.s32 %s18, 2
      %s25 = sadd.s32 %s18, 1
      %s26 = ssub.s32 %s18, %s25
      %p27 = scmp.eq.s32.totalorder %s26, 0
      %s29 = sadd.s32 %s28, 1
      %s30 = scalar_select %p27, %s28, %s29
      %p33 = pneg %p27
      %p34 = scmp.eq.s32.totalorder %s18, 1
      %p35 = por %p33, %p34
      %p36 = scmp.ne.s32.totalorder %s28, %s31
      %p37 = scmp.eq.s32.totalorder %s18, 0
      %p38 = por %p36, %p37
      %p39 = scmp.ne.s32.totalorder %s28, %s31
      %p40 = scmp.eq.s32.totalorder %s23, 1
      %p41 = por %p39, %p40
      %p42 = scmp.ne.s32.totalorder %s31, %s32
      %p43 = scmp.eq.s32.totalorder %s23, 0
      %p44 = por %p42, %p43
      %p45 = scmp.ne.s32.totalorder %s31, %s32
      %p46 = scmp.eq.s32.totalorder %s24, 1
      %p47 = por %p45, %p46
      %p49 = scmp.ne.s32.totalorder %s32, %s48
      %p50 = scmp.eq.s32.totalorder %s24, 0
      %p51 = por %p49, %p50
      %s53 = sadd.s32 %s52, 1
      %p56 = scmp.eq.s32.totalorder %s18, 1
      %p57 = scmp.ne.s32.totalorder %s52, %s54
      %p58 = scmp.eq.s32.totalorder %s18, 0
      %p59 = por %p57, %p58
      %p60 = scmp.ne.s32.totalorder %s52, %s54
      %p61 = scmp.eq.s32.totalorder %s23, 1
      %p62 = por %p60, %p61
      %p63 = scmp.ne.s32.totalorder %s54, %s55
      %p64 = scmp.eq.s32.totalorder %s23, 0
      %p65 = por %p63, %p64
      %p66 = scmp.ne.s32.totalorder %s54, %s55
      %p67 = scmp.eq.s32.totalorder %s24, 1
      %p68 = por %p66, %p67
      %p70 = scmp.ne.s32.totalorder %s55, %s69
      %p71 = scmp.eq.s32.totalorder %s24, 0
      %p72 = por %p70, %p71
      %s74 = sadd.s32 %s73, 1
      %p77 = scmp.eq.s32.totalorder %s18, 1
      %p78 = scmp.ne.s32.totalorder %s73, %s75
      %p79 = scmp.eq.s32.totalorder %s18, 0
      %p80 = por %p78, %p79
      %p81 = scmp.ne.s32.totalorder %s73, %s75
      %p82 = scmp.eq.s32.totalorder %s23, 1
      %p83 = por %p81, %p82
      %p84 = scmp.ne.s32.totalorder %s75, %s76
      %p85 = scmp.eq.s32.totalorder %s23, 0
      %p86 = por %p84, %p85
      %p87 = scmp.ne.s32.totalorder %s75, %s76
      %p88 = scmp.eq.s32.totalorder %s24, 1
      %p89 = por %p87, %p88
      %p91 = scmp.ne.s32.totalorder %s76, %s90
      %p92 = scmp.eq.s32.totalorder %s24, 0
      %p93 = por %p91, %p92
      %s95 = sadd.s32 %s94, 1
      %p98 = scmp.eq.s32.totalorder %s18, 1
      %p99 = scmp.ne.s32.totalorder %s94, %s96
      %p100 = scmp.eq.s32.totalorder %s18, 0
      %p101 = por %p99, %p100
      %p102 = scmp.ne.s32.totalorder %s94, %s96
      %p103 = scmp.eq.s32.totalorder %s23, 1
      %p104 = por %p102, %p103
      %p105 = scmp.ne.s32.totalorder %s96, %s97
      %p106 = scmp.eq.s32.totalorder %s23, 0
      %p107 = por %p105, %p106
      %p108 = scmp.ne.s32.totalorder %s96, %s97
      %p109 = scmp.eq.s32.totalorder %s24, 1
      %p110 = por %p108, %p109
      %p112 = scmp.ne.s32.totalorder %s97, %s111
      %p113 = scmp.eq.s32.totalorder %s24, 0
      %p114 = por %p112, %p113
      %s115 = ssub.s32 %s18, %s25
      %p116 = scmp.eq.s32.totalorder %s115, 0
      %s118 = sadd.s32 %s117, 1
      %s119 = scalar_select %p116, %s117, %s118
      %p122 = pneg %p116
      %p123 = scmp.eq.s32.totalorder %s18, 1
      %p124 = por %p122, %p123
      %p125 = scmp.ne.s32.totalorder %s117, %s120
      %p126 = scmp.eq.s32.totalorder %s18, 0
      %p127 = por %p125, %p126
      %p128 = scmp.ne.s32.totalorder %s117, %s120
      %p129 = scmp.eq.s32.totalorder %s23, 1
      %p130 = por %p128, %p129
      %p131 = scmp.ne.s32.totalorder %s120, %s121
      %p132 = scmp.eq.s32.totalorder %s23, 0
      %p133 = por %p131, %p132
      %p134 = scmp.ne.s32.totalorder %s120, %s121
      %p135 = scmp.eq.s32.totalorder %s24, 1
      %p136 = por %p134, %p135
      %p138 = scmp.ne.s32.totalorder %s121, %s137
      %p139 = scmp.eq.s32.totalorder %s24, 0
      %p140 = por %p138, %p139
      %p141 = scmp.le.s32.totalorder 1, %s18
      %p142 = scmp.lt.s32.totalorder %s18, 3
      %p143 = pnand %p141, %p142
      %p144 = pneg %p143
      // Predicated region
      $region9: #{tpu_custom_call.1} parent=5 // pred_check
        _
      $region10: #{tpu_custom_call.1} parent=5 // pred_check_branch
        %146 = sbr.rel (%p143) target = $region12
      $region11: #{tpu_custom_call.1} parent=5 // pred_region
        %s147 = ssub.s32 %s18, 1
        // Predicated region
        $region13: #{tpu_custom_call.1} parent=11 // pred_check
          %p148 = pneg %p65
        $region14: #{tpu_custom_call.1} parent=11 // pred_check_branch
          %150 = sbr.rel (%p148) target = $region16
        $region15: #{tpu_custom_call.1} parent=11 // pred_region
          %s152 = ssub.s32 64, 64
          %153 = vsyncadd [#allocation6], %s152
          %s155 = sshll.u32 [#allocation5], 4
          %s156 = int_to_ptr.vmem [resolvable:$true] %s155
          %158 = dma.hbm_to_vmem [thread:$0]  %s1, 64, %s156, [#allocation6]
        $region16: #{tpu_custom_call.1} parent=11 // pred_fallthru
          _
        // Predicated region
        $region17: #{tpu_custom_call.1} parent=11 // pred_check
          %p159 = pneg %p86
        $region18: #{tpu_custom_call.1} parent=11 // pred_check_branch
          %161 = sbr.rel (%p159) target = $region20
        $region19: #{tpu_custom_call.1} parent=11 // pred_region
          %s163 = ssub.s32 128, 128
          %164 = vsyncadd [#allocation6], %s163
          %s166 = sshll.u32 [#allocation7], 4
          %s167 = int_to_ptr.vmem [resolvable:$true] %s166
          %169 = dma.hbm_to_vmem [thread:$0]  %s2, 128, %s167, [#allocation6]
        $region20: #{tpu_custom_call.1} parent=11 // pred_fallthru
          _
        // Predicated region
        $region21: #{tpu_custom_call.1} parent=11 // pred_check
          %p170 = pneg %p107
        $region22: #{tpu_custom_call.1} parent=11 // pred_check_branch
          %172 = sbr.rel (%p170) target = $region24
        $region23: #{tpu_custom_call.1} parent=11 // pred_region
          %s174 = ssub.s32 256, 256
          %175 = vsyncadd [#allocation9], %s174
          %s176 = sshll.u32 [#allocation8], 4
          %s177 = int_to_ptr.vmem [resolvable:$true] %s176
          %182 = dma.hbm_to_vmem [thread:$0]  %s3, 256, %s177, [#allocation9], 128, 128, 8
        $region24: #{tpu_custom_call.1} parent=11 // pred_fallthru
          _
      $region12: #{tpu_custom_call.1} parent=5 // pred_fallthru
        _
      %p183 = scmp.lt.s32.totalorder %s18, 2
      // Predicated region
      $region25: #{tpu_custom_call.1} parent=5 // pred_check
        %p184 = pneg %p183
      $region26: #{tpu_custom_call.1} parent=5 // pred_check_branch
        %186 = sbr.rel (%p184) target = $region28
      $region27: #{tpu_custom_call.1} parent=5 // pred_region
        // Predicated region
        $region29: #{tpu_custom_call.1} parent=27 // pred_check
          %p187 = pneg %p38
        $region30: #{tpu_custom_call.1} parent=27 // pred_check_branch
          %189 = sbr.rel (%p187) target = $region32
        $region31: #{tpu_custom_call.1} parent=27 // pred_region
          %s190 = sand.u32 %s28, 1
          %s191 = scalar_lea.sflag [#allocation3], %s190
          %s192 = sand.u32 %s28, 1
          %s193 = smul.addr %s192, 32
          %s194 = scalar_lea.vmem [#allocation2], %s193
          %s196 = ssub.s32 512, 512
          %197 = vsyncadd %s191, %s196
          %s198 = smul.addr %s18, 4
          %s199 = smul.addr %s198, 128
          %s200 = scalar_lea.hbm %s0, %s199
          %s201 = sshll.u32 %s194, 4
          %s202 = int_to_ptr.vmem [resolvable:$true] %s201
          %207 = dma.hbm_to_vmem [thread:$0]  %s200, 512, %s202, %s191, 256, 256, 16
        $region32: #{tpu_custom_call.1} parent=27 // pred_fallthru
          _
      $region28: #{tpu_custom_call.1} parent=5 // pred_fallthru
        _
      %p208 = scmp.le.s32.totalorder 1, %s18
      %p209 = scmp.lt.s32.totalorder %s18, 3
      %p210 = pnand %p208, %p209
      %p211 = pneg %p210
      // Predicated region
      $region33: #{tpu_custom_call.1} parent=5 // pred_check
        _
      $region34: #{tpu_custom_call.1} parent=5 // pred_check_branch
        %213 = sbr.rel (%p210) target = $region36
      $region35: #{tpu_custom_call.1} parent=5 // pred_region
        %s214 = ssub.s32 %s18, 1
        %s215 = sand.u32 %s31, 1
        %s216 = scalar_lea.sflag [#allocation3], %s215
        %s217 = sand.u32 %s31, 1
        %s218 = smul.addr %s217, 32
        %s219 = scalar_lea.vmem [#allocation2], %s218
        // Predicated region
        $region37: #{tpu_custom_call.1} parent=35 // pred_check
          %p220 = pneg %p44
        $region38: #{tpu_custom_call.1} parent=35 // pred_check_branch
          %222 = sbr.rel (%p220) target = $region40
        $region39: #{tpu_custom_call.1} parent=35 // pred_region
          %223 = dma.done %s216, 512
        $region40: #{tpu_custom_call.1} parent=35 // pred_fallthru
          _
        // Predicated region
        $region41: #{tpu_custom_call.1} parent=35 // pred_check
          %p224 = pneg %p65
        $region42: #{tpu_custom_call.1} parent=35 // pred_check_branch
          %226 = sbr.rel (%p224) target = $region44
        $region43: #{tpu_custom_call.1} parent=35 // pred_region
          %227 = dma.done [#allocation6], 64
        $region44: #{tpu_custom_call.1} parent=35 // pred_fallthru
          _
        // Predicated region
        $region45: #{tpu_custom_call.1} parent=35 // pred_check
          %p228 = pneg %p86
        $region46: #{tpu_custom_call.1} parent=35 // pred_check_branch
          %230 = sbr.rel (%p228) target = $region48
        $region47: #{tpu_custom_call.1} parent=35 // pred_region
          %231 = dma.done [#allocation6], 128
        $region48: #{tpu_custom_call.1} parent=35 // pred_fallthru
          _
        // Predicated region
        $region49: #{tpu_custom_call.1} parent=35 // pred_check
          %p232 = pneg %p107
        $region50: #{tpu_custom_call.1} parent=35 // pred_check_branch
          %234 = sbr.rel (%p232) target = $region52
        $region51: #{tpu_custom_call.1} parent=35 // pred_region
          %235 = dma.done [#allocation9], 256
        $region52: #{tpu_custom_call.1} parent=35 // pred_fallthru
          _
        %s236 = sand.u32 %s31, 1
        %s237 = scalar_lea.sflag [#allocation3], %s236
        %s238 = sand.u32 %s31, 1
        %s239 = smul.addr %s238, 32
        %s240 = scalar_lea.vmem [#allocation2], %s239
        %p241 = pneg %p44
        %p242 = pneg %p41
        %p243 = pneg %p65
        %p244 = pneg %p62
        %p245 = pneg %p86
        %p246 = pneg %p83
        %p247 = pneg %p107
        %p248 = pneg %p104
        %p249 = pneg %p133
        %p250 = pneg %p130
        %s251 = sand.u32 %s120, 1
        %s252 = scalar_lea.sflag [#allocation4], %s251
        %s253 = sand.u32 %s120, 1
        %s254 = smul.addr %s253, 32
        %s255 = scalar_lea.vmem [#allocation10], %s254
        %v256 = vld [vmem:[%s219] sm:$0xff]
        %v257 = vld [vmem:[%s219 + $0x8] sm:$0xff]
        %v258 = vld [vmem:[%s219 + $0x10] sm:$0xff]
        %v259 = vld [vmem:[%s219 + $0x18] sm:$0xff]
        %v260 = vld [vmem:[#allocation5] ss:$2 sm:$0x3]
        %s261 = scalar_lea.vmem [#allocation5], 1
        %v262 = vld [vmem:[%s261] ss:$2 sm:$0x3]
        %v263 = vld [vmem:[#allocation7] sm:$0xff]
        %265 = vset.pattern.permute.xlu0 16
        %266 = vperm.xlu0 %265, %v263
        %v267 = vpop.permute.xlu0 %266
        %vm269 = vcmask 130048
        %v270 = vsel %vm269, %v263, 0
        %272 = vmatprep.subr.mxu0 0.0
        %273 = vmatpush1.msra.mxu0 0.0
        %274 = vmatprep.subr.mxu0 0.0
        %275 = vmatpush1.msra.mxu0 0.0
        %276 = vmatprep.subr.mxu0 0.0
        %277 = vmatpush1.msra.mxu0 0.0
        %278 = vmatprep.subr.mxu0 0.0
        %279 = vmatpush1.msra.mxu0 0.0
        %280 = vmatprep.subr.mxu0 0.0
        %281 = vmatpush1.msra.mxu0 0.0
        %282 = vmatprep.subr.mxu0 0.0
        %283 = vmatpush1.msra.mxu0 0.0
        %284 = vmatprep.subr.mxu0 0.0
        %285 = vmatpush1.msra.mxu0 0.0
        %286 = vmatprep.subr.mxu0 0.0
        %287 = vmatpush1.msra.mxu0 0.0
        %288 = vmatprep.subr.mxu0 0.0
        %289 = vmatpush1.msra.mxu0 0.0
        %290 = vmatprep.subr.mxu0 0.0
        %291 = vmatpush1.msra.mxu0 0.0
        %292 = vmatprep.subr.mxu0 0.0
        %293 = vmatpush1.msra.mxu0 0.0
        %294 = vmatprep.subr.mxu0 0.0
        %295 = vmatpush1.msra.mxu0 0.0
        %296 = vmatprep.subr.mxu0 0.0
        %297 = vmatpush1.msra.mxu0 0.0
        %298 = vmatprep.subr.mxu0 0.0
        %299 = vmatpush1.msra.mxu0 0.0
        %300 = vmatprep.subr.mxu0 %v259
        %301 = vmatpush1.msra.mxu0 %v258
        %302 = vmatprep.subr.mxu0 %v257
        %303 = vmatpush1.msra.mxu0 %v256
        %304 = vmatprep.subr.mxu0 0.0
        %305 = vmatpush2.msra.mxu0 0.0
        %306 = vmatprep.subr.mxu0 0.0
        %307 = vmatpush2.msra.mxu0 0.0
        %308 = vmatprep.subr.mxu0 0.0
        %309 = vmatpush2.msra.mxu0 0.0
        %310 = vmatprep.subr.mxu0 0.0
        %311 = vmatpush2.msra.mxu0 0.0
        %312 = vmatprep.subr.mxu0 0.0
        %313 = vmatpush2.msra.mxu0 0.0
        %314 = vmatprep.subr.mxu0 0.0
        %315 = vmatpush2.msra.mxu0 0.0
        %316 = vmatprep.subr.mxu0 0.0
        %317 = vmatpush2.msra.mxu0 0.0
        %318 = vmatprep.subr.mxu0 0.0
        %319 = vmatpush2.msra.mxu0 0.0
        %320 = vmatprep.subr.mxu0 0.0
        %321 = vmatpush2.msra.mxu0 0.0
        %322 = vmatprep.subr.mxu0 0.0
        %323 = vmatpush2.msra.mxu0 0.0
        %324 = vmatprep.subr.mxu0 0.0
        %325 = vmatpush2.msra.mxu0 0.0
        %326 = vmatprep.subr.mxu0 0.0
        %327 = vmatpush2.msra.mxu0 0.0
        %328 = vmatprep.subr.mxu0 0.0
        %329 = vmatpush2.msra.mxu0 0.0
        %330 = vmatprep.subr.mxu0 0.0
        %331 = vmatpush2.msra.mxu0 0.0
        %332 = vmatprep.subr.mxu0 0.0
        %333 = vmatpush2.msra.mxu0 0.0
        %334 = vmatprep.subr.mxu0 0.0
        %335 = vmatpush2.msra.mxu0 0.0
        %336 = vmatprep.mubr.f32.mxu0 0.0
        %337 = vmatmul.mubr.f32.gmra.mxu0 %v270
        %v338 = vpop.f32.mrf.mxu0
        %v339 = vadd.f32 %v267, %v338
        %v340 = vpop.f32.mrf.mxu0
        %v341 = vadd.f32 %v267, %v340
        %342 = vdwg.mxu0
        %v343 = vxor.u32 %v339, 2147483648
        %v344 = vxor.u32 %v341, 2147483648
        %v345 = vmul.f32 %v343, 1.442695
        %v346 = vpow.pop %v345
        %v347 = vmul.f32 %v344, 1.442695
        %v348 = vpow.pop %v347
        %v349 = vadd.f32 %v346, 1.0
        %v350 = vadd.f32 %v348, 1.0
        %v351 = vrcp.pop %v349
        %v352 = vmul.f32 1.0, %v351
        %v353 = vrcp.pop %v350
        %v354 = vmul.f32 1.0, %v353
        %v355 = vmul.f32 %v339, %v352
        %v356 = vmul.f32 %v341, %v354
        %v357 = vadd.s32 %v262, 4294967294
        %vm358 = vcmp.ge.s32.totalorder %v357, 0
        %vm359 = vcmp.lt.s32.totalorder %v357, 16
        %vm360 = vmand %vm358, %vm359
        %v361 = vadd.s32 %v260, 4294967294
        %vm362 = vcmp.ge.s32.totalorder %v361, 0
        %vm363 = vmand %vm360, %vm362
        %vm364 = vcmp.lt.s32.totalorder %v361, 16
        %vm365 = vmand %vm363, %vm364
        %366 = vrot.lane.b32.xlu0 %v355, 34
        %v367 = vpop.permute.xlu0 %366
        %368 = vrot.lane.b32.xlu0 %v356, 34
        %v369 = vpop.permute.xlu0 %368
        %v370 = vlaneseq
        %v371 = vand.u32 %v370, 127
        %vm372 = vcmp.lt.s32.totalorder %v371, 34
        %v373 = vsel %vm372, %v367, %v369
        %v374 = vsel %vm372, %v369, %v367
        %v375 = vsel %vm365, 1, 0
        %v376 = vlaneseq
        %v377 = vshrl.u32 %v376, 7
        %v378 = vsub.s32 0, %v377
        %v379 = vrot.slane %v375, %v378
        %v380 = vlaneseq
        %v381 = vshrl.u32 %v380, 7
        %v382 = vsub.s32 1, %v381
        %v383 = vrot.slane %v375, %v382
        %vm384 = vcmp.eq.s32.totalorder %v379, 1
        %vm385 = vcmp.eq.s32.totalorder %v383, 1
        %v386 = vsel %vm384, %v374, 0.0
        %v387 = vsel %vm385, %v373, 0.0
        %388 = vset.pattern.permute.xlu0 18
        %389 = vperm.xlu0 %388, %v263
        %v390 = vpop.permute.xlu0 %389
        %v392 = vmul.f32 %v386, %v390
        %v393 = vmul.f32 %v387, %v390
        %v394 = vadd.f32 %v392, 0.0
        %v395 = vadd.f32 %v393, 0.0
        %v396 = vadd.s32 %v260, 4294967295
        %vm397 = vcmp.ge.s32.totalorder %v396, 0
        %vm398 = vmand %vm360, %vm397
        %vm399 = vcmp.lt.s32.totalorder %v396, 16
        %vm400 = vmand %vm398, %vm399
        %401 = vrot.lane.b32.xlu0 %v355, 18
        %v402 = vpop.permute.xlu0 %401
        %403 = vrot.lane.b32.xlu0 %v356, 18
        %v404 = vpop.permute.xlu0 %403
        %vm405 = vcmp.lt.s32.totalorder %v371, 18
        %v406 = vsel %vm405, %v402, %v404
        %v407 = vsel %vm405, %v404, %v402
        %v408 = vsel %vm400, 1, 0
        %v409 = vlaneseq
        %v410 = vshrl.u32 %v409, 7
        %v411 = vsub.s32 0, %v410
        %v412 = vrot.slane %v408, %v411
        %v413 = vlaneseq
        %v414 = vshrl.u32 %v413, 7
        %v415 = vsub.s32 1, %v414
        %v416 = vrot.slane %v408, %v415
        %vm417 = vcmp.eq.s32.totalorder %v412, 1
        %vm418 = vcmp.eq.s32.totalorder %v416, 1
        %v419 = vsel %vm417, %v407, 0.0
        %v420 = vsel %vm418, %v406, 0.0
        %421 = vset.pattern.permute.xlu0 23
        %422 = vperm.xlu0 %421, %v263
        %v423 = vpop.permute.xlu0 %422
        %v425 = vmul.f32 %v419, %v423
        %v426 = vmul.f32 %v420, %v423
        %v427 = vadd.f32 %v394, %v425
        %v428 = vadd.f32 %v395, %v426
        %vm429 = vcmp.ge.s32.totalorder %v260, 0
        %vm430 = vmand %vm360, %vm429
        %vm431 = vcmp.lt.s32.totalorder %v260, 16
        %vm432 = vmand %vm430, %vm431
        %433 = vrot.lane.b32.xlu0 %v355, 2
        %v434 = vpop.permute.xlu0 %433
        %435 = vrot.lane.b32.xlu0 %v356, 2
        %v436 = vpop.permute.xlu0 %435
        %vm437 = vcmp.lt.s32.totalorder %v371, 2
        %v438 = vsel %vm437, %v434, %v436
        %v439 = vsel %vm437, %v436, %v434
        %v440 = vsel %vm432, 1, 0
        %v441 = vlaneseq
        %v442 = vshrl.u32 %v441, 7
        %v443 = vsub.s32 0, %v442
        %v444 = vrot.slane %v440, %v443
        %v445 = vlaneseq
        %v446 = vshrl.u32 %v445, 7
        %v447 = vsub.s32 1, %v446
        %v448 = vrot.slane %v440, %v447
        %vm449 = vcmp.eq.s32.totalorder %v444, 1
        %vm450 = vcmp.eq.s32.totalorder %v448, 1
        %v451 = vsel %vm449, %v439, 0.0
        %v452 = vsel %vm450, %v438, 0.0
        %453 = vset.pattern.permute.xlu0 28
        %454 = vperm.xlu0 %453, %v263
        %v455 = vpop.permute.xlu0 %454
        %v457 = vmul.f32 %v451, %v455
        %v458 = vmul.f32 %v452, %v455
        %v459 = vadd.f32 %v427, %v457
        %v460 = vadd.f32 %v428, %v458
        %v461 = vadd.s32 %v260, 1
        %vm462 = vcmp.ge.s32.totalorder %v461, 0
        %vm463 = vmand %vm360, %vm462
        %vm464 = vcmp.lt.s32.totalorder %v461, 16
        %vm465 = vmand %vm463, %vm464
        %466 = vrot.lane.b32.xlu0 %v355, 114
        %v467 = vpop.permute.xlu0 %466
        %468 = vrot.lane.b32.xlu0 %v356, 114
        %v469 = vpop.permute.xlu0 %468
        %vm470 = vcmp.lt.s32.totalorder %v371, 114
        %v471 = vsel %vm470, %v467, %v469
        %v472 = vsel %vm470, %v469, %v467
        %v473 = vsel %vm465, 1, 0
        %v474 = vlaneseq
        %v475 = vshrl.u32 %v474, 7
        %v476 = vsub.s32 0, %v475
        %v477 = vrot.slane %v473, %v476
        %v478 = vlaneseq
        %v479 = vshrl.u32 %v478, 7
        %v480 = vsub.s32 1, %v479
        %v481 = vrot.slane %v473, %v480
        %vm482 = vcmp.eq.s32.totalorder %v477, 1
        %vm483 = vcmp.eq.s32.totalorder %v481, 1
        %v484 = vsel %vm482, %v471, 0.0
        %v485 = vsel %vm483, %v472, 0.0
        %486 = vset.pattern.permute.xlu0 33
        %487 = vperm.xlu0 %486, %v263
        %v488 = vpop.permute.xlu0 %487
        %v490 = vmul.f32 %v484, %v488
        %v491 = vmul.f32 %v485, %v488
        %v492 = vadd.f32 %v459, %v490
        %v493 = vadd.f32 %v460, %v491
        %v494 = vadd.s32 %v260, 2
        %vm495 = vcmp.ge.s32.totalorder %v494, 0
        %vm496 = vmand %vm360, %vm495
        %vm497 = vcmp.lt.s32.totalorder %v494, 16
        %vm498 = vmand %vm496, %vm497
        %499 = vrot.lane.b32.xlu0 %v355, 98
        %v500 = vpop.permute.xlu0 %499
        %501 = vrot.lane.b32.xlu0 %v356, 98
        %v502 = vpop.permute.xlu0 %501
        %vm503 = vcmp.lt.s32.totalorder %v371, 98
        %v504 = vsel %vm503, %v500, %v502
        %v505 = vsel %vm503, %v502, %v500
        %v506 = vsel %vm498, 1, 0
        %v507 = vlaneseq
        %v508 = vshrl.u32 %v507, 7
        %v509 = vsub.s32 0, %v508
        %v510 = vrot.slane %v506, %v509
        %v511 = vlaneseq
        %v512 = vshrl.u32 %v511, 7
        %v513 = vsub.s32 1, %v512
        %v514 = vrot.slane %v506, %v513
        %vm515 = vcmp.eq.s32.totalorder %v510, 1
        %vm516 = vcmp.eq.s32.totalorder %v514, 1
        %v517 = vsel %vm515, %v504, 0.0
        %v518 = vsel %vm516, %v505, 0.0
        %519 = vset.pattern.permute.xlu0 38
        %520 = vperm.xlu0 %519, %v263
        %v521 = vpop.permute.xlu0 %520
        %v523 = vmul.f32 %v517, %v521
        %v524 = vmul.f32 %v518, %v521
        %v525 = vadd.f32 %v492, %v523
        %v526 = vadd.f32 %v493, %v524
        %v527 = vadd.s32 %v262, 4294967295
        %vm528 = vcmp.ge.s32.totalorder %v527, 0
        %vm529 = vcmp.lt.s32.totalorder %v527, 16
        %vm530 = vmand %vm528, %vm529
        %vm531 = vmand %vm530, %vm362
        %vm532 = vmand %vm531, %vm364
        %533 = vrot.lane.b32.xlu0 %v355, 33
        %v534 = vpop.permute.xlu0 %533
        %535 = vrot.lane.b32.xlu0 %v356, 33
        %v536 = vpop.permute.xlu0 %535
        %vm537 = vcmp.lt.s32.totalorder %v371, 33
        %v538 = vsel %vm537, %v534, %v536
        %v539 = vsel %vm537, %v536, %v534
        %v540 = vsel %vm532, 1, 0
        %v541 = vlaneseq
        %v542 = vshrl.u32 %v541, 7
        %v543 = vsub.s32 0, %v542
        %v544 = vrot.slane %v540, %v543
        %v545 = vlaneseq
        %v546 = vshrl.u32 %v545, 7
        %v547 = vsub.s32 1, %v546
        %v548 = vrot.slane %v540, %v547
        %vm549 = vcmp.eq.s32.totalorder %v544, 1
        %vm550 = vcmp.eq.s32.totalorder %v548, 1
        %v551 = vsel %vm549, %v539, 0.0
        %v552 = vsel %vm550, %v538, 0.0
        %553 = vset.pattern.permute.xlu0 19
        %554 = vperm.xlu0 %553, %v263
        %v555 = vpop.permute.xlu0 %554
        %v557 = vmul.f32 %v551, %v555
        %v558 = vmul.f32 %v552, %v555
        %v559 = vadd.f32 %v525, %v557
        %v560 = vadd.f32 %v526, %v558
        %vm561 = vmand %vm530, %vm397
        %vm562 = vmand %vm561, %vm399
        %563 = vrot.lane.b32.xlu0 %v355, 17
        %v564 = vpop.permute.xlu0 %563
        %565 = vrot.lane.b32.xlu0 %v356, 17
        %v566 = vpop.permute.xlu0 %565
        %vm567 = vcmp.lt.s32.totalorder %v371, 17
        %v568 = vsel %vm567, %v564, %v566
        %v569 = vsel %vm567, %v566, %v564
        %v570 = vsel %vm562, 1, 0
        %v571 = vlaneseq
        %v572 = vshrl.u32 %v571, 7
        %v573 = vsub.s32 0, %v572
        %v574 = vrot.slane %v570, %v573
        %v575 = vlaneseq
        %v576 = vshrl.u32 %v575, 7
        %v577 = vsub.s32 1, %v576
        %v578 = vrot.slane %v570, %v577
        %vm579 = vcmp.eq.s32.totalorder %v574, 1
        %vm580 = vcmp.eq.s32.totalorder %v578, 1
        %v581 = vsel %vm579, %v569, 0.0
        %v582 = vsel %vm580, %v568, 0.0
        %583 = vset.pattern.permute.xlu0 24
        %584 = vperm.xlu0 %583, %v263
        %v585 = vpop.permute.xlu0 %584
        %v587 = vmul.f32 %v581, %v585
        %v588 = vmul.f32 %v582, %v585
        %v589 = vadd.f32 %v559, %v587
        %v590 = vadd.f32 %v560, %v588
        %vm591 = vmand %vm530, %vm429
        %vm592 = vmand %vm591, %vm431
        %593 = vrot.lane.b32.xlu0 %v355, 1
        %v594 = vpop.permute.xlu0 %593
        %595 = vrot.lane.b32.xlu0 %v356, 1
        %v596 = vpop.permute.xlu0 %595
        %vm597 = vcmp.lt.s32.totalorder %v371, 1
        %v598 = vsel %vm597, %v594, %v596
        %v599 = vsel %vm597, %v596, %v594
        %v600 = vsel %vm592, 1, 0
        %v601 = vlaneseq
        %v602 = vshrl.u32 %v601, 7
        %v603 = vsub.s32 0, %v602
        %v604 = vrot.slane %v600, %v603
        %v605 = vlaneseq
        %v606 = vshrl.u32 %v605, 7
        %v607 = vsub.s32 1, %v606
        %v608 = vrot.slane %v600, %v607
        %vm609 = vcmp.eq.s32.totalorder %v604, 1
        %vm610 = vcmp.eq.s32.totalorder %v608, 1
        %v611 = vsel %vm609, %v599, 0.0
        %v612 = vsel %vm610, %v598, 0.0
        %613 = vset.pattern.permute.xlu0 29
        %614 = vperm.xlu0 %613, %v263
        %v615 = vpop.permute.xlu0 %614
        %v617 = vmul.f32 %v611, %v615
        %v618 = vmul.f32 %v612, %v615
        %v619 = vadd.f32 %v589, %v617
        %v620 = vadd.f32 %v590, %v618
        %vm621 = vmand %vm530, %vm462
        %vm622 = vmand %vm621, %vm464
        %623 = vrot.lane.b32.xlu0 %v355, 113
        %v624 = vpop.permute.xlu0 %623
        %625 = vrot.lane.b32.xlu0 %v356, 113
        %v626 = vpop.permute.xlu0 %625
        %vm627 = vcmp.lt.s32.totalorder %v371, 113
        %v628 = vsel %vm627, %v624, %v626
        %v629 = vsel %vm627, %v626, %v624
        %v630 = vsel %vm622, 1, 0
        %v631 = vlaneseq
        %v632 = vshrl.u32 %v631, 7
        %v633 = vsub.s32 0, %v632
        %v634 = vrot.slane %v630, %v633
        %v635 = vlaneseq
        %v636 = vshrl.u32 %v635, 7
        %v637 = vsub.s32 1, %v636
        %v638 = vrot.slane %v630, %v637
        %vm639 = vcmp.eq.s32.totalorder %v634, 1
        %vm640 = vcmp.eq.s32.totalorder %v638, 1
        %v641 = vsel %vm639, %v628, 0.0
        %v642 = vsel %vm640, %v629, 0.0
        %643 = vset.pattern.permute.xlu0 34
        %644 = vperm.xlu0 %643, %v263
        %v645 = vpop.permute.xlu0 %644
        %v647 = vmul.f32 %v641, %v645
        %v648 = vmul.f32 %v642, %v645
        %v649 = vadd.f32 %v619, %v647
        %v650 = vadd.f32 %v620, %v648
        %vm651 = vmand %vm530, %vm495
        %vm652 = vmand %vm651, %vm497
        %653 = vrot.lane.b32.xlu0 %v355, 97
        %v654 = vpop.permute.xlu0 %653
        %655 = vrot.lane.b32.xlu0 %v356, 97
        %v656 = vpop.permute.xlu0 %655
        %vm657 = vcmp.lt.s32.totalorder %v371, 97
        %v658 = vsel %vm657, %v654, %v656
        %v659 = vsel %vm657, %v656, %v654
        %v660 = vsel %vm652, 1, 0
        %v661 = vlaneseq
        %v662 = vshrl.u32 %v661, 7
        %v663 = vsub.s32 0, %v662
        %v664 = vrot.slane %v660, %v663
        %v665 = vlaneseq
        %v666 = vshrl.u32 %v665, 7
        %v667 = vsub.s32 1, %v666
        %v668 = vrot.slane %v660, %v667
        %vm669 = vcmp.eq.s32.totalorder %v664, 1
        %vm670 = vcmp.eq.s32.totalorder %v668, 1
        %v671 = vsel %vm669, %v658, 0.0
        %v672 = vsel %vm670, %v659, 0.0
        %673 = vset.pattern.permute.xlu0 39
        %674 = vperm.xlu0 %673, %v263
        %v675 = vpop.permute.xlu0 %674
        %v677 = vmul.f32 %v671, %v675
        %v678 = vmul.f32 %v672, %v675
        %v679 = vadd.f32 %v649, %v677
        %v680 = vadd.f32 %v650, %v678
        %vm681 = vcmp.ge.s32.totalorder %v262, 0
        %vm682 = vcmp.lt.s32.totalorder %v262, 16
        %vm683 = vmand %vm681, %vm682
        %vm684 = vmand %vm683, %vm362
        %vm685 = vmand %vm684, %vm364
        %686 = vrot.lane.b32.xlu0 %v355, 32
        %v687 = vpop.permute.xlu0 %686
        %688 = vrot.lane.b32.xlu0 %v356, 32
        %v689 = vpop.permute.xlu0 %688
        %vm690 = vcmp.lt.s32.totalorder %v371, 32
        %v691 = vsel %vm690, %v687, %v689
        %v692 = vsel %vm690, %v689, %v687
        %v693 = vsel %vm685, 1, 0
        %v694 = vlaneseq
        %v695 = vshrl.u32 %v694, 7
        %v696 = vsub.s32 0, %v695
        %v697 = vrot.slane %v693, %v696
        %v698 = vlaneseq
        %v699 = vshrl.u32 %v698, 7
        %v700 = vsub.s32 1, %v699
        %v701 = vrot.slane %v693, %v700
        %vm702 = vcmp.eq.s32.totalorder %v697, 1
        %vm703 = vcmp.eq.s32.totalorder %v701, 1
        %v704 = vsel %vm702, %v692, 0.0
        %v705 = vsel %vm703, %v691, 0.0
        %706 = vset.pattern.permute.xlu0 20
        %707 = vperm.xlu0 %706, %v263
        %v708 = vpop.permute.xlu0 %707
        %v710 = vmul.f32 %v704, %v708
        %v711 = vmul.f32 %v705, %v708
        %v712 = vadd.f32 %v679, %v710
        %v713 = vadd.f32 %v680, %v711
        %vm714 = vmand %vm683, %vm397
        %vm715 = vmand %vm714, %vm399
        %716 = vrot.lane.b32.xlu0 %v355, 16
        %v717 = vpop.permute.xlu0 %716
        %718 = vrot.lane.b32.xlu0 %v356, 16
        %v719 = vpop.permute.xlu0 %718
        %vm720 = vcmp.lt.s32.totalorder %v371, 16
        %v721 = vsel %vm720, %v717, %v719
        %v722 = vsel %vm720, %v719, %v717
        %v723 = vsel %vm715, 1, 0
        %v724 = vlaneseq
        %v725 = vshrl.u32 %v724, 7
        %v726 = vsub.s32 0, %v725
        %v727 = vrot.slane %v723, %v726
        %v728 = vlaneseq
        %v729 = vshrl.u32 %v728, 7
        %v730 = vsub.s32 1, %v729
        %v731 = vrot.slane %v723, %v730
        %vm732 = vcmp.eq.s32.totalorder %v727, 1
        %vm733 = vcmp.eq.s32.totalorder %v731, 1
        %v734 = vsel %vm732, %v722, 0.0
        %v735 = vsel %vm733, %v721, 0.0
        %736 = vset.pattern.permute.xlu0 25
        %737 = vperm.xlu0 %736, %v263
        %v738 = vpop.permute.xlu0 %737
        %v740 = vmul.f32 %v734, %v738
        %v741 = vmul.f32 %v735, %v738
        %v742 = vadd.f32 %v712, %v740
        %v743 = vadd.f32 %v713, %v741
        %744 = vset.pattern.permute.xlu0 30
        %745 = vperm.xlu0 %744, %v263
        %v746 = vpop.permute.xlu0 %745
        %v748 = vmul.f32 %v355, %v746
        %v749 = vmul.f32 %v356, %v746
        %v750 = vadd.f32 %v742, %v748
        %v751 = vadd.f32 %v743, %v749
        %vm752 = vmand %vm683, %vm462
        %vm753 = vmand %vm752, %vm464
        %754 = vrot.lane.b32.xlu0 %v355, 112
        %v755 = vpop.permute.xlu0 %754
        %756 = vrot.lane.b32.xlu0 %v356, 112
        %v757 = vpop.permute.xlu0 %756
        %vm758 = vcmp.lt.s32.totalorder %v371, 112
        %v759 = vsel %vm758, %v755, %v757
        %v760 = vsel %vm758, %v757, %v755
        %v761 = vsel %vm753, 1, 0
        %v762 = vlaneseq
        %v763 = vshrl.u32 %v762, 7
        %v764 = vsub.s32 0, %v763
        %v765 = vrot.slane %v761, %v764
        %v766 = vlaneseq
        %v767 = vshrl.u32 %v766, 7
        %v768 = vsub.s32 1, %v767
        %v769 = vrot.slane %v761, %v768
        %vm770 = vcmp.eq.s32.totalorder %v765, 1
        %vm771 = vcmp.eq.s32.totalorder %v769, 1
        %v772 = vsel %vm770, %v759, 0.0
        %v773 = vsel %vm771, %v760, 0.0
        %774 = vset.pattern.permute.xlu0 35
        %775 = vperm.xlu0 %774, %v263
        %v776 = vpop.permute.xlu0 %775
        %v778 = vmul.f32 %v772, %v776
        %v779 = vmul.f32 %v773, %v776
        %v780 = vadd.f32 %v750, %v778
        %v781 = vadd.f32 %v751, %v779
        %vm782 = vmand %vm683, %vm495
        %vm783 = vmand %vm782, %vm497
        %784 = vrot.lane.b32.xlu0 %v355, 96
        %v785 = vpop.permute.xlu0 %784
        %786 = vrot.lane.b32.xlu0 %v356, 96
        %v787 = vpop.permute.xlu0 %786
        %vm788 = vcmp.lt.s32.totalorder %v371, 96
        %v789 = vsel %vm788, %v785, %v787
        %v790 = vsel %vm788, %v787, %v785
        %v791 = vsel %vm783, 1, 0
        %v792 = vlaneseq
        %v793 = vshrl.u32 %v792, 7
        %v794 = vsub.s32 0, %v793
        %v795 = vrot.slane %v791, %v794
        %v796 = vlaneseq
        %v797 = vshrl.u32 %v796, 7
        %v798 = vsub.s32 1, %v797
        %v799 = vrot.slane %v791, %v798
        %vm800 = vcmp.eq.s32.totalorder %v795, 1
        %vm801 = vcmp.eq.s32.totalorder %v799, 1
        %v802 = vsel %vm800, %v789, 0.0
        %v803 = vsel %vm801, %v790, 0.0
        %804 = vset.pattern.permute.xlu0 40
        %805 = vperm.xlu0 %804, %v263
        %v806 = vpop.permute.xlu0 %805
        %v808 = vmul.f32 %v802, %v806
        %v809 = vmul.f32 %v803, %v806
        %v810 = vadd.f32 %v780, %v808
        %v811 = vadd.f32 %v781, %v809
        %v812 = vadd.s32 %v262, 1
        %vm813 = vcmp.ge.s32.totalorder %v812, 0
        %vm814 = vcmp.lt.s32.totalorder %v812, 16
        %vm815 = vmand %vm813, %vm814
        %vm816 = vmand %vm815, %vm362
        %vm817 = vmand %vm816, %vm364
        %818 = vrot.lane.b32.xlu0 %v355, 31
        %v819 = vpop.permute.xlu0 %818
        %820 = vrot.lane.b32.xlu0 %v356, 31
        %v821 = vpop.permute.xlu0 %820
        %vm822 = vcmp.lt.s32.totalorder %v371, 31
        %v823 = vsel %vm822, %v819, %v821
        %v824 = vsel %vm822, %v821, %v819
        %v825 = vsel %vm817, 1, 0
        %v826 = vlaneseq
        %v827 = vshrl.u32 %v826, 7
        %v828 = vsub.s32 0, %v827
        %v829 = vrot.slane %v825, %v828
        %v830 = vlaneseq
        %v831 = vshrl.u32 %v830, 7
        %v832 = vsub.s32 1, %v831
        %v833 = vrot.slane %v825, %v832
        %vm834 = vcmp.eq.s32.totalorder %v829, 1
        %vm835 = vcmp.eq.s32.totalorder %v833, 1
        %v836 = vsel %vm834, %v824, 0.0
        %v837 = vsel %vm835, %v823, 0.0
        %838 = vset.pattern.permute.xlu0 21
        %839 = vperm.xlu0 %838, %v263
        %v840 = vpop.permute.xlu0 %839
        %v842 = vmul.f32 %v836, %v840
        %v843 = vmul.f32 %v837, %v840
        %v844 = vadd.f32 %v810, %v842
        %v845 = vadd.f32 %v811, %v843
        %vm846 = vmand %vm815, %vm397
        %vm847 = vmand %vm846, %vm399
        %848 = vrot.lane.b32.xlu0 %v355, 15
        %v849 = vpop.permute.xlu0 %848
        %850 = vrot.lane.b32.xlu0 %v356, 15
        %v851 = vpop.permute.xlu0 %850
        %vm852 = vcmp.lt.s32.totalorder %v371, 15
        %v853 = vsel %vm852, %v849, %v851
        %v854 = vsel %vm852, %v851, %v849
        %v855 = vsel %vm847, 1, 0
        %v856 = vlaneseq
        %v857 = vshrl.u32 %v856, 7
        %v858 = vsub.s32 0, %v857
        %v859 = vrot.slane %v855, %v858
        %v860 = vlaneseq
        %v861 = vshrl.u32 %v860, 7
        %v862 = vsub.s32 1, %v861
        %v863 = vrot.slane %v855, %v862
        %vm864 = vcmp.eq.s32.totalorder %v859, 1
        %vm865 = vcmp.eq.s32.totalorder %v863, 1
        %v866 = vsel %vm864, %v854, 0.0
        %v867 = vsel %vm865, %v853, 0.0
        %868 = vset.pattern.permute.xlu0 26
        %869 = vperm.xlu0 %868, %v263
        %v870 = vpop.permute.xlu0 %869
        %v872 = vmul.f32 %v866, %v870
        %v873 = vmul.f32 %v867, %v870
        %v874 = vadd.f32 %v844, %v872
        %v875 = vadd.f32 %v845, %v873
        %vm876 = vmand %vm815, %vm429
        %vm877 = vmand %vm876, %vm431
        %878 = vrot.lane.b32.xlu0 %v355, 127
        %v879 = vpop.permute.xlu0 %878
        %880 = vrot.lane.b32.xlu0 %v356, 127
        %v881 = vpop.permute.xlu0 %880
        %vm882 = vcmp.lt.s32.totalorder %v371, 127
        %v883 = vsel %vm882, %v879, %v881
        %v884 = vsel %vm882, %v881, %v879
        %v885 = vsel %vm877, 1, 0
        %v886 = vlaneseq
        %v887 = vshrl.u32 %v886, 7
        %v888 = vsub.s32 0, %v887
        %v889 = vrot.slane %v885, %v888
        %v890 = vlaneseq
        %v891 = vshrl.u32 %v890, 7
        %v892 = vsub.s32 1, %v891
        %v893 = vrot.slane %v885, %v892
        %vm894 = vcmp.eq.s32.totalorder %v889, 1
        %vm895 = vcmp.eq.s32.totalorder %v893, 1
        %v896 = vsel %vm894, %v883, 0.0
        %v897 = vsel %vm895, %v884, 0.0
        %898 = vset.pattern.permute.xlu0 31
        %899 = vperm.xlu0 %898, %v263
        %v900 = vpop.permute.xlu0 %899
        %v902 = vmul.f32 %v896, %v900
        %v903 = vmul.f32 %v897, %v900
        %v904 = vadd.f32 %v874, %v902
        %v905 = vadd.f32 %v875, %v903
        %vm906 = vmand %vm815, %vm462
        %vm907 = vmand %vm906, %vm464
        %908 = vrot.lane.b32.xlu0 %v355, 111
        %v909 = vpop.permute.xlu0 %908
        %910 = vrot.lane.b32.xlu0 %v356, 111
        %v911 = vpop.permute.xlu0 %910
        %vm912 = vcmp.lt.s32.totalorder %v371, 111
        %v913 = vsel %vm912, %v909, %v911
        %v914 = vsel %vm912, %v911, %v909
        %v915 = vsel %vm907, 1, 0
        %v916 = vlaneseq
        %v917 = vshrl.u32 %v916, 7
        %v918 = vsub.s32 0, %v917
        %v919 = vrot.slane %v915, %v918
        %v920 = vlaneseq
        %v921 = vshrl.u32 %v920, 7
        %v922 = vsub.s32 1, %v921
        %v923 = vrot.slane %v915, %v922
        %vm924 = vcmp.eq.s32.totalorder %v919, 1
        %vm925 = vcmp.eq.s32.totalorder %v923, 1
        %v926 = vsel %vm924, %v913, 0.0
        %v927 = vsel %vm925, %v914, 0.0
        %928 = vset.pattern.permute.xlu0 36
        %929 = vperm.xlu0 %928, %v263
        %v930 = vpop.permute.xlu0 %929
        %v932 = vmul.f32 %v926, %v930
        %v933 = vmul.f32 %v927, %v930
        %v934 = vadd.f32 %v904, %v932
        %v935 = vadd.f32 %v905, %v933
        %vm936 = vmand %vm815, %vm495
        %vm937 = vmand %vm936, %vm497
        %938 = vrot.lane.b32.xlu0 %v355, 95
        %v939 = vpop.permute.xlu0 %938
        %940 = vrot.lane.b32.xlu0 %v356, 95
        %v941 = vpop.permute.xlu0 %940
        %vm942 = vcmp.lt.s32.totalorder %v371, 95
        %v943 = vsel %vm942, %v939, %v941
        %v944 = vsel %vm942, %v941, %v939
        %v945 = vsel %vm937, 1, 0
        %v946 = vlaneseq
        %v947 = vshrl.u32 %v946, 7
        %v948 = vsub.s32 0, %v947
        %v949 = vrot.slane %v945, %v948
        %v950 = vlaneseq
        %v951 = vshrl.u32 %v950, 7
        %v952 = vsub.s32 1, %v951
        %v953 = vrot.slane %v945, %v952
        %vm954 = vcmp.eq.s32.totalorder %v949, 1
        %vm955 = vcmp.eq.s32.totalorder %v953, 1
        %v956 = vsel %vm954, %v943, 0.0
        %v957 = vsel %vm955, %v944, 0.0
        %958 = vset.pattern.permute.xlu0 41
        %959 = vperm.xlu0 %958, %v263
        %v960 = vpop.permute.xlu0 %959
        %v962 = vmul.f32 %v956, %v960
        %v963 = vmul.f32 %v957, %v960
        %v964 = vadd.f32 %v934, %v962
        %v965 = vadd.f32 %v935, %v963
        %v966 = vadd.s32 %v262, 2
        %vm967 = vcmp.ge.s32.totalorder %v966, 0
        %vm968 = vcmp.lt.s32.totalorder %v966, 16
        %vm969 = vmand %vm967, %vm968
        %vm970 = vmand %vm969, %vm362
        %vm971 = vmand %vm970, %vm364
        %972 = vrot.lane.b32.xlu0 %v355, 30
        %v973 = vpop.permute.xlu0 %972
        %974 = vrot.lane.b32.xlu0 %v356, 30
        %v975 = vpop.permute.xlu0 %974
        %vm976 = vcmp.lt.s32.totalorder %v371, 30
        %v977 = vsel %vm976, %v973, %v975
        %v978 = vsel %vm976, %v975, %v973
        %v979 = vsel %vm971, 1, 0
        %v980 = vlaneseq
        %v981 = vshrl.u32 %v980, 7
        %v982 = vsub.s32 0, %v981
        %v983 = vrot.slane %v979, %v982
        %v984 = vlaneseq
        %v985 = vshrl.u32 %v984, 7
        %v986 = vsub.s32 1, %v985
        %v987 = vrot.slane %v979, %v986
        %vm988 = vcmp.eq.s32.totalorder %v983, 1
        %vm989 = vcmp.eq.s32.totalorder %v987, 1
        %v990 = vsel %vm988, %v978, 0.0
        %v991 = vsel %vm989, %v977, 0.0
        %992 = vset.pattern.permute.xlu0 22
        %993 = vperm.xlu0 %992, %v263
        %v994 = vpop.permute.xlu0 %993
        %v996 = vmul.f32 %v990, %v994
        %v997 = vmul.f32 %v991, %v994
        %v998 = vadd.f32 %v964, %v996
        %v999 = vadd.f32 %v965, %v997
        %vm1000 = vmand %vm969, %vm397
        %vm1001 = vmand %vm1000, %vm399
        %1002 = vrot.lane.b32.xlu0 %v355, 14
        %v1003 = vpop.permute.xlu0 %1002
        %1004 = vrot.lane.b32.xlu0 %v356, 14
        %v1005 = vpop.permute.xlu0 %1004
        %vm1006 = vcmp.lt.s32.totalorder %v371, 14
        %v1007 = vsel %vm1006, %v1003, %v1005
        %v1008 = vsel %vm1006, %v1005, %v1003
        %v1009 = vsel %vm1001, 1, 0
        %v1010 = vlaneseq
        %v1011 = vshrl.u32 %v1010, 7
        %v1012 = vsub.s32 0, %v1011
        %v1013 = vrot.slane %v1009, %v1012
        %v1014 = vlaneseq
        %v1015 = vshrl.u32 %v1014, 7
        %v1016 = vsub.s32 1, %v1015
        %v1017 = vrot.slane %v1009, %v1016
        %vm1018 = vcmp.eq.s32.totalorder %v1013, 1
        %vm1019 = vcmp.eq.s32.totalorder %v1017, 1
        %v1020 = vsel %vm1018, %v1008, 0.0
        %v1021 = vsel %vm1019, %v1007, 0.0
        %1022 = vset.pattern.permute.xlu0 27
        %1023 = vperm.xlu0 %1022, %v263
        %v1024 = vpop.permute.xlu0 %1023
        %v1026 = vmul.f32 %v1020, %v1024
        %v1027 = vmul.f32 %v1021, %v1024
        %v1028 = vadd.f32 %v998, %v1026
        %v1029 = vadd.f32 %v999, %v1027
        %vm1030 = vmand %vm969, %vm429
        %vm1031 = vmand %vm1030, %vm431
        %1032 = vrot.lane.b32.xlu0 %v355, 126
        %v1033 = vpop.permute.xlu0 %1032
        %1034 = vrot.lane.b32.xlu0 %v356, 126
        %v1035 = vpop.permute.xlu0 %1034
        %vm1036 = vcmp.lt.s32.totalorder %v371, 126
        %v1037 = vsel %vm1036, %v1033, %v1035
        %v1038 = vsel %vm1036, %v1035, %v1033
        %v1039 = vsel %vm1031, 1, 0
        %v1040 = vlaneseq
        %v1041 = vshrl.u32 %v1040, 7
        %v1042 = vsub.s32 0, %v1041
        %v1043 = vrot.slane %v1039, %v1042
        %v1044 = vlaneseq
        %v1045 = vshrl.u32 %v1044, 7
        %v1046 = vsub.s32 1, %v1045
        %v1047 = vrot.slane %v1039, %v1046
        %vm1048 = vcmp.eq.s32.totalorder %v1043, 1
        %vm1049 = vcmp.eq.s32.totalorder %v1047, 1
        %v1050 = vsel %vm1048, %v1037, 0.0
        %v1051 = vsel %vm1049, %v1038, 0.0
        %1052 = vset.pattern.permute.xlu0 32
        %1053 = vperm.xlu0 %1052, %v263
        %v1054 = vpop.permute.xlu0 %1053
        %v1056 = vmul.f32 %v1050, %v1054
        %v1057 = vmul.f32 %v1051, %v1054
        %v1058 = vadd.f32 %v1028, %v1056
        %v1059 = vadd.f32 %v1029, %v1057
        %vm1060 = vmand %vm969, %vm462
        %vm1061 = vmand %vm1060, %vm464
        %1062 = vrot.lane.b32.xlu0 %v355, 110
        %v1063 = vpop.permute.xlu0 %1062
        %1064 = vrot.lane.b32.xlu0 %v356, 110
        %v1065 = vpop.permute.xlu0 %1064
        %vm1066 = vcmp.lt.s32.totalorder %v371, 110
        %v1067 = vsel %vm1066, %v1063, %v1065
        %v1068 = vsel %vm1066, %v1065, %v1063
        %v1069 = vsel %vm1061, 1, 0
        %v1070 = vlaneseq
        %v1071 = vshrl.u32 %v1070, 7
        %v1072 = vsub.s32 0, %v1071
        %v1073 = vrot.slane %v1069, %v1072
        %v1074 = vlaneseq
        %v1075 = vshrl.u32 %v1074, 7
        %v1076 = vsub.s32 1, %v1075
        %v1077 = vrot.slane %v1069, %v1076
        %vm1078 = vcmp.eq.s32.totalorder %v1073, 1
        %vm1079 = vcmp.eq.s32.totalorder %v1077, 1
        %v1080 = vsel %vm1078, %v1067, 0.0
        %v1081 = vsel %vm1079, %v1068, 0.0
        %1082 = vset.pattern.permute.xlu0 37
        %1083 = vperm.xlu0 %1082, %v263
        %v1084 = vpop.permute.xlu0 %1083
        %v1086 = vmul.f32 %v1080, %v1084
        %v1087 = vmul.f32 %v1081, %v1084
        %v1088 = vadd.f32 %v1058, %v1086
        %v1089 = vadd.f32 %v1059, %v1087
        %vm1090 = vmand %vm969, %vm495
        %vm1091 = vmand %vm1090, %vm497
        %1092 = vrot.lane.b32.xlu0 %v355, 94
        %v1093 = vpop.permute.xlu0 %1092
        %1094 = vrot.lane.b32.xlu0 %v356, 94
        %v1095 = vpop.permute.xlu0 %1094
        %vm1096 = vcmp.lt.s32.totalorder %v371, 94
        %v1097 = vsel %vm1096, %v1093, %v1095
        %v1098 = vsel %vm1096, %v1095, %v1093
        %v1099 = vsel %vm1091, 1, 0
        %v1100 = vlaneseq
        %v1101 = vshrl.u32 %v1100, 7
        %v1102 = vsub.s32 0, %v1101
        %v1103 = vrot.slane %v1099, %v1102
        %v1104 = vlaneseq
        %v1105 = vshrl.u32 %v1104, 7
        %v1106 = vsub.s32 1, %v1105
        %v1107 = vrot.slane %v1099, %v1106
        %vm1108 = vcmp.eq.s32.totalorder %v1103, 1
        %vm1109 = vcmp.eq.s32.totalorder %v1107, 1
        %v1110 = vsel %vm1108, %v1097, 0.0
        %v1111 = vsel %vm1109, %v1098, 0.0
        %1112 = vset.pattern.permute.xlu0 42
        %1113 = vperm.xlu0 %1112, %v263
        %v1114 = vpop.permute.xlu0 %1113
        %v1116 = vmul.f32 %v1110, %v1114
        %v1117 = vmul.f32 %v1111, %v1114
        %v1118 = vadd.f32 %v1088, %v1116
        %v1119 = vadd.f32 %v1089, %v1117
        %1120 = vset.pattern.permute.xlu0 17
        %1121 = vperm.xlu0 %1120, %v263
        %v1122 = vpop.permute.xlu0 %1121
        %v1124 = vadd.f32 %v1118, %v1122
        %v1125 = vadd.f32 %v1119, %v1122
        %v1126 = vlaneseq
        %v1127 = vshrl.u32 %v1126, 7
        %vm1128 = vcmp.ge.s32.totalorder %v1127, 4
        %v1129 = vxor.u32 %v1124, 2147483648
        %v1130 = vxor.u32 %v1125, 2147483648
        %v1131 = vmul.f32 %v1129, 1.442695
        %v1132 = vpow.pop %v1131
        %v1133 = vmul.f32 %v1130, 1.442695
        %v1134 = vpow.pop %v1133
        %v1135 = vadd.f32 %v1132, 1.0
        %v1136 = vadd.f32 %v1134, 1.0
        %v1137 = vrcp.pop %v1135
        %v1138 = vmul.f32 1.0, %v1137
        %v1139 = vrcp.pop %v1136
        %v1140 = vmul.f32 1.0, %v1139
        %v1141 = vmul.f32 %v1124, %v1138
        %v1142 = vmul.f32 %v1125, %v1140
        %v1143 = vsel %vm1128, 1, 0
        %vm1144 = vcmp.eq.s32.totalorder %v1143, 1
        %v1145 = vsel %vm1144, %v1141, %v1124
        %v1146 = vsel %vm1144, %v1142, %v1125
        %v1147 = vld [vmem:[#allocation8] sm:$0xff]
        %v1148 = vld [vmem:[#allocation8 + $0x8] sm:$0xff]
        %1150 = vset.pattern.permute.xlu0 8
        %1151 = vperm.xlu0 %1150, %v1147
        %v1152 = vpop.permute.xlu0 %1151
        %1155 = vset.pattern.permute.xlu0 8
        %1156 = vperm.xlu0 %1155, %v1148
        %v1157 = vpop.permute.xlu0 %1156
        %vm1159 = vcmask 64512
        %v1160 = vsel %vm1159, %v1147, 0
        %v1162 = vsel %vm1159, %v1148, 0
        %1164 = vmatprep.subr.mxu0 0.0
        %1165 = vmatpush1.msra.mxu0 0.0
        %1166 = vmatprep.subr.mxu0 0.0
        %1167 = vmatpush1.msra.mxu0 0.0
        %1168 = vmatprep.subr.mxu0 0.0
        %1169 = vmatpush1.msra.mxu0 0.0
        %1170 = vmatprep.subr.mxu0 0.0
        %1171 = vmatpush1.msra.mxu0 0.0
        %1172 = vmatprep.subr.mxu0 0.0
        %1173 = vmatpush1.msra.mxu0 0.0
        %1174 = vmatprep.subr.mxu0 0.0
        %1175 = vmatpush1.msra.mxu0 0.0
        %1176 = vmatprep.subr.mxu0 0.0
        %1177 = vmatpush1.msra.mxu0 0.0
        %1178 = vmatprep.subr.mxu0 0.0
        %1179 = vmatpush1.msra.mxu0 0.0
        %1180 = vmatprep.subr.mxu0 0.0
        %1181 = vmatpush1.msra.mxu0 0.0
        %1182 = vmatprep.subr.mxu0 0.0
        %1183 = vmatpush1.msra.mxu0 0.0
        %1184 = vmatprep.subr.mxu0 0.0
        %1185 = vmatpush1.msra.mxu0 0.0
        %1186 = vmatprep.subr.mxu0 0.0
        %1187 = vmatpush1.msra.mxu0 0.0
        %1188 = vmatprep.subr.mxu0 0.0
        %1189 = vmatpush1.msra.mxu0 0.0
        %1190 = vmatprep.subr.mxu0 0.0
        %1191 = vmatpush1.msra.mxu0 0.0
        %1192 = vmatprep.subr.mxu0 0.0
        %1193 = vmatpush1.msra.mxu0 0.0
        %1194 = vmatprep.subr.mxu0 %v1146
        %1195 = vmatpush1.msra.mxu0 %v1145
        %1196 = vmatprep.subr.mxu0 0.0
        %1197 = vmatpush2.msra.mxu0 0.0
        %1198 = vmatprep.subr.mxu0 0.0
        %1199 = vmatpush2.msra.mxu0 0.0
        %1200 = vmatprep.subr.mxu0 0.0
        %1201 = vmatpush2.msra.mxu0 0.0
        %1202 = vmatprep.subr.mxu0 0.0
        %1203 = vmatpush2.msra.mxu0 0.0
        %1204 = vmatprep.subr.mxu0 0.0
        %1205 = vmatpush2.msra.mxu0 0.0
        %1206 = vmatprep.subr.mxu0 0.0
        %1207 = vmatpush2.msra.mxu0 0.0
        %1208 = vmatprep.subr.mxu0 0.0
        %1209 = vmatpush2.msra.mxu0 0.0
        %1210 = vmatprep.subr.mxu0 0.0
        %1211 = vmatpush2.msra.mxu0 0.0
        %1212 = vmatprep.subr.mxu0 0.0
        %1213 = vmatpush2.msra.mxu0 0.0
        %1214 = vmatprep.subr.mxu0 0.0
        %1215 = vmatpush2.msra.mxu0 0.0
        %1216 = vmatprep.subr.mxu0 0.0
        %1217 = vmatpush2.msra.mxu0 0.0
        %1218 = vmatprep.subr.mxu0 0.0
        %1219 = vmatpush2.msra.mxu0 0.0
        %1220 = vmatprep.subr.mxu0 0.0
        %1221 = vmatpush2.msra.mxu0 0.0
        %1222 = vmatprep.subr.mxu0 0.0
        %1223 = vmatpush2.msra.mxu0 0.0
        %1224 = vmatprep.subr.mxu0 0.0
        %1225 = vmatpush2.msra.mxu0 0.0
        %1226 = vmatprep.subr.mxu0 0.0
        %1227 = vmatpush2.msra.mxu0 0.0
        %1228 = vmatprep.mubr.f32.mxu0 0.0
        %1229 = vmatmul.mubr.f32.gmra.mxu0 %v1160
        %v1230 = vpop.f32.mrf.mxu0
        %v1231 = vadd.f32 %v1152, %v1230
        %v1232 = vpop.f32.mrf.mxu0
        %v1233 = vadd.f32 %v1152, %v1232
        %1234 = vmatprep.mubr.f32.mxu0 0.0
        %1235 = vmatmul.mubr.f32.gmra.mxu0 %v1162
        %v1236 = vpop.f32.mrf.mxu0
        %v1237 = vadd.f32 %v1157, %v1236
        %v1238 = vpop.f32.mrf.mxu0
        %v1239 = vadd.f32 %v1157, %v1238
        %1240 = vdwg.mxu0
        %1241 = vrot.lane.b32.xlu0 %v1231, 34
        %v1242 = vpop.permute.xlu0 %1241
        %1243 = vrot.lane.b32.xlu0 %v1237, 34
        %v1244 = vpop.permute.xlu0 %1243
        %1245 = vrot.lane.b32.xlu0 %v1233, 34
        %v1246 = vpop.permute.xlu0 %1245
        %1247 = vrot.lane.b32.xlu0 %v1239, 34
        %v1248 = vpop.permute.xlu0 %1247
        %v1249 = vsel %vm372, %v1242, %v1246
        %v1250 = vsel %vm372, %v1244, %v1248
        %v1251 = vsel %vm372, %v1246, %v1242
        %v1252 = vsel %vm372, %v1248, %v1244
        %v1253 = vsel %vm384, %v1251, 0.0
        %v1254 = vsel %vm385, %v1249, 0.0
        %v1255 = vsel %vm384, %v1252, 0.0
        %v1256 = vsel %vm385, %v1250, 0.0
        %1257 = vset.pattern.permute.xlu0 10
        %1258 = vperm.xlu0 %1257, %v1147
        %v1259 = vpop.permute.xlu0 %1258
        %1261 = vset.pattern.permute.xlu0 10
        %1262 = vperm.xlu0 %1261, %v1148
        %v1263 = vpop.permute.xlu0 %1262
        %v1265 = vmul.f32 %v1253, %v1259
        %v1266 = vmul.f32 %v1254, %v1259
        %v1267 = vmul.f32 %v1255, %v1263
        %v1268 = vmul.f32 %v1256, %v1263
        %v1269 = vadd.f32 %v1265, 0.0
        %v1270 = vadd.f32 %v1266, 0.0
        %v1271 = vadd.f32 %v1267, 0.0
        %v1272 = vadd.f32 %v1268, 0.0
        %1273 = vrot.lane.b32.xlu0 %v1231, 18
        %v1274 = vpop.permute.xlu0 %1273
        %1275 = vrot.lane.b32.xlu0 %v1237, 18
        %v1276 = vpop.permute.xlu0 %1275
        %1277 = vrot.lane.b32.xlu0 %v1233, 18
        %v1278 = vpop.permute.xlu0 %1277
        %1279 = vrot.lane.b32.xlu0 %v1239, 18
        %v1280 = vpop.permute.xlu0 %1279
        %v1281 = vsel %vm405, %v1274, %v1278
        %v1282 = vsel %vm405, %v1276, %v1280
        %v1283 = vsel %vm405, %v1278, %v1274
        %v1284 = vsel %vm405, %v1280, %v1276
        %v1285 = vsel %vm417, %v1283, 0.0
        %v1286 = vsel %vm418, %v1281, 0.0
        %v1287 = vsel %vm417, %v1284, 0.0
        %v1288 = vsel %vm418, %v1282, 0.0
        %1289 = vset.pattern.permute.xlu0 15
        %1290 = vperm.xlu0 %1289, %v1147
        %v1291 = vpop.permute.xlu0 %1290
        %1293 = vset.pattern.permute.xlu0 15
        %1294 = vperm.xlu0 %1293, %v1148
        %v1295 = vpop.permute.xlu0 %1294
        %v1297 = vmul.f32 %v1285, %v1291
        %v1298 = vmul.f32 %v1286, %v1291
        %v1299 = vmul.f32 %v1287, %v1295
        %v1300 = vmul.f32 %v1288, %v1295
        %v1301 = vadd.f32 %v1269, %v1297
        %v1302 = vadd.f32 %v1270, %v1298
        %v1303 = vadd.f32 %v1271, %v1299
        %v1304 = vadd.f32 %v1272, %v1300
        %1305 = vrot.lane.b32.xlu0 %v1231, 2
        %v1306 = vpop.permute.xlu0 %1305
        %1307 = vrot.lane.b32.xlu0 %v1237, 2
        %v1308 = vpop.permute.xlu0 %1307
        %1309 = vrot.lane.b32.xlu0 %v1233, 2
        %v1310 = vpop.permute.xlu0 %1309
        %1311 = vrot.lane.b32.xlu0 %v1239, 2
        %v1312 = vpop.permute.xlu0 %1311
        %v1313 = vsel %vm437, %v1306, %v1310
        %v1314 = vsel %vm437, %v1308, %v1312
        %v1315 = vsel %vm437, %v1310, %v1306
        %v1316 = vsel %vm437, %v1312, %v1308
        %v1317 = vsel %vm449, %v1315, 0.0
        %v1318 = vsel %vm450, %v1313, 0.0
        %v1319 = vsel %vm449, %v1316, 0.0
        %v1320 = vsel %vm450, %v1314, 0.0
        %1321 = vset.pattern.permute.xlu0 20
        %1322 = vperm.xlu0 %1321, %v1147
        %v1323 = vpop.permute.xlu0 %1322
        %1325 = vset.pattern.permute.xlu0 20
        %1326 = vperm.xlu0 %1325, %v1148
        %v1327 = vpop.permute.xlu0 %1326
        %v1329 = vmul.f32 %v1317, %v1323
        %v1330 = vmul.f32 %v1318, %v1323
        %v1331 = vmul.f32 %v1319, %v1327
        %v1332 = vmul.f32 %v1320, %v1327
        %v1333 = vadd.f32 %v1301, %v1329
        %v1334 = vadd.f32 %v1302, %v1330
        %v1335 = vadd.f32 %v1303, %v1331
        %v1336 = vadd.f32 %v1304, %v1332
        %1337 = vrot.lane.b32.xlu0 %v1231, 114
        %v1338 = vpop.permute.xlu0 %1337
        %1339 = vrot.lane.b32.xlu0 %v1237, 114
        %v1340 = vpop.permute.xlu0 %1339
        %1341 = vrot.lane.b32.xlu0 %v1233, 114
        %v1342 = vpop.permute.xlu0 %1341
        %1343 = vrot.lane.b32.xlu0 %v1239, 114
        %v1344 = vpop.permute.xlu0 %1343
        %v1345 = vsel %vm470, %v1338, %v1342
        %v1346 = vsel %vm470, %v1340, %v1344
        %v1347 = vsel %vm470, %v1342, %v1338
        %v1348 = vsel %vm470, %v1344, %v1340
        %v1349 = vsel %vm482, %v1345, 0.0
        %v1350 = vsel %vm483, %v1347, 0.0
        %v1351 = vsel %vm482, %v1346, 0.0
        %v1352 = vsel %vm483, %v1348, 0.0
        %1353 = vset.pattern.permute.xlu0 25
        %1354 = vperm.xlu0 %1353, %v1147
        %v1355 = vpop.permute.xlu0 %1354
        %1357 = vset.pattern.permute.xlu0 25
        %1358 = vperm.xlu0 %1357, %v1148
        %v1359 = vpop.permute.xlu0 %1358
        %v1361 = vmul.f32 %v1349, %v1355
        %v1362 = vmul.f32 %v1350, %v1355
        %v1363 = vmul.f32 %v1351, %v1359
        %v1364 = vmul.f32 %v1352, %v1359
        %v1365 = vadd.f32 %v1333, %v1361
        %v1366 = vadd.f32 %v1334, %v1362
        %v1367 = vadd.f32 %v1335, %v1363
        %v1368 = vadd.f32 %v1336, %v1364
        %1369 = vrot.lane.b32.xlu0 %v1231, 98
        %v1370 = vpop.permute.xlu0 %1369
        %1371 = vrot.lane.b32.xlu0 %v1237, 98
        %v1372 = vpop.permute.xlu0 %1371
        %1373 = vrot.lane.b32.xlu0 %v1233, 98
        %v1374 = vpop.permute.xlu0 %1373
        %1375 = vrot.lane.b32.xlu0 %v1239, 98
        %v1376 = vpop.permute.xlu0 %1375
        %v1377 = vsel %vm503, %v1370, %v1374
        %v1378 = vsel %vm503, %v1372, %v1376
        %v1379 = vsel %vm503, %v1374, %v1370
        %v1380 = vsel %vm503, %v1376, %v1372
        %v1381 = vsel %vm515, %v1377, 0.0
        %v1382 = vsel %vm516, %v1379, 0.0
        %v1383 = vsel %vm515, %v1378, 0.0
        %v1384 = vsel %vm516, %v1380, 0.0
        %1385 = vset.pattern.permute.xlu0 30
        %1386 = vperm.xlu0 %1385, %v1147
        %v1387 = vpop.permute.xlu0 %1386
        %1389 = vset.pattern.permute.xlu0 30
        %1390 = vperm.xlu0 %1389, %v1148
        %v1391 = vpop.permute.xlu0 %1390
        %v1393 = vmul.f32 %v1381, %v1387
        %v1394 = vmul.f32 %v1382, %v1387
        %v1395 = vmul.f32 %v1383, %v1391
        %v1396 = vmul.f32 %v1384, %v1391
        %v1397 = vadd.f32 %v1365, %v1393
        %v1398 = vadd.f32 %v1366, %v1394
        %v1399 = vadd.f32 %v1367, %v1395
        %v1400 = vadd.f32 %v1368, %v1396
        %1401 = vrot.lane.b32.xlu0 %v1231, 33
        %v1402 = vpop.permute.xlu0 %1401
        %1403 = vrot.lane.b32.xlu0 %v1237, 33
        %v1404 = vpop.permute.xlu0 %1403
        %1405 = vrot.lane.b32.xlu0 %v1233, 33
        %v1406 = vpop.permute.xlu0 %1405
        %1407 = vrot.lane.b32.xlu0 %v1239, 33
        %v1408 = vpop.permute.xlu0 %1407
        %v1409 = vsel %vm537, %v1402, %v1406
        %v1410 = vsel %vm537, %v1404, %v1408
        %v1411 = vsel %vm537, %v1406, %v1402
        %v1412 = vsel %vm537, %v1408, %v1404
        %v1413 = vsel %vm549, %v1411, 0.0
        %v1414 = vsel %vm550, %v1409, 0.0
        %v1415 = vsel %vm549, %v1412, 0.0
        %v1416 = vsel %vm550, %v1410, 0.0
        %1417 = vset.pattern.permute.xlu0 11
        %1418 = vperm.xlu0 %1417, %v1147
        %v1419 = vpop.permute.xlu0 %1418
        %1421 = vset.pattern.permute.xlu0 11
        %1422 = vperm.xlu0 %1421, %v1148
        %v1423 = vpop.permute.xlu0 %1422
        %v1425 = vmul.f32 %v1413, %v1419
        %v1426 = vmul.f32 %v1414, %v1419
        %v1427 = vmul.f32 %v1415, %v1423
        %v1428 = vmul.f32 %v1416, %v1423
        %v1429 = vadd.f32 %v1397, %v1425
        %v1430 = vadd.f32 %v1398, %v1426
        %v1431 = vadd.f32 %v1399, %v1427
        %v1432 = vadd.f32 %v1400, %v1428
        %1433 = vrot.lane.b32.xlu0 %v1231, 17
        %v1434 = vpop.permute.xlu0 %1433
        %1435 = vrot.lane.b32.xlu0 %v1237, 17
        %v1436 = vpop.permute.xlu0 %1435
        %1437 = vrot.lane.b32.xlu0 %v1233, 17
        %v1438 = vpop.permute.xlu0 %1437
        %1439 = vrot.lane.b32.xlu0 %v1239, 17
        %v1440 = vpop.permute.xlu0 %1439
        %v1441 = vsel %vm567, %v1434, %v1438
        %v1442 = vsel %vm567, %v1436, %v1440
        %v1443 = vsel %vm567, %v1438, %v1434
        %v1444 = vsel %vm567, %v1440, %v1436
        %v1445 = vsel %vm579, %v1443, 0.0
        %v1446 = vsel %vm580, %v1441, 0.0
        %v1447 = vsel %vm579, %v1444, 0.0
        %v1448 = vsel %vm580, %v1442, 0.0
        %1449 = vset.pattern.permute.xlu0 16
        %1450 = vperm.xlu0 %1449, %v1147
        %v1451 = vpop.permute.xlu0 %1450
        %1453 = vset.pattern.permute.xlu0 16
        %1454 = vperm.xlu0 %1453, %v1148
        %v1455 = vpop.permute.xlu0 %1454
        %v1457 = vmul.f32 %v1445, %v1451
        %v1458 = vmul.f32 %v1446, %v1451
        %v1459 = vmul.f32 %v1447, %v1455
        %v1460 = vmul.f32 %v1448, %v1455
        %v1461 = vadd.f32 %v1429, %v1457
        %v1462 = vadd.f32 %v1430, %v1458
        %v1463 = vadd.f32 %v1431, %v1459
        %v1464 = vadd.f32 %v1432, %v1460
        %1465 = vrot.lane.b32.xlu0 %v1231, 1
        %v1466 = vpop.permute.xlu0 %1465
        %1467 = vrot.lane.b32.xlu0 %v1237, 1
        %v1468 = vpop.permute.xlu0 %1467
        %1469 = vrot.lane.b32.xlu0 %v1233, 1
        %v1470 = vpop.permute.xlu0 %1469
        %1471 = vrot.lane.b32.xlu0 %v1239, 1
        %v1472 = vpop.permute.xlu0 %1471
        %v1473 = vsel %vm597, %v1466, %v1470
        %v1474 = vsel %vm597, %v1468, %v1472
        %v1475 = vsel %vm597, %v1470, %v1466
        %v1476 = vsel %vm597, %v1472, %v1468
        %v1477 = vsel %vm609, %v1475, 0.0
        %v1478 = vsel %vm610, %v1473, 0.0
        %v1479 = vsel %vm609, %v1476, 0.0
        %v1480 = vsel %vm610, %v1474, 0.0
        %1481 = vset.pattern.permute.xlu0 21
        %1482 = vperm.xlu0 %1481, %v1147
        %v1483 = vpop.permute.xlu0 %1482
        %1485 = vset.pattern.permute.xlu0 21
        %1486 = vperm.xlu0 %1485, %v1148
        %v1487 = vpop.permute.xlu0 %1486
        %v1489 = vmul.f32 %v1477, %v1483
        %v1490 = vmul.f32 %v1478, %v1483
        %v1491 = vmul.f32 %v1479, %v1487
        %v1492 = vmul.f32 %v1480, %v1487
        %v1493 = vadd.f32 %v1461, %v1489
        %v1494 = vadd.f32 %v1462, %v1490
        %v1495 = vadd.f32 %v1463, %v1491
        %v1496 = vadd.f32 %v1464, %v1492
        %1497 = vrot.lane.b32.xlu0 %v1231, 113
        %v1498 = vpop.permute.xlu0 %1497
        %1499 = vrot.lane.b32.xlu0 %v1237, 113
        %v1500 = vpop.permute.xlu0 %1499
        %1501 = vrot.lane.b32.xlu0 %v1233, 113
        %v1502 = vpop.permute.xlu0 %1501
        %1503 = vrot.lane.b32.xlu0 %v1239, 113
        %v1504 = vpop.permute.xlu0 %1503
        %v1505 = vsel %vm627, %v1498, %v1502
        %v1506 = vsel %vm627, %v1500, %v1504
        %v1507 = vsel %vm627, %v1502, %v1498
        %v1508 = vsel %vm627, %v1504, %v1500
        %v1509 = vsel %vm639, %v1505, 0.0
        %v1510 = vsel %vm640, %v1507, 0.0
        %v1511 = vsel %vm639, %v1506, 0.0
        %v1512 = vsel %vm640, %v1508, 0.0
        %1513 = vset.pattern.permute.xlu0 26
        %1514 = vperm.xlu0 %1513, %v1147
        %v1515 = vpop.permute.xlu0 %1514
        %1517 = vset.pattern.permute.xlu0 26
        %1518 = vperm.xlu0 %1517, %v1148
        %v1519 = vpop.permute.xlu0 %1518
        %v1521 = vmul.f32 %v1509, %v1515
        %v1522 = vmul.f32 %v1510, %v1515
        %v1523 = vmul.f32 %v1511, %v1519
        %v1524 = vmul.f32 %v1512, %v1519
        %v1525 = vadd.f32 %v1493, %v1521
        %v1526 = vadd.f32 %v1494, %v1522
        %v1527 = vadd.f32 %v1495, %v1523
        %v1528 = vadd.f32 %v1496, %v1524
        %1529 = vrot.lane.b32.xlu0 %v1231, 97
        %v1530 = vpop.permute.xlu0 %1529
        %1531 = vrot.lane.b32.xlu0 %v1237, 97
        %v1532 = vpop.permute.xlu0 %1531
        %1533 = vrot.lane.b32.xlu0 %v1233, 97
        %v1534 = vpop.permute.xlu0 %1533
        %1535 = vrot.lane.b32.xlu0 %v1239, 97
        %v1536 = vpop.permute.xlu0 %1535
        %v1537 = vsel %vm657, %v1530, %v1534
        %v1538 = vsel %vm657, %v1532, %v1536
        %v1539 = vsel %vm657, %v1534, %v1530
        %v1540 = vsel %vm657, %v1536, %v1532
        %v1541 = vsel %vm669, %v1537, 0.0
        %v1542 = vsel %vm670, %v1539, 0.0
        %v1543 = vsel %vm669, %v1538, 0.0
        %v1544 = vsel %vm670, %v1540, 0.0
        %1545 = vset.pattern.permute.xlu0 31
        %1546 = vperm.xlu0 %1545, %v1147
        %v1547 = vpop.permute.xlu0 %1546
        %1549 = vset.pattern.permute.xlu0 31
        %1550 = vperm.xlu0 %1549, %v1148
        %v1551 = vpop.permute.xlu0 %1550
        %v1553 = vmul.f32 %v1541, %v1547
        %v1554 = vmul.f32 %v1542, %v1547
        %v1555 = vmul.f32 %v1543, %v1551
        %v1556 = vmul.f32 %v1544, %v1551
        %v1557 = vadd.f32 %v1525, %v1553
        %v1558 = vadd.f32 %v1526, %v1554
        %v1559 = vadd.f32 %v1527, %v1555
        %v1560 = vadd.f32 %v1528, %v1556
        %1561 = vrot.lane.b32.xlu0 %v1231, 32
        %v1562 = vpop.permute.xlu0 %1561
        %1563 = vrot.lane.b32.xlu0 %v1237, 32
        %v1564 = vpop.permute.xlu0 %1563
        %1565 = vrot.lane.b32.xlu0 %v1233, 32
        %v1566 = vpop.permute.xlu0 %1565
        %1567 = vrot.lane.b32.xlu0 %v1239, 32
        %v1568 = vpop.permute.xlu0 %1567
        %v1569 = vsel %vm690, %v1562, %v1566
        %v1570 = vsel %vm690, %v1564, %v1568
        %v1571 = vsel %vm690, %v1566, %v1562
        %v1572 = vsel %vm690, %v1568, %v1564
        %v1573 = vsel %vm702, %v1571, 0.0
        %v1574 = vsel %vm703, %v1569, 0.0
        %v1575 = vsel %vm702, %v1572, 0.0
        %v1576 = vsel %vm703, %v1570, 0.0
        %1577 = vset.pattern.permute.xlu0 12
        %1578 = vperm.xlu0 %1577, %v1147
        %v1579 = vpop.permute.xlu0 %1578
        %1581 = vset.pattern.permute.xlu0 12
        %1582 = vperm.xlu0 %1581, %v1148
        %v1583 = vpop.permute.xlu0 %1582
        %v1585 = vmul.f32 %v1573, %v1579
        %v1586 = vmul.f32 %v1574, %v1579
        %v1587 = vmul.f32 %v1575, %v1583
        %v1588 = vmul.f32 %v1576, %v1583
        %v1589 = vadd.f32 %v1557, %v1585
        %v1590 = vadd.f32 %v1558, %v1586
        %v1591 = vadd.f32 %v1559, %v1587
        %v1592 = vadd.f32 %v1560, %v1588
        %1593 = vrot.lane.b32.xlu0 %v1231, 16
        %v1594 = vpop.permute.xlu0 %1593
        %1595 = vrot.lane.b32.xlu0 %v1237, 16
        %v1596 = vpop.permute.xlu0 %1595
        %1597 = vrot.lane.b32.xlu0 %v1233, 16
        %v1598 = vpop.permute.xlu0 %1597
        %1599 = vrot.lane.b32.xlu0 %v1239, 16
        %v1600 = vpop.permute.xlu0 %1599
        %v1601 = vsel %vm720, %v1594, %v1598
        %v1602 = vsel %vm720, %v1596, %v1600
        %v1603 = vsel %vm720, %v1598, %v1594
        %v1604 = vsel %vm720, %v1600, %v1596
        %v1605 = vsel %vm732, %v1603, 0.0
        %v1606 = vsel %vm733, %v1601, 0.0
        %v1607 = vsel %vm732, %v1604, 0.0
        %v1608 = vsel %vm733, %v1602, 0.0
        %1609 = vset.pattern.permute.xlu0 17
        %1610 = vperm.xlu0 %1609, %v1147
        %v1611 = vpop.permute.xlu0 %1610
        %1613 = vset.pattern.permute.xlu0 17
        %1614 = vperm.xlu0 %1613, %v1148
        %v1615 = vpop.permute.xlu0 %1614
        %v1617 = vmul.f32 %v1605, %v1611
        %v1618 = vmul.f32 %v1606, %v1611
        %v1619 = vmul.f32 %v1607, %v1615
        %v1620 = vmul.f32 %v1608, %v1615
        %v1621 = vadd.f32 %v1589, %v1617
        %v1622 = vadd.f32 %v1590, %v1618
        %v1623 = vadd.f32 %v1591, %v1619
        %v1624 = vadd.f32 %v1592, %v1620
        %1625 = vset.pattern.permute.xlu0 22
        %1626 = vperm.xlu0 %1625, %v1147
        %v1627 = vpop.permute.xlu0 %1626
        %1629 = vset.pattern.permute.xlu0 22
        %1630 = vperm.xlu0 %1629, %v1148
        %v1631 = vpop.permute.xlu0 %1630
        %v1633 = vmul.f32 %v1231, %v1627
        %v1634 = vmul.f32 %v1233, %v1627
        %v1635 = vmul.f32 %v1237, %v1631
        %v1636 = vmul.f32 %v1239, %v1631
        %v1637 = vadd.f32 %v1621, %v1633
        %v1638 = vadd.f32 %v1622, %v1634
        %v1639 = vadd.f32 %v1623, %v1635
        %v1640 = vadd.f32 %v1624, %v1636
        %1641 = vrot.lane.b32.xlu0 %v1231, 112
        %v1642 = vpop.permute.xlu0 %1641
        %1643 = vrot.lane.b32.xlu0 %v1237, 112
        %v1644 = vpop.permute.xlu0 %1643
        %1645 = vrot.lane.b32.xlu0 %v1233, 112
        %v1646 = vpop.permute.xlu0 %1645
        %1647 = vrot.lane.b32.xlu0 %v1239, 112
        %v1648 = vpop.permute.xlu0 %1647
        %v1649 = vsel %vm758, %v1642, %v1646
        %v1650 = vsel %vm758, %v1644, %v1648
        %v1651 = vsel %vm758, %v1646, %v1642
        %v1652 = vsel %vm758, %v1648, %v1644
        %v1653 = vsel %vm770, %v1649, 0.0
        %v1654 = vsel %vm771, %v1651, 0.0
        %v1655 = vsel %vm770, %v1650, 0.0
        %v1656 = vsel %vm771, %v1652, 0.0
        %1657 = vset.pattern.permute.xlu0 27
        %1658 = vperm.xlu0 %1657, %v1147
        %v1659 = vpop.permute.xlu0 %1658
        %1661 = vset.pattern.permute.xlu0 27
        %1662 = vperm.xlu0 %1661, %v1148
        %v1663 = vpop.permute.xlu0 %1662
        %v1665 = vmul.f32 %v1653, %v1659
        %v1666 = vmul.f32 %v1654, %v1659
        %v1667 = vmul.f32 %v1655, %v1663
        %v1668 = vmul.f32 %v1656, %v1663
        %v1669 = vadd.f32 %v1637, %v1665
        %v1670 = vadd.f32 %v1638, %v1666
        %v1671 = vadd.f32 %v1639, %v1667
        %v1672 = vadd.f32 %v1640, %v1668
        %1673 = vrot.lane.b32.xlu0 %v1231, 96
        %v1674 = vpop.permute.xlu0 %1673
        %1675 = vrot.lane.b32.xlu0 %v1237, 96
        %v1676 = vpop.permute.xlu0 %1675
        %1677 = vrot.lane.b32.xlu0 %v1233, 96
        %v1678 = vpop.permute.xlu0 %1677
        %1679 = vrot.lane.b32.xlu0 %v1239, 96
        %v1680 = vpop.permute.xlu0 %1679
        %v1681 = vsel %vm788, %v1674, %v1678
        %v1682 = vsel %vm788, %v1676, %v1680
        %v1683 = vsel %vm788, %v1678, %v1674
        %v1684 = vsel %vm788, %v1680, %v1676
        %v1685 = vsel %vm800, %v1681, 0.0
        %v1686 = vsel %vm801, %v1683, 0.0
        %v1687 = vsel %vm800, %v1682, 0.0
        %v1688 = vsel %vm801, %v1684, 0.0
        %1689 = vset.pattern.permute.xlu0 32
        %1690 = vperm.xlu0 %1689, %v1147
        %v1691 = vpop.permute.xlu0 %1690
        %1693 = vset.pattern.permute.xlu0 32
        %1694 = vperm.xlu0 %1693, %v1148
        %v1695 = vpop.permute.xlu0 %1694
        %v1697 = vmul.f32 %v1685, %v1691
        %v1698 = vmul.f32 %v1686, %v1691
        %v1699 = vmul.f32 %v1687, %v1695
        %v1700 = vmul.f32 %v1688, %v1695
        %v1701 = vadd.f32 %v1669, %v1697
        %v1702 = vadd.f32 %v1670, %v1698
        %v1703 = vadd.f32 %v1671, %v1699
        %v1704 = vadd.f32 %v1672, %v1700
        %1705 = vrot.lane.b32.xlu0 %v1231, 31
        %v1706 = vpop.permute.xlu0 %1705
        %1707 = vrot.lane.b32.xlu0 %v1237, 31
        %v1708 = vpop.permute.xlu0 %1707
        %1709 = vrot.lane.b32.xlu0 %v1233, 31
        %v1710 = vpop.permute.xlu0 %1709
        %1711 = vrot.lane.b32.xlu0 %v1239, 31
        %v1712 = vpop.permute.xlu0 %1711
        %v1713 = vsel %vm822, %v1706, %v1710
        %v1714 = vsel %vm822, %v1708, %v1712
        %v1715 = vsel %vm822, %v1710, %v1706
        %v1716 = vsel %vm822, %v1712, %v1708
        %v1717 = vsel %vm834, %v1715, 0.0
        %v1718 = vsel %vm835, %v1713, 0.0
        %v1719 = vsel %vm834, %v1716, 0.0
        %v1720 = vsel %vm835, %v1714, 0.0
        %1721 = vset.pattern.permute.xlu0 13
        %1722 = vperm.xlu0 %1721, %v1147
        %v1723 = vpop.permute.xlu0 %1722
        %1725 = vset.pattern.permute.xlu0 13
        %1726 = vperm.xlu0 %1725, %v1148
        %v1727 = vpop.permute.xlu0 %1726
        %v1729 = vmul.f32 %v1717, %v1723
        %v1730 = vmul.f32 %v1718, %v1723
        %v1731 = vmul.f32 %v1719, %v1727
        %v1732 = vmul.f32 %v1720, %v1727
        %v1733 = vadd.f32 %v1701, %v1729
        %v1734 = vadd.f32 %v1702, %v1730
        %v1735 = vadd.f32 %v1703, %v1731
        %v1736 = vadd.f32 %v1704, %v1732
        %1737 = vrot.lane.b32.xlu0 %v1231, 15
        %v1738 = vpop.permute.xlu0 %1737
        %1739 = vrot.lane.b32.xlu0 %v1237, 15
        %v1740 = vpop.permute.xlu0 %1739
        %1741 = vrot.lane.b32.xlu0 %v1233, 15
        %v1742 = vpop.permute.xlu0 %1741
        %1743 = vrot.lane.b32.xlu0 %v1239, 15
        %v1744 = vpop.permute.xlu0 %1743
        %v1745 = vsel %vm852, %v1738, %v1742
        %v1746 = vsel %vm852, %v1740, %v1744
        %v1747 = vsel %vm852, %v1742, %v1738
        %v1748 = vsel %vm852, %v1744, %v1740
        %v1749 = vsel %vm864, %v1747, 0.0
        %v1750 = vsel %vm865, %v1745, 0.0
        %v1751 = vsel %vm864, %v1748, 0.0
        %v1752 = vsel %vm865, %v1746, 0.0
        %1753 = vset.pattern.permute.xlu0 18
        %1754 = vperm.xlu0 %1753, %v1147
        %v1755 = vpop.permute.xlu0 %1754
        %1757 = vset.pattern.permute.xlu0 18
        %1758 = vperm.xlu0 %1757, %v1148
        %v1759 = vpop.permute.xlu0 %1758
        %v1761 = vmul.f32 %v1749, %v1755
        %v1762 = vmul.f32 %v1750, %v1755
        %v1763 = vmul.f32 %v1751, %v1759
        %v1764 = vmul.f32 %v1752, %v1759
        %v1765 = vadd.f32 %v1733, %v1761
        %v1766 = vadd.f32 %v1734, %v1762
        %v1767 = vadd.f32 %v1735, %v1763
        %v1768 = vadd.f32 %v1736, %v1764
        %1769 = vrot.lane.b32.xlu0 %v1231, 127
        %v1770 = vpop.permute.xlu0 %1769
        %1771 = vrot.lane.b32.xlu0 %v1237, 127
        %v1772 = vpop.permute.xlu0 %1771
        %1773 = vrot.lane.b32.xlu0 %v1233, 127
        %v1774 = vpop.permute.xlu0 %1773
        %1775 = vrot.lane.b32.xlu0 %v1239, 127
        %v1776 = vpop.permute.xlu0 %1775
        %v1777 = vsel %vm882, %v1770, %v1774
        %v1778 = vsel %vm882, %v1772, %v1776
        %v1779 = vsel %vm882, %v1774, %v1770
        %v1780 = vsel %vm882, %v1776, %v1772
        %v1781 = vsel %vm894, %v1777, 0.0
        %v1782 = vsel %vm895, %v1779, 0.0
        %v1783 = vsel %vm894, %v1778, 0.0
        %v1784 = vsel %vm895, %v1780, 0.0
        %1785 = vset.pattern.permute.xlu0 23
        %1786 = vperm.xlu0 %1785, %v1147
        %v1787 = vpop.permute.xlu0 %1786
        %1789 = vset.pattern.permute.xlu0 23
        %1790 = vperm.xlu0 %1789, %v1148
        %v1791 = vpop.permute.xlu0 %1790
        %v1793 = vmul.f32 %v1781, %v1787
        %v1794 = vmul.f32 %v1782, %v1787
        %v1795 = vmul.f32 %v1783, %v1791
        %v1796 = vmul.f32 %v1784, %v1791
        %v1797 = vadd.f32 %v1765, %v1793
        %v1798 = vadd.f32 %v1766, %v1794
        %v1799 = vadd.f32 %v1767, %v1795
        %v1800 = vadd.f32 %v1768, %v1796
        %1801 = vrot.lane.b32.xlu0 %v1231, 111
        %v1802 = vpop.permute.xlu0 %1801
        %1803 = vrot.lane.b32.xlu0 %v1237, 111
        %v1804 = vpop.permute.xlu0 %1803
        %1805 = vrot.lane.b32.xlu0 %v1233, 111
        %v1806 = vpop.permute.xlu0 %1805
        %1807 = vrot.lane.b32.xlu0 %v1239, 111
        %v1808 = vpop.permute.xlu0 %1807
        %v1809 = vsel %vm912, %v1802, %v1806
        %v1810 = vsel %vm912, %v1804, %v1808
        %v1811 = vsel %vm912, %v1806, %v1802
        %v1812 = vsel %vm912, %v1808, %v1804
        %v1813 = vsel %vm924, %v1809, 0.0
        %v1814 = vsel %vm925, %v1811, 0.0
        %v1815 = vsel %vm924, %v1810, 0.0
        %v1816 = vsel %vm925, %v1812, 0.0
        %1817 = vset.pattern.permute.xlu0 28
        %1818 = vperm.xlu0 %1817, %v1147
        %v1819 = vpop.permute.xlu0 %1818
        %1821 = vset.pattern.permute.xlu0 28
        %1822 = vperm.xlu0 %1821, %v1148
        %v1823 = vpop.permute.xlu0 %1822
        %v1825 = vmul.f32 %v1813, %v1819
        %v1826 = vmul.f32 %v1814, %v1819
        %v1827 = vmul.f32 %v1815, %v1823
        %v1828 = vmul.f32 %v1816, %v1823
        %v1829 = vadd.f32 %v1797, %v1825
        %v1830 = vadd.f32 %v1798, %v1826
        %v1831 = vadd.f32 %v1799, %v1827
        %v1832 = vadd.f32 %v1800, %v1828
        %1833 = vrot.lane.b32.xlu0 %v1231, 95
        %v1834 = vpop.permute.xlu0 %1833
        %1835 = vrot.lane.b32.xlu0 %v1237, 95
        %v1836 = vpop.permute.xlu0 %1835
        %1837 = vrot.lane.b32.xlu0 %v1233, 95
        %v1838 = vpop.permute.xlu0 %1837
        %1839 = vrot.lane.b32.xlu0 %v1239, 95
        %v1840 = vpop.permute.xlu0 %1839
        %v1841 = vsel %vm942, %v1834, %v1838
        %v1842 = vsel %vm942, %v1836, %v1840
        %v1843 = vsel %vm942, %v1838, %v1834
        %v1844 = vsel %vm942, %v1840, %v1836
        %v1845 = vsel %vm954, %v1841, 0.0
        %v1846 = vsel %vm955, %v1843, 0.0
        %v1847 = vsel %vm954, %v1842, 0.0
        %v1848 = vsel %vm955, %v1844, 0.0
        %1849 = vset.pattern.permute.xlu0 33
        %1850 = vperm.xlu0 %1849, %v1147
        %v1851 = vpop.permute.xlu0 %1850
        %1853 = vset.pattern.permute.xlu0 33
        %1854 = vperm.xlu0 %1853, %v1148
        %v1855 = vpop.permute.xlu0 %1854
        %v1857 = vmul.f32 %v1845, %v1851
        %v1858 = vmul.f32 %v1846, %v1851
        %v1859 = vmul.f32 %v1847, %v1855
        %v1860 = vmul.f32 %v1848, %v1855
        %v1861 = vadd.f32 %v1829, %v1857
        %v1862 = vadd.f32 %v1830, %v1858
        %v1863 = vadd.f32 %v1831, %v1859
        %v1864 = vadd.f32 %v1832, %v1860
        %1865 = vrot.lane.b32.xlu0 %v1231, 30
        %v1866 = vpop.permute.xlu0 %1865
        %1867 = vrot.lane.b32.xlu0 %v1237, 30
        %v1868 = vpop.permute.xlu0 %1867
        %1869 = vrot.lane.b32.xlu0 %v1233, 30
        %v1870 = vpop.permute.xlu0 %1869
        %1871 = vrot.lane.b32.xlu0 %v1239, 30
        %v1872 = vpop.permute.xlu0 %1871
        %v1873 = vsel %vm976, %v1866, %v1870
        %v1874 = vsel %vm976, %v1868, %v1872
        %v1875 = vsel %vm976, %v1870, %v1866
        %v1876 = vsel %vm976, %v1872, %v1868
        %v1877 = vsel %vm988, %v1875, 0.0
        %v1878 = vsel %vm989, %v1873, 0.0
        %v1879 = vsel %vm988, %v1876, 0.0
        %v1880 = vsel %vm989, %v1874, 0.0
        %1881 = vset.pattern.permute.xlu0 14
        %1882 = vperm.xlu0 %1881, %v1147
        %v1883 = vpop.permute.xlu0 %1882
        %1885 = vset.pattern.permute.xlu0 14
        %1886 = vperm.xlu0 %1885, %v1148
        %v1887 = vpop.permute.xlu0 %1886
        %v1889 = vmul.f32 %v1877, %v1883
        %v1890 = vmul.f32 %v1878, %v1883
        %v1891 = vmul.f32 %v1879, %v1887
        %v1892 = vmul.f32 %v1880, %v1887
        %v1893 = vadd.f32 %v1861, %v1889
        %v1894 = vadd.f32 %v1862, %v1890
        %v1895 = vadd.f32 %v1863, %v1891
        %v1896 = vadd.f32 %v1864, %v1892
        %1897 = vrot.lane.b32.xlu0 %v1231, 14
        %v1898 = vpop.permute.xlu0 %1897
        %1899 = vrot.lane.b32.xlu0 %v1237, 14
        %v1900 = vpop.permute.xlu0 %1899
        %1901 = vrot.lane.b32.xlu0 %v1233, 14
        %v1902 = vpop.permute.xlu0 %1901
        %1903 = vrot.lane.b32.xlu0 %v1239, 14
        %v1904 = vpop.permute.xlu0 %1903
        %v1905 = vsel %vm1006, %v1898, %v1902
        %v1906 = vsel %vm1006, %v1900, %v1904
        %v1907 = vsel %vm1006, %v1902, %v1898
        %v1908 = vsel %vm1006, %v1904, %v1900
        %v1909 = vsel %vm1018, %v1907, 0.0
        %v1910 = vsel %vm1019, %v1905, 0.0
        %v1911 = vsel %vm1018, %v1908, 0.0
        %v1912 = vsel %vm1019, %v1906, 0.0
        %1913 = vset.pattern.permute.xlu0 19
        %1914 = vperm.xlu0 %1913, %v1147
        %v1915 = vpop.permute.xlu0 %1914
        %1917 = vset.pattern.permute.xlu0 19
        %1918 = vperm.xlu0 %1917, %v1148
        %v1919 = vpop.permute.xlu0 %1918
        %v1921 = vmul.f32 %v1909, %v1915
        %v1922 = vmul.f32 %v1910, %v1915
        %v1923 = vmul.f32 %v1911, %v1919
        %v1924 = vmul.f32 %v1912, %v1919
        %v1925 = vadd.f32 %v1893, %v1921
        %v1926 = vadd.f32 %v1894, %v1922
        %v1927 = vadd.f32 %v1895, %v1923
        %v1928 = vadd.f32 %v1896, %v1924
        %1929 = vrot.lane.b32.xlu0 %v1231, 126
        %v1930 = vpop.permute.xlu0 %1929
        %1931 = vrot.lane.b32.xlu0 %v1237, 126
        %v1932 = vpop.permute.xlu0 %1931
        %1933 = vrot.lane.b32.xlu0 %v1233, 126
        %v1934 = vpop.permute.xlu0 %1933
        %1935 = vrot.lane.b32.xlu0 %v1239, 126
        %v1936 = vpop.permute.xlu0 %1935
        %v1937 = vsel %vm1036, %v1930, %v1934
        %v1938 = vsel %vm1036, %v1932, %v1936
        %v1939 = vsel %vm1036, %v1934, %v1930
        %v1940 = vsel %vm1036, %v1936, %v1932
        %v1941 = vsel %vm1048, %v1937, 0.0
        %v1942 = vsel %vm1049, %v1939, 0.0
        %v1943 = vsel %vm1048, %v1938, 0.0
        %v1944 = vsel %vm1049, %v1940, 0.0
        %1945 = vset.pattern.permute.xlu0 24
        %1946 = vperm.xlu0 %1945, %v1147
        %v1947 = vpop.permute.xlu0 %1946
        %1949 = vset.pattern.permute.xlu0 24
        %1950 = vperm.xlu0 %1949, %v1148
        %v1951 = vpop.permute.xlu0 %1950
        %v1953 = vmul.f32 %v1941, %v1947
        %v1954 = vmul.f32 %v1942, %v1947
        %v1955 = vmul.f32 %v1943, %v1951
        %v1956 = vmul.f32 %v1944, %v1951
        %v1957 = vadd.f32 %v1925, %v1953
        %v1958 = vadd.f32 %v1926, %v1954
        %v1959 = vadd.f32 %v1927, %v1955
        %v1960 = vadd.f32 %v1928, %v1956
        %1961 = vrot.lane.b32.xlu0 %v1231, 110
        %v1962 = vpop.permute.xlu0 %1961
        %1963 = vrot.lane.b32.xlu0 %v1237, 110
        %v1964 = vpop.permute.xlu0 %1963
        %1965 = vrot.lane.b32.xlu0 %v1233, 110
        %v1966 = vpop.permute.xlu0 %1965
        %1967 = vrot.lane.b32.xlu0 %v1239, 110
        %v1968 = vpop.permute.xlu0 %1967
        %v1969 = vsel %vm1066, %v1962, %v1966
        %v1970 = vsel %vm1066, %v1964, %v1968
        %v1971 = vsel %vm1066, %v1966, %v1962
        %v1972 = vsel %vm1066, %v1968, %v1964
        %v1973 = vsel %vm1078, %v1969, 0.0
        %v1974 = vsel %vm1079, %v1971, 0.0
        %v1975 = vsel %vm1078, %v1970, 0.0
        %v1976 = vsel %vm1079, %v1972, 0.0
        %1977 = vset.pattern.permute.xlu0 29
        %1978 = vperm.xlu0 %1977, %v1147
        %v1979 = vpop.permute.xlu0 %1978
        %1981 = vset.pattern.permute.xlu0 29
        %1982 = vperm.xlu0 %1981, %v1148
        %v1983 = vpop.permute.xlu0 %1982
        %v1985 = vmul.f32 %v1973, %v1979
        %v1986 = vmul.f32 %v1974, %v1979
        %v1987 = vmul.f32 %v1975, %v1983
        %v1988 = vmul.f32 %v1976, %v1983
        %v1989 = vadd.f32 %v1957, %v1985
        %v1990 = vadd.f32 %v1958, %v1986
        %v1991 = vadd.f32 %v1959, %v1987
        %v1992 = vadd.f32 %v1960, %v1988
        %1993 = vrot.lane.b32.xlu0 %v1231, 94
        %v1994 = vpop.permute.xlu0 %1993
        %1995 = vrot.lane.b32.xlu0 %v1237, 94
        %v1996 = vpop.permute.xlu0 %1995
        %1997 = vrot.lane.b32.xlu0 %v1233, 94
        %v1998 = vpop.permute.xlu0 %1997
        %1999 = vrot.lane.b32.xlu0 %v1239, 94
        %v2000 = vpop.permute.xlu0 %1999
        %v2001 = vsel %vm1096, %v1994, %v1998
        %v2002 = vsel %vm1096, %v1996, %v2000
        %v2003 = vsel %vm1096, %v1998, %v1994
        %v2004 = vsel %vm1096, %v2000, %v1996
        %v2005 = vsel %vm1108, %v2001, 0.0
        %v2006 = vsel %vm1109, %v2003, 0.0
        %v2007 = vsel %vm1108, %v2002, 0.0
        %v2008 = vsel %vm1109, %v2004, 0.0
        %2009 = vset.pattern.permute.xlu0 34
        %2010 = vperm.xlu0 %2009, %v1147
        %v2011 = vpop.permute.xlu0 %2010
        %2013 = vset.pattern.permute.xlu0 34
        %2014 = vperm.xlu0 %2013, %v1148
        %v2015 = vpop.permute.xlu0 %2014
        %v2017 = vmul.f32 %v2005, %v2011
        %v2018 = vmul.f32 %v2006, %v2011
        %v2019 = vmul.f32 %v2007, %v2015
        %v2020 = vmul.f32 %v2008, %v2015
        %v2021 = vadd.f32 %v1989, %v2017
        %v2022 = vadd.f32 %v1990, %v2018
        %v2023 = vadd.f32 %v1991, %v2019
        %v2024 = vadd.f32 %v1992, %v2020
        %2025 = vset.pattern.permute.xlu0 9
        %2026 = vperm.xlu0 %2025, %v1147
        %v2027 = vpop.permute.xlu0 %2026
        %2029 = vset.pattern.permute.xlu0 9
        %2030 = vperm.xlu0 %2029, %v1148
        %v2031 = vpop.permute.xlu0 %2030
        %v2033 = vadd.f32 %v2021, %v2027
        %v2034 = vadd.f32 %v2022, %v2027
        %v2035 = vadd.f32 %v2023, %v2031
        %v2036 = vadd.f32 %v2024, %v2031
        %v2037 = vadd.f32 %v2033, %v256
        %v2038 = vadd.f32 %v2034, %v257
        %v2039 = vadd.f32 %v2035, %v258
        %v2040 = vadd.f32 %v2036, %v259
        %2041 = vst [vmem:[%s255] sm:$0xff] %v2037
        %2042 = vst [vmem:[%s255 + $0x8] sm:$0xff] %v2038
        %2043 = vst [vmem:[%s255 + $0x10] sm:$0xff] %v2039
        %2044 = vst [vmem:[%s255 + $0x18] sm:$0xff] %v2040
        %s2045 = sand.u32 %s120, 1
        %s2046 = scalar_lea.sflag [#allocation4], %s2045
        %s2047 = sand.u32 %s120, 1
        %s2048 = smul.addr %s2047, 32
        %s2049 = scalar_lea.vmem [#allocation10], %s2048
        // Predicated region
        $region53: #{tpu_custom_call.1} parent=35 // pred_check
          %p2050 = pneg %p130
        $region54: #{tpu_custom_call.1} parent=35 // pred_check_branch
          %2052 = sbr.rel (%p2050) target = $region56
        $region55: #{tpu_custom_call.1} parent=35 // pred_region
          %s2054 = ssub.s32 512, 512
          %2055 = vsyncadd %s2046, %s2054
          %s2056 = smul.addr %s23, 4
          %s2057 = smul.addr %s2056, 128
          %s2058 = scalar_lea.hbm %s4, %s2057
          %s2059 = sshll.u32 %s2049, 4
          %s2060 = int_to_ptr.vmem [resolvable:$true] %s2059
          %2065 = dma.vmem_to_hbm [thread:$0]  %s2060, 512, %s2058, %s2046, 256, 256, 16
        $region56: #{tpu_custom_call.1} parent=35 // pred_fallthru
          _
      $region36: #{tpu_custom_call.1} parent=5 // pred_fallthru
        _
      %p2066 = scmp.le.s32.totalorder 2, %s18
      // Predicated region
      $region57: #{tpu_custom_call.1} parent=5 // pred_check
        %p2067 = pneg %p2066
      $region58: #{tpu_custom_call.1} parent=5 // pred_check_branch
        %2069 = sbr.rel (%p2067) target = $region60
      $region59: #{tpu_custom_call.1} parent=5 // pred_region
        %s2070 = ssub.s32 %s18, 2
        // Predicated region
        $region61: #{tpu_custom_call.1} parent=59 // pred_check
          %p2071 = pneg %p136
        $region62: #{tpu_custom_call.1} parent=59 // pred_check_branch
          %2073 = sbr.rel (%p2071) target = $region64
        $region63: #{tpu_custom_call.1} parent=59 // pred_region
          %s2074 = sand.u32 %s121, 1
          %s2075 = scalar_lea.sflag [#allocation4], %s2074
          %s2076 = sand.u32 %s121, 1
          %s2077 = smul.addr %s2076, 32
          %s2078 = scalar_lea.vmem [#allocation10], %s2077
          %2079 = dma.done %s2075, 512
        $region64: #{tpu_custom_call.1} parent=59 // pred_fallthru
          _
      $region60: #{tpu_custom_call.1} parent=5 // pred_fallthru
        _
    $region6: #{tpu_custom_call.1} parent=1 // loop_footer
      %s22 = sadd.s32 1, %s18
    $region7: #{tpu_custom_call.1} parent=1 // loop_footer_branch
      %17 = sbr.rel target = $region3
    $region8: #{tpu_custom_call.1} parent=1 // loop_exit
      _
    %2080 = vsyncpa [#allocation3], 1
    %s2081 = scalar_lea.sflag [#allocation3], 1
    %2082 = vsyncpa %s2081, 1
    %2083 = vsyncpa [#allocation6], 1
    %2084 = vsyncpa [#allocation9], 1
    %2085 = vsyncpa [#allocation4], 1
    %s2086 = scalar_lea.sflag [#allocation4], 1
    %2087 = vsyncpa %s2086, 1

</llo_original>
